<compile_context>
chip_gen: v7x
topology: tpu7x:2x2x1
jax: 0.10.0
libtpu: 0.0.40
codegen_flags: <defaults>
</compile_context>

<pallas_src>
import functools
import math

import jax
import jax.numpy as jnp
from jax.experimental import pallas as pl
from jax.experimental.pallas import tpu as pltpu


# ----------------------------- Pallas kernel --------------------------------
def _aspp_kernel(x_ref, w_ref, scale_ref, shift_ref, o_ref, xpad_ref, col_ref,
                 *, kh, kw, dil, pad, ho, wo):
    # x_ref:     (1, H, W, Cin_pad)          unpadded bf16 NHWC image
    # w_ref:     (KH*KW*Cin_pad, Cout_pad)   bf16 raw conv weight (tap-major K)
    # scale_ref: (1, Cout_pad)               f32 BN scale  gamma/sqrt(var+eps)
    # shift_ref: (1, Cout_pad)               f32 BN shift  beta - mean*scale
    # o_ref:     (1, Ho*Wo, Cout_pad)        bf16 conv->BN->ReLU output
    # xpad_ref:  (Hp, Wp, Cin_pad)  VMEM     spatially zero-padded image
    # col_ref:   (Ho*Wo, KH*KW*Cin_pad) VMEM im2col gather buffer
    h = x_ref.shape[1]
    w = x_ref.shape[2]
    cin_p = x_ref.shape[3]

    # Spatial zero-pad entirely in VMEM (drops the HBM pad write/read pass).
    # Full zero-fill each step keeps the halo correct regardless of how the
    # "parallel" batch axis is split across cores.
    xpad_ref[...] = jnp.zeros_like(xpad_ref)
    xpad_ref[pad:pad + h, pad:pad + w, :] = x_ref[0]

    # VMEM-only im2col: gather each dilated tap ONCE into a lane-aligned slab
    # (static slices; the W/H shifts happen here, not interleaved with MXU work).
    for ih in range(kh):
        for iw in range(kw):
            t = ih * kw + iw
            win = xpad_ref[ih * dil:ih * dil + ho, iw * dil:iw * dil + wo, :]
            col_ref[:, t * cin_p:(t + 1) * cin_p] = win.reshape(ho * wo, cin_p)

    # Single MXU contraction over K = KH*KW*Cin_pad, f32 accumulation.
    acc = jnp.dot(col_ref[...], w_ref[...], preferred_element_type=jnp.float32)

    # Fused BatchNorm (inference affine, kept in f32) + ReLU, bf16 store.
    y = acc * scale_ref[...] + shift_ref[...]
    o_ref[0] = jnp.maximum(y, 0.0).astype(o_ref.dtype)


# ------------------------------ wrapper (glue) -------------------------------
def aspp_module_forward(x, conv_w, bn_gamma, bn_beta, bn_mean, bn_var,
                        *, padding, dilation, eps=1e-5):
    """Forward of _ASPPModule: dilated conv2d (no bias, stride 1) ->
    BatchNorm (inference statistics) -> ReLU.

    x:      [N, Cin, H, W]  (NCHW, matching PyTorch)
    conv_w: [Cout, Cin, KH, KW]
    returns [N, Cout, Ho, Wo]
    """
    N, Cin, H, W = x.shape
    Cout, _, KH, KW = conv_w.shape
    d = dilation

    Ho = H + 2 * padding - d * (KH - 1)
    Wo = W + 2 * padding - d * (KW - 1)
    assert Ho > 0 and Wo > 0, "invalid padding/dilation for this input size"
    Hp, Wp = H + 2 * padding, W + 2 * padding

    # Lane-aligned channel counts (both are no-ops at production ASPP sizes).
    Cin_pad = ((Cin + 127) // 128) * 128
    Cout_pad = ((Cout + 127) // 128) * 128
    K = KH * KW * Cin_pad

    # BN inference affine kept in f32 and applied in the kernel epilogue
    # (NOT folded into the bf16 weight, to avoid extra rounding drift).
    scale = (bn_gamma / jnp.sqrt(bn_var + eps)).astype(jnp.float32)
    shift = (bn_beta - bn_mean * scale).astype(jnp.float32)
    scale_p = jnp.pad(scale, (0, Cout_pad - Cout)).reshape(1, Cout_pad)
    shift_p = jnp.pad(shift, (0, Cout_pad - Cout)).reshape(1, Cout_pad)

    # Weight -> (KH*KW*Cin_pad, Cout_pad), tap-major / channel-minor K order
    # to match the im2col column layout. Raw weight in bf16 (scale stays f32).
    w_t = jnp.transpose(conv_w, (2, 3, 1, 0))                       # [KH,KW,Cin,Cout]
    w_t = jnp.pad(w_t, ((0, 0), (0, 0), (0, Cin_pad - Cin), (0, Cout_pad - Cout)))
    w2d = w_t.reshape(K, Cout_pad).astype(jnp.bfloat16)

    # NHWC bf16; channels lane-padded; NO spatial zero-pad in HBM (done in VMEM).
    x_nhwc = jnp.transpose(x, (0, 2, 3, 1)).astype(jnp.bfloat16)
    if Cin_pad != Cin:
        x_nhwc = jnp.pad(x_nhwc, ((0, 0), (0, 0), (0, 0), (0, Cin_pad - Cin)))

    kernel = functools.partial(_aspp_kernel, kh=KH, kw=KW, dil=d,
                               pad=padding, ho=Ho, wo=Wo)

    # VMEM budget from actual tile bytes (double-buffered I/O + scratches).
    bf2, f4 = 2, 4
    tile_bytes = (2 * H * W * Cin_pad * bf2            # input block (x2 buffers)
                  + 2 * K * Cout_pad * bf2             # weight (TODO: Buffered(1))
                  + 4 * Cout_pad * f4                  # scale + shift
                  + 2 * Ho * Wo * Cout_pad * bf2       # output block (x2 buffers)
                  + Hp * Wp * Cin_pad * bf2            # xpad scratch
                  + Ho * Wo * K * bf2)                 # im2col scratch
    vmem_limit = int(max(16 * 1024 * 1024, min(96 * 1024 * 1024, 2 * tile_bytes)))

    flops = 2 * N * Ho * Wo * K * Cout_pad
    bytes_accessed = (x_nhwc.size * bf2 + w2d.size * bf2
                      + (scale_p.size + shift_p.size) * f4
                      + N * Ho * Wo * Cout_pad * bf2)

    out = pl.pallas_call(
        kernel,
        out_shape=jax.ShapeDtypeStruct((N, Ho * Wo, Cout_pad), jnp.bfloat16),
        grid_spec=pltpu.PrefetchScalarGridSpec(
            num_scalar_prefetch=0,
            grid=(N,),
            in_specs=[
                pl.BlockSpec((1, H, W, Cin_pad), lambda i: (i, 0, 0, 0)),
                pl.BlockSpec((K, Cout_pad), lambda i: (0, 0)),
                pl.BlockSpec((1, Cout_pad), lambda i: (0, 0)),
                pl.BlockSpec((1, Cout_pad), lambda i: (0, 0)),
            ],
            out_specs=pl.BlockSpec((1, Ho * Wo, Cout_pad), lambda i: (i, 0, 0)),
            scratch_shapes=[
                pltpu.VMEM((Hp, Wp, Cin_pad), jnp.bfloat16),       # padded image
                pltpu.VMEM((Ho * Wo, K), jnp.bfloat16),            # im2col buffer
            ],
        ),
        compiler_params=pltpu.CompilerParams(
            dimension_semantics=("parallel",),
            vmem_limit_bytes=vmem_limit,
        ),
        cost_estimate=pl.CostEstimate(flops=flops, transcendentals=0,
                                      bytes_accessed=bytes_accessed),
    )(x_nhwc, w2d, scale_p, shift_p)

    out = out[:, :, :Cout].reshape(N, Ho, Wo, Cout)
    # Boundary transpose only, to match the PyTorch NCHW interface.
    return jnp.transpose(out, (0, 3, 1, 2)).astype(x.dtype)


# --------------------------------- main --------------------------------------
if __name__ == "__main__":
    # small ASPP branch: inplanes=4, planes=8, kernel_size=3, dilation=2, padding=2
    N, Cin, H, W = 2, 4, 16, 16
    Cout, KH, KW = 8, 3, 3
    padding, dilation = 2, 2
    eps = 1e-5

    key = jax.random.PRNGKey(0)
    kx, kw_key = jax.random.split(key)

    x = jax.random.normal(kx, (N, Cin, H, W), dtype=jnp.float32)

    # kaiming_normal_ (fan_in, gain=sqrt(2)) like torch.nn.init.kaiming_normal_
    fan_in = Cin * KH * KW
    std = math.sqrt(2.0 / fan_in)
    conv_w = std * jax.random.normal(kw_key, (Cout, Cin, KH, KW), dtype=jnp.float32)

    # BatchNorm init: weight=1, bias=0, running_mean=0, running_var=1 (inference)
    bn_gamma = jnp.ones((Cout,), jnp.float32)
    bn_beta = jnp.zeros((Cout,), jnp.float32)
    bn_mean = jnp.zeros((Cout,), jnp.float32)
    bn_var = jnp.ones((Cout,), jnp.float32)

    y = aspp_module_forward(x, conv_w, bn_gamma, bn_beta, bn_mean, bn_var,
                            padding=padding, dilation=dilation, eps=eps)
    y = jax.block_until_ready(y)

    Ho = H + 2 * padding - dilation * (KH - 1)
    Wo = W + 2 * padding - dilation * (KW - 1)
    assert y.shape == (N, Cout, Ho, Wo)

    # Reference: bf16-rounded x and raw weight through XLA's dilated conv (f32
    # accumulation), then the same f32 BN affine + ReLU, then the same bf16
    # output rounding as the kernel's store.
    scale = bn_gamma / jnp.sqrt(bn_var + eps)
    shift = bn_beta - bn_mean * scale
    x_q = x.astype(jnp.bfloat16).astype(jnp.float32)
    w_q = conv_w.astype(jnp.bfloat16).astype(jnp.float32)
    conv = jax.lax.conv_general_dilated(
        x_q, w_q, window_strides=(1, 1),
        padding=((padding, padding), (padding, padding)),
        rhs_dilation=(dilation, dilation),
        dimension_numbers=("NCHW", "OIHW", "NCHW"),
        precision=jax.lax.Precision.HIGHEST)
    ref = jnp.maximum(conv * scale[None, :, None, None]
                      + shift[None, :, None, None], 0.0)
    ref = ref.astype(jnp.bfloat16).astype(jnp.float32)

    err = float(jnp.max(jnp.abs(y - ref)))
    assert err < 5e-2, f"max abs err {err}"   # bf16 output => <= ~1 ulp of |y|max

    print("KERNEL_OK")
</pallas_src>

<mosaic_0001>
module attributes {stable_mosaic.version = 11 : i64} {
  func.func @_aspp_kernel(%arg0: i32, %arg1: memref<1x16x16x128xbf16, #tpu.memory_space<vmem>>, %arg2: memref<1152x128xbf16, #tpu.memory_space<vmem>>, %arg3: memref<1x128xf32, #tpu.memory_space<vmem>>, %arg4: memref<1x128xf32, #tpu.memory_space<vmem>>, %arg5: memref<1x256x128xbf16, #tpu.memory_space<vmem>>, %arg6: memref<20x20x128xbf16, #tpu.memory_space<vmem>>, %arg7: memref<256x1152xbf16, #tpu.memory_space<vmem>>) attributes {dimension_semantics = [#tpu.dimension_semantics<parallel>], iteration_bounds = array<i64: 2>, scalar_prefetch = 0 : i64, scratch_operands = 2 : i64, tpu.core_type = #tpu.core_type<tc>, window_params = [{transform_indices = @transform_0, window_bounds = array<i64: 1, 16, 16, 128>}, {pipeline_mode = #tpu.pipeline_mode<synchronous>, transform_indices = @transform_1, window_bounds = array<i64: 1152, 128>}, {pipeline_mode = #tpu.pipeline_mode<synchronous>, transform_indices = @transform_2, window_bounds = array<i64: 1, 128>}, {pipeline_mode = #tpu.pipeline_mode<synchronous>, transform_indices = @transform_3, window_bounds = array<i64: 1, 128>}, {transform_indices = @transform_4, window_bounds = array<i64: 1, 256, 128>}]} {
    %cst = arith.constant 0.000000e+00 : bf16
    %0 = vector.broadcast %cst : bf16 to vector<20x20x128xbf16>
    %c0 = arith.constant 0 : index
    %c0_0 = arith.constant 0 : index
    %c0_1 = arith.constant 0 : index
    %1 = vector.load %arg6[%c0, %c0_0, %c0_1] : memref<20x20x128xbf16, #tpu.memory_space<vmem>>, vector<20x20x128xbf16>
    tpu.vector_store %arg6[%c0, %c0_0, %c0_1], %0 {strides = array<i32>} : memref<20x20x128xbf16, #tpu.memory_space<vmem>>, vector<20x20x128xbf16>,
    %c0_2 = arith.constant 0 : index
    %c0_3 = arith.constant 0 : index
    %c0_4 = arith.constant 0 : index
    %c0_5 = arith.constant 0 : index
    %2 = vector.load %arg1[%c0_2, %c0_3, %c0_4, %c0_5] : memref<1x16x16x128xbf16, #tpu.memory_space<vmem>>, vector<1x16x16x128xbf16>
    %3 = vector.shape_cast %2 : vector<1x16x16x128xbf16> to vector<16x16x128xbf16>
    %c2 = arith.constant 2 : index
    %c2_6 = arith.constant 2 : index
    %c0_7 = arith.constant 0 : index
    %4 = vector.load %arg6[%c2, %c2_6, %c0_7] : memref<20x20x128xbf16, #tpu.memory_space<vmem>>, vector<16x16x128xbf16>
    tpu.vector_store %arg6[%c2, %c2_6, %c0_7], %3 {strides = array<i32>} : memref<20x20x128xbf16, #tpu.memory_space<vmem>>, vector<16x16x128xbf16>,
    %c0_8 = arith.constant 0 : index
    %c0_9 = arith.constant 0 : index
    %c0_10 = arith.constant 0 : index
    %5 = vector.load %arg6[%c0_8, %c0_9, %c0_10] : memref<20x20x128xbf16, #tpu.memory_space<vmem>>, vector<16x16x128xbf16>
    %6 = vector.shape_cast %5 : vector<16x16x128xbf16> to vector<256x128xbf16>
    %c0_11 = arith.constant 0 : index
    %c0_12 = arith.constant 0 : index
    %7 = vector.load %arg7[%c0_11, %c0_12] : memref<256x1152xbf16, #tpu.memory_space<vmem>>, vector<256x128xbf16>
    tpu.vector_store %arg7[%c0_11, %c0_12], %6 {strides = array<i32>} : memref<256x1152xbf16, #tpu.memory_space<vmem>>, vector<256x128xbf16>,
    %c0_13 = arith.constant 0 : index
    %c2_14 = arith.constant 2 : index
    %c0_15 = arith.constant 0 : index
    %8 = vector.load %arg6[%c0_13, %c2_14, %c0_15] : memref<20x20x128xbf16, #tpu.memory_space<vmem>>, vector<16x16x128xbf16>
    %9 = vector.shape_cast %8 : vector<16x16x128xbf16> to vector<256x128xbf16>
    %c0_16 = arith.constant 0 : index
    %c128 = arith.constant 128 : index
    %10 = vector.load %arg7[%c0_16, %c128] : memref<256x1152xbf16, #tpu.memory_space<vmem>>, vector<256x128xbf16>
    tpu.vector_store %arg7[%c0_16, %c128], %9 {strides = array<i32>} : memref<256x1152xbf16, #tpu.memory_space<vmem>>, vector<256x128xbf16>,
    %c0_17 = arith.constant 0 : index
    %c4 = arith.constant 4 : index
    %c0_18 = arith.constant 0 : index
    %11 = vector.load %arg6[%c0_17, %c4, %c0_18] : memref<20x20x128xbf16, #tpu.memory_space<vmem>>, vector<16x16x128xbf16>
    %12 = vector.shape_cast %11 : vector<16x16x128xbf16> to vector<256x128xbf16>
    %c0_19 = arith.constant 0 : index
    %c256 = arith.constant 256 : index
    %13 = vector.load %arg7[%c0_19, %c256] : memref<256x1152xbf16, #tpu.memory_space<vmem>>, vector<256x128xbf16>
    tpu.vector_store %arg7[%c0_19, %c256], %12 {strides = array<i32>} : memref<256x1152xbf16, #tpu.memory_space<vmem>>, vector<256x128xbf16>,
    %c2_20 = arith.constant 2 : index
    %c0_21 = arith.constant 0 : index
    %c0_22 = arith.constant 0 : index
    %14 = vector.load %arg6[%c2_20, %c0_21, %c0_22] : memref<20x20x128xbf16, #tpu.memory_space<vmem>>, vector<16x16x128xbf16>
    %15 = vector.shape_cast %14 : vector<16x16x128xbf16> to vector<256x128xbf16>
    %c0_23 = arith.constant 0 : index
    %c384 = arith.constant 384 : index
    %16 = vector.load %arg7[%c0_23, %c384] : memref<256x1152xbf16, #tpu.memory_space<vmem>>, vector<256x128xbf16>
    tpu.vector_store %arg7[%c0_23, %c384], %15 {strides = array<i32>} : memref<256x1152xbf16, #tpu.memory_space<vmem>>, vector<256x128xbf16>,
    %c2_24 = arith.constant 2 : index
    %c2_25 = arith.constant 2 : index
    %c0_26 = arith.constant 0 : index
    %17 = vector.load %arg6[%c2_24, %c2_25, %c0_26] : memref<20x20x128xbf16, #tpu.memory_space<vmem>>, vector<16x16x128xbf16>
    %18 = vector.shape_cast %17 : vector<16x16x128xbf16> to vector<256x128xbf16>
    %c0_27 = arith.constant 0 : index
    %c512 = arith.constant 512 : index
    %19 = vector.load %arg7[%c0_27, %c512] : memref<256x1152xbf16, #tpu.memory_space<vmem>>, vector<256x128xbf16>
    tpu.vector_store %arg7[%c0_27, %c512], %18 {strides = array<i32>} : memref<256x1152xbf16, #tpu.memory_space<vmem>>, vector<256x128xbf16>,
    %c2_28 = arith.constant 2 : index
    %c4_29 = arith.constant 4 : index
    %c0_30 = arith.constant 0 : index
    %20 = vector.load %arg6[%c2_28, %c4_29, %c0_30] : memref<20x20x128xbf16, #tpu.memory_space<vmem>>, vector<16x16x128xbf16>
    %21 = vector.shape_cast %20 : vector<16x16x128xbf16> to vector<256x128xbf16>
    %c0_31 = arith.constant 0 : index
    %c640 = arith.constant 640 : index
    %22 = vector.load %arg7[%c0_31, %c640] : memref<256x1152xbf16, #tpu.memory_space<vmem>>, vector<256x128xbf16>
    tpu.vector_store %arg7[%c0_31, %c640], %21 {strides = array<i32>} : memref<256x1152xbf16, #tpu.memory_space<vmem>>, vector<256x128xbf16>,
    %c4_32 = arith.constant 4 : index
    %c0_33 = arith.constant 0 : index
    %c0_34 = arith.constant 0 : index
    %23 = vector.load %arg6[%c4_32, %c0_33, %c0_34] : memref<20x20x128xbf16, #tpu.memory_space<vmem>>, vector<16x16x128xbf16>
    %24 = vector.shape_cast %23 : vector<16x16x128xbf16> to vector<256x128xbf16>
    %c0_35 = arith.constant 0 : index
    %c768 = arith.constant 768 : index
    %25 = vector.load %arg7[%c0_35, %c768] : memref<256x1152xbf16, #tpu.memory_space<vmem>>, vector<256x128xbf16>
    tpu.vector_store %arg7[%c0_35, %c768], %24 {strides = array<i32>} : memref<256x1152xbf16, #tpu.memory_space<vmem>>, vector<256x128xbf16>,
    %c4_36 = arith.constant 4 : index
    %c2_37 = arith.constant 2 : index
    %c0_38 = arith.constant 0 : index
    %26 = vector.load %arg6[%c4_36, %c2_37, %c0_38] : memref<20x20x128xbf16, #tpu.memory_space<vmem>>, vector<16x16x128xbf16>
    %27 = vector.shape_cast %26 : vector<16x16x128xbf16> to vector<256x128xbf16>
    %c0_39 = arith.constant 0 : index
    %c896 = arith.constant 896 : index
    %28 = vector.load %arg7[%c0_39, %c896] : memref<256x1152xbf16, #tpu.memory_space<vmem>>, vector<256x128xbf16>
    tpu.vector_store %arg7[%c0_39, %c896], %27 {strides = array<i32>} : memref<256x1152xbf16, #tpu.memory_space<vmem>>, vector<256x128xbf16>,
    %c4_40 = arith.constant 4 : index
    %c4_41 = arith.constant 4 : index
    %c0_42 = arith.constant 0 : index
    %29 = vector.load %arg6[%c4_40, %c4_41, %c0_42] : memref<20x20x128xbf16, #tpu.memory_space<vmem>>, vector<16x16x128xbf16>
    %30 = vector.shape_cast %29 : vector<16x16x128xbf16> to vector<256x128xbf16>
    %c0_43 = arith.constant 0 : index
    %c1024 = arith.constant 1024 : index
    %31 = vector.load %arg7[%c0_43, %c1024] : memref<256x1152xbf16, #tpu.memory_space<vmem>>, vector<256x128xbf16>
    tpu.vector_store %arg7[%c0_43, %c1024], %30 {strides = array<i32>} : memref<256x1152xbf16, #tpu.memory_space<vmem>>, vector<256x128xbf16>,
    %c0_44 = arith.constant 0 : index
    %c0_45 = arith.constant 0 : index
    %32 = vector.load %arg7[%c0_44, %c0_45] : memref<256x1152xbf16, #tpu.memory_space<vmem>>, vector<256x1152xbf16>
    %c0_46 = arith.constant 0 : index
    %c0_47 = arith.constant 0 : index
    %33 = vector.load %arg2[%c0_46, %c0_47] : memref<1152x128xbf16, #tpu.memory_space<vmem>>, vector<1152x128xbf16>
    %cst_48 = arith.constant dense<0.000000e+00> : vector<256x128xf32>
    %34 = tpu.matmul %32, %33, %cst_48 {dimension_numbers = #tpu.dot_dimension_numbers<[1], [0], [0], [1], [0, 0, 1, 1], [], []>} : vector<256x1152xbf16>, vector<1152x128xbf16>, vector<256x128xf32> -> vector<256x128xf32>
    %c0_49 = arith.constant 0 : index
    %c0_50 = arith.constant 0 : index
    %35 = vector.load %arg3[%c0_49, %c0_50] : memref<1x128xf32, #tpu.memory_space<vmem>>, vector<1x128xf32>
    %36 = vector.broadcast %35 : vector<1x128xf32> to vector<256x128xf32>
    %37 = arith.mulf %34, %36 : vector<256x128xf32>
    %c0_51 = arith.constant 0 : index
    %c0_52 = arith.constant 0 : index
    %38 = vector.load %arg4[%c0_51, %c0_52] : memref<1x128xf32, #tpu.memory_space<vmem>>, vector<1x128xf32>
    %39 = vector.broadcast %38 : vector<1x128xf32> to vector<256x128xf32>
    %40 = arith.addf %37, %39 : vector<256x128xf32>
    %cst_53 = arith.constant 0.000000e+00 : f32
    %41 = vector.broadcast %cst_53 : f32 to vector<256x128xf32>
    %42 = arith.maximumf %40, %41 : vector<256x128xf32>
    %43 = arith.truncf %42 : vector<256x128xf32> to vector<256x128xbf16>
    %c0_54 = arith.constant 0 : index
    %c0_55 = arith.constant 0 : index
    %c0_56 = arith.constant 0 : index
    %44 = vector.load %arg5[%c0_54, %c0_55, %c0_56] : memref<1x256x128xbf16, #tpu.memory_space<vmem>>, vector<1x256x128xbf16>
    %45 = vector.shape_cast %44 : vector<1x256x128xbf16> to vector<256x128xbf16>
    %46 = vector.shape_cast %43 : vector<256x128xbf16> to vector<1x256x128xbf16>
    tpu.vector_store %arg5[%c0_54, %c0_55, %c0_56], %46 {strides = array<i32>} : memref<1x256x128xbf16, #tpu.memory_space<vmem>>, vector<1x256x128xbf16>,
    return
  }
  func.func @transform_0(%arg0: i32) -> (i32, i32, i32, i32) {
    %c0_i32 = arith.constant 0 : i32
    %c0_i32_0 = arith.constant 0 : i32
    %c0_i32_1 = arith.constant 0 : i32
    %c0_i32_2 = arith.constant 0 : i32
    return %arg0, %c0_i32, %c0_i32_0, %c0_i32_1 : i32, i32, i32, i32
  }
  func.func @transform_1(%arg0: i32) -> (i32, i32) {
    %c0_i32 = arith.constant 0 : i32
    %c0_i32_0 = arith.constant 0 : i32
    %c0_i32_1 = arith.constant 0 : i32
    return %c0_i32, %c0_i32_0 : i32, i32
  }
  func.func @transform_2(%arg0: i32) -> (i32, i32) {
    %c0_i32 = arith.constant 0 : i32
    %c0_i32_0 = arith.constant 0 : i32
    %c0_i32_1 = arith.constant 0 : i32
    return %c0_i32, %c0_i32_0 : i32, i32
  }
  func.func @transform_3(%arg0: i32) -> (i32, i32) {
    %c0_i32 = arith.constant 0 : i32
    %c0_i32_0 = arith.constant 0 : i32
    %c0_i32_1 = arith.constant 0 : i32
    return %c0_i32, %c0_i32_0 : i32, i32
  }
  func.func @transform_4(%arg0: i32) -> (i32, i32, i32) {
    %c0_i32 = arith.constant 0 : i32
    %c0_i32_0 = arith.constant 0 : i32
    %c0_i32_1 = arith.constant 0 : i32
    return %arg0, %c0_i32, %c0_i32_0 : i32, i32, i32
  }
}

</mosaic_0001>

<llo_original>
// kernel: tpu_custom_call.1
$region0: #{tpu_custom_call.1}
  #allocation0 [shape = 'u32[]', space=smem, size = 0x4, offset = 0x4, fixed_abs, tag = 'smem constant byte address 0x4 - core index']
  #allocation1 [shape = 'u32[144,128]{1,0:T(1,128)}', space=vmem, size = 0x12000, scoped, tag = 'internal scratch']
  #allocation2 [shape = 'bf16[20,20,128]{2,1,0:T(8,128)(2,1)}', space=vmem, size = 0x1e000, scoped, tag = 'scratch operand']
  #allocation3 [shape = 'bf16[256,1152]{1,0:T(16,128)(2,1)}', space=vmem, size = 0x90000, scoped, tag = 'scratch operand']
  %s0 = inlined_call_operand.hbm [shape: bf16[2,16,16,128], index: 0, kind: input, shape index: {}]
  %s1 = inlined_call_operand.hbm [shape: bf16[1152,128], index: 1, kind: input, shape index: {}]
  %s2 = inlined_call_operand.vmem [shape: f32[1,128], index: 2, kind: input, shape index: {}]
  %s3 = inlined_call_operand.vmem [shape: f32[1,128], index: 3, kind: input, shape index: {}]
  %s4 = inlined_call_operand.hbm [shape: bf16[2,256,128], index: 4, kind: output, shape index: {}]
  %s5 = sld [smem:[#allocation0]]
  $region57: #{tpu_custom_call.1} parent=0
    _
  %s7 = ssub.s32 1, %s5
  %s8 = scalar_select 0, %s7, %s5
  $region1: #{tpu_custom_call.1} parent=0
    #allocation4 [shape = 'u8[131072]{0}', space=vmem, size = 0x20000, scoped, tag = 'input window, operand 0']
    #allocation5 [shape = 's32[2]{0}', space=sflag, size = 0x8, scoped, tag = 'scoped memory for tpu_custom_call.1']
    #allocation6 [shape = 's32[2]{0}', space=sflag, size = 0x8, scoped, tag = 'scoped memory for tpu_custom_call.1']
    #allocation7 [shape = 'u8[294912]{0}', space=vmem, size = 0x48000, scoped, tag = 'input window, operand 1, single buffered']
    #allocation8 [shape = 's32[1]{0}', space=sflag, size = 0x4, scoped, tag = 'scoped memory for tpu_custom_call.1']
    #allocation9 [shape = 'u8[131072]{0}', space=vmem, size = 0x20000, scoped, tag = 'output window, operand 0']
    %9 = vsyncpa [#allocation5], 0
    %s10 = scalar_lea.sflag [#allocation5], 1
    %11 = vsyncpa %s10, 0
    %12 = vsyncpa [#allocation8], 0
    %13 = vsyncpa [#allocation6], 0
    %s14 = scalar_lea.sflag [#allocation6], 1
    %15 = vsyncpa %s14, 0
    loop: start=0, step=1, limit=4
    $region2: #{tpu_custom_call.1} parent=1 // loop_pre_header
      _
    $region3: #{tpu_custom_call.1} parent=1 // loop_header
      %s17 = sphi 0, %s21
      %p18 = scmp.ge.s32.totalorder %s17, 4
      %s27 = sphi 0, %s29
      %s30 = sphi 0, %s27
      %s31 = sphi 0, %s30
      %s47 = sphi 0, %s31
      %s51 = sphi 0, %s51
      %s53 = sphi 0, %s51
      %s54 = sphi 0, %s53
      %s68 = sphi 0, %s54
      %s72 = sphi 0, %s72
      %s74 = sphi 0, %s72
      %s75 = sphi 0, %s74
      %s89 = sphi 0, %s75
      %s93 = sphi 0, %s93
      %s95 = sphi 0, %s93
      %s96 = sphi 0, %s95
      %s110 = sphi 0, %s96
      %s116 = sphi 0, %s118
      %s119 = sphi 0, %s116
      %s120 = sphi 0, %s119
      %s136 = sphi 0, %s120
    $region4: #{tpu_custom_call.1} parent=1 // loop_header_branch
      %20 = sbr.rel (%p18) target = $region8
    $region5: #{tpu_custom_call.1} parent=1 // loop_body
      %s22 = ssub.s32 %s17, 1
      %s23 = ssub.s32 %s17, 2
      %s24 = sadd.s32 %s17, 1
      %s25 = ssub.s32 %s17, %s24
      %p26 = scmp.eq.s32.totalorder %s25, 0
      %s28 = sadd.s32 %s27, 1
      %s29 = scalar_select %p26, %s27, %s28
      %p32 = pneg %p26
      %p33 = scmp.eq.s32.totalorder %s17, 1
      %p34 = por %p32, %p33
      %p35 = scmp.ne.s32.totalorder %s27, %s30
      %p36 = scmp.eq.s32.totalorder %s17, 0
      %p37 = por %p35, %p36
      %p38 = scmp.ne.s32.totalorder %s27, %s30
      %p39 = scmp.eq.s32.totalorder %s22, 1
      %p40 = por %p38, %p39
      %p41 = scmp.ne.s32.totalorder %s30, %s31
      %p42 = scmp.eq.s32.totalorder %s22, 0
      %p43 = por %p41, %p42
      %p44 = scmp.ne.s32.totalorder %s30, %s31
      %p45 = scmp.eq.s32.totalorder %s23, 1
      %p46 = por %p44, %p45
      %p48 = scmp.ne.s32.totalorder %s31, %s47
      %p49 = scmp.eq.s32.totalorder %s23, 0
      %p50 = por %p48, %p49
      %s52 = sadd.s32 %s51, 1
      %p55 = scmp.eq.s32.totalorder %s17, 1
      %p56 = scmp.ne.s32.totalorder %s51, %s53
      %p57 = scmp.eq.s32.totalorder %s17, 0
      %p58 = por %p56, %p57
      %p59 = scmp.ne.s32.totalorder %s51, %s53
      %p60 = scmp.eq.s32.totalorder %s22, 1
      %p61 = por %p59, %p60
      %p62 = scmp.ne.s32.totalorder %s53, %s54
      %p63 = scmp.eq.s32.totalorder %s22, 0
      %p64 = por %p62, %p63
      %p65 = scmp.ne.s32.totalorder %s53, %s54
      %p66 = scmp.eq.s32.totalorder %s23, 1
      %p67 = por %p65, %p66
      %p69 = scmp.ne.s32.totalorder %s54, %s68
      %p70 = scmp.eq.s32.totalorder %s23, 0
      %p71 = por %p69, %p70
      %s73 = sadd.s32 %s72, 1
      %p76 = scmp.eq.s32.totalorder %s17, 1
      %p77 = scmp.ne.s32.totalorder %s72, %s74
      %p78 = scmp.eq.s32.totalorder %s17, 0
      %p79 = por %p77, %p78
      %p80 = scmp.ne.s32.totalorder %s72, %s74
      %p81 = scmp.eq.s32.totalorder %s22, 1
      %p82 = por %p80, %p81
      %p83 = scmp.ne.s32.totalorder %s74, %s75
      %p84 = scmp.eq.s32.totalorder %s22, 0
      %p85 = por %p83, %p84
      %p86 = scmp.ne.s32.totalorder %s74, %s75
      %p87 = scmp.eq.s32.totalorder %s23, 1
      %p88 = por %p86, %p87
      %p90 = scmp.ne.s32.totalorder %s75, %s89
      %p91 = scmp.eq.s32.totalorder %s23, 0
      %p92 = por %p90, %p91
      %s94 = sadd.s32 %s93, 1
      %p97 = scmp.eq.s32.totalorder %s17, 1
      %p98 = scmp.ne.s32.totalorder %s93, %s95
      %p99 = scmp.eq.s32.totalorder %s17, 0
      %p100 = por %p98, %p99
      %p101 = scmp.ne.s32.totalorder %s93, %s95
      %p102 = scmp.eq.s32.totalorder %s22, 1
      %p103 = por %p101, %p102
      %p104 = scmp.ne.s32.totalorder %s95, %s96
      %p105 = scmp.eq.s32.totalorder %s22, 0
      %p106 = por %p104, %p105
      %p107 = scmp.ne.s32.totalorder %s95, %s96
      %p108 = scmp.eq.s32.totalorder %s23, 1
      %p109 = por %p107, %p108
      %p111 = scmp.ne.s32.totalorder %s96, %s110
      %p112 = scmp.eq.s32.totalorder %s23, 0
      %p113 = por %p111, %p112
      %s114 = ssub.s32 %s17, %s24
      %p115 = scmp.eq.s32.totalorder %s114, 0
      %s117 = sadd.s32 %s116, 1
      %s118 = scalar_select %p115, %s116, %s117
      %p121 = pneg %p115
      %p122 = scmp.eq.s32.totalorder %s17, 1
      %p123 = por %p121, %p122
      %p124 = scmp.ne.s32.totalorder %s116, %s119
      %p125 = scmp.eq.s32.totalorder %s17, 0
      %p126 = por %p124, %p125
      %p127 = scmp.ne.s32.totalorder %s116, %s119
      %p128 = scmp.eq.s32.totalorder %s22, 1
      %p129 = por %p127, %p128
      %p130 = scmp.ne.s32.totalorder %s119, %s120
      %p131 = scmp.eq.s32.totalorder %s22, 0
      %p132 = por %p130, %p131
      %p133 = scmp.ne.s32.totalorder %s119, %s120
      %p134 = scmp.eq.s32.totalorder %s23, 1
      %p135 = por %p133, %p134
      %p137 = scmp.ne.s32.totalorder %s120, %s136
      %p138 = scmp.eq.s32.totalorder %s23, 0
      %p139 = por %p137, %p138
      %p140 = scmp.le.s32.totalorder 1, %s17
      %p141 = scmp.lt.s32.totalorder %s17, 3
      %p142 = pnand %p140, %p141
      %p143 = pneg %p142
      // Predicated region
      $region9: #{tpu_custom_call.1} parent=5 // pred_check
        _
      $region10: #{tpu_custom_call.1} parent=5 // pred_check_branch
        %145 = sbr.rel (%p142) target = $region12
      $region11: #{tpu_custom_call.1} parent=5 // pred_region
        %s146 = ssub.s32 %s17, 1
        // Predicated region
        $region13: #{tpu_custom_call.1} parent=11 // pred_check
          %p147 = pneg %p64
        $region14: #{tpu_custom_call.1} parent=11 // pred_check_branch
          %149 = sbr.rel (%p147) target = $region16
        $region15: #{tpu_custom_call.1} parent=11 // pred_region
          %s151 = ssub.s32 9216, 9216
          %152 = vsyncadd [#allocation8], %s151
          %s153 = sshll.u32 [#allocation7], 4
          %s154 = int_to_ptr.vmem [resolvable:$true] %s153
          %159 = dma.hbm_to_vmem [thread:$0]  %s1, 9216, %s154, [#allocation8], 64, 64, 4
        $region16: #{tpu_custom_call.1} parent=11 // pred_fallthru
          _
        // Predicated region
        $region17: #{tpu_custom_call.1} parent=11 // pred_check
          %p160 = pneg %p85
        $region18: #{tpu_custom_call.1} parent=11 // pred_check_branch
          %162 = sbr.rel (%p160) target = $region20
        $region19: #{tpu_custom_call.1} parent=11 // pred_region
          _
        $region20: #{tpu_custom_call.1} parent=11 // pred_fallthru
          _
        // Predicated region
        $region21: #{tpu_custom_call.1} parent=11 // pred_check
          %p163 = pneg %p106
        $region22: #{tpu_custom_call.1} parent=11 // pred_check_branch
          %165 = sbr.rel (%p163) target = $region24
        $region23: #{tpu_custom_call.1} parent=11 // pred_region
          _
        $region24: #{tpu_custom_call.1} parent=11 // pred_fallthru
          _
      $region12: #{tpu_custom_call.1} parent=5 // pred_fallthru
        _
      %p166 = scmp.lt.s32.totalorder %s17, 2
      // Predicated region
      $region25: #{tpu_custom_call.1} parent=5 // pred_check
        %p167 = pneg %p166
      $region26: #{tpu_custom_call.1} parent=5 // pred_check_branch
        %169 = sbr.rel (%p167) target = $region28
      $region27: #{tpu_custom_call.1} parent=5 // pred_region
        // Predicated region
        $region29: #{tpu_custom_call.1} parent=27 // pred_check
          %p170 = pneg %p37
        $region30: #{tpu_custom_call.1} parent=27 // pred_check_branch
          %172 = sbr.rel (%p170) target = $region32
        $region31: #{tpu_custom_call.1} parent=27 // pred_region
          %s173 = sand.u32 %s27, 1
          %s174 = scalar_lea.sflag [#allocation5], %s173
          %s175 = sand.u32 %s27, 1
          %s176 = smul.addr %s175, 128
          %s177 = scalar_lea.vmem [#allocation4], %s176
          %s179 = ssub.s32 2048, 2048
          %180 = vsyncadd %s174, %s179
          %s181 = smul.addr %s17, 32
          %s182 = smul.addr %s181, 64
          %s183 = scalar_lea.hbm %s0, %s182
          %s184 = sshll.u32 %s177, 4
          %s185 = int_to_ptr.vmem [resolvable:$true] %s184
          %190 = dma.hbm_to_vmem [thread:$0]  %s183, 2048, %s185, %s174, 64, 64, 4
        $region32: #{tpu_custom_call.1} parent=27 // pred_fallthru
          _
      $region28: #{tpu_custom_call.1} parent=5 // pred_fallthru
        _
      %p191 = scmp.le.s32.totalorder 1, %s17
      %p192 = scmp.lt.s32.totalorder %s17, 3
      %p193 = pnand %p191, %p192
      %p194 = pneg %p193
      // Predicated region
      $region33: #{tpu_custom_call.1} parent=5 // pred_check
        _
      $region34: #{tpu_custom_call.1} parent=5 // pred_check_branch
        %196 = sbr.rel (%p193) target = $region36
      $region35: #{tpu_custom_call.1} parent=5 // pred_region
        %s197 = ssub.s32 %s17, 1
        %s198 = sand.u32 %s30, 1
        %s199 = scalar_lea.sflag [#allocation5], %s198
        %s200 = sand.u32 %s30, 1
        %s201 = smul.addr %s200, 128
        %s202 = scalar_lea.vmem [#allocation4], %s201
        // Predicated region
        $region37: #{tpu_custom_call.1} parent=35 // pred_check
          %p203 = pneg %p43
        $region38: #{tpu_custom_call.1} parent=35 // pred_check_branch
          %205 = sbr.rel (%p203) target = $region40
        $region39: #{tpu_custom_call.1} parent=35 // pred_region
          %206 = dma.done %s199, 2048
        $region40: #{tpu_custom_call.1} parent=35 // pred_fallthru
          _
        // Predicated region
        $region41: #{tpu_custom_call.1} parent=35 // pred_check
          %p207 = pneg %p64
        $region42: #{tpu_custom_call.1} parent=35 // pred_check_branch
          %209 = sbr.rel (%p207) target = $region44
        $region43: #{tpu_custom_call.1} parent=35 // pred_region
          %210 = dma.done [#allocation8], 9216
        $region44: #{tpu_custom_call.1} parent=35 // pred_fallthru
          _
        %s211 = sand.u32 %s30, 1
        %s212 = scalar_lea.sflag [#allocation5], %s211
        %s213 = sand.u32 %s30, 1
        %s214 = smul.addr %s213, 128
        %s215 = scalar_lea.vmem [#allocation4], %s214
        %p216 = pneg %p43
        %p217 = pneg %p40
        %p218 = pneg %p64
        %p219 = pneg %p61
        %p220 = pneg %p85
        %p221 = pneg %p82
        %p222 = pneg %p106
        %p223 = pneg %p103
        %p224 = pneg %p132
        %p225 = pneg %p129
        %s226 = sand.u32 %s119, 1
        %s227 = scalar_lea.sflag [#allocation6], %s226
        %s228 = sand.u32 %s119, 1
        %s229 = smul.addr %s228, 128
        %s230 = scalar_lea.vmem [#allocation9], %s229
        %232 = vst [vmem:[#allocation2] sm:$0xf] 0
        %233 = vst [vmem:[#allocation2 + $0x4] sm:$0xf] 0
        %234 = vst [vmem:[#allocation2 + $0x8] sm:$0x3] 0
        %235 = vst [vmem:[#allocation2 + $0xc] sm:$0xf] 0
        %236 = vst [vmem:[#allocation2 + $0x10] sm:$0xf] 0
        %237 = vst [vmem:[#allocation2 + $0x14] sm:$0x3] 0
        %238 = vst [vmem:[#allocation2 + $0x18] sm:$0xf] 0
        %239 = vst [vmem:[#allocation2 + $0x1c] sm:$0xf] 0
        %240 = vst [vmem:[#allocation2 + $0x20] sm:$0x3] 0
        %241 = vst [vmem:[#allocation2 + $0x24] sm:$0xf] 0
        %242 = vst [vmem:[#allocation2 + $0x28] sm:$0xf] 0
        %243 = vst [vmem:[#allocation2 + $0x2c] sm:$0x3] 0
        %244 = vst [vmem:[#allocation2 + $0x30] sm:$0xf] 0
        %245 = vst [vmem:[#allocation2 + $0x34] sm:$0xf] 0
        %246 = vst [vmem:[#allocation2 + $0x38] sm:$0x3] 0
        %247 = vst [vmem:[#allocation2 + $0x3c] sm:$0xf] 0
        %248 = vst [vmem:[#allocation2 + $0x40] sm:$0xf] 0
        %249 = vst [vmem:[#allocation2 + $0x44] sm:$0x3] 0
        %250 = vst [vmem:[#allocation2 + $0x48] sm:$0xf] 0
        %251 = vst [vmem:[#allocation2 + $0x4c] sm:$0xf] 0
        %252 = vst [vmem:[#allocation2 + $0x50] sm:$0x3] 0
        %253 = vst [vmem:[#allocation2 + $0x54] sm:$0xf] 0
        %254 = vst [vmem:[#allocation2 + $0x58] sm:$0xf] 0
        %255 = vst [vmem:[#allocation2 + $0x5c] sm:$0x3] 0
        %256 = vst [vmem:[#allocation2 + $0x60] sm:$0xf] 0
        %257 = vst [vmem:[#allocation2 + $0x64] sm:$0xf] 0
        %258 = vst [vmem:[#allocation2 + $0x68] sm:$0x3] 0
        %259 = vst [vmem:[#allocation2 + $0x6c] sm:$0xf] 0
        %260 = vst [vmem:[#allocation2 + $0x70] sm:$0xf] 0
        %261 = vst [vmem:[#allocation2 + $0x74] sm:$0x3] 0
        %262 = vst [vmem:[#allocation2 + $0x78] sm:$0xf] 0
        %263 = vst [vmem:[#allocation2 + $0x7c] sm:$0xf] 0
        %264 = vst [vmem:[#allocation2 + $0x80] sm:$0x3] 0
        %265 = vst [vmem:[#allocation2 + $0x84] sm:$0xf] 0
        %266 = vst [vmem:[#allocation2 + $0x88] sm:$0xf] 0
        %267 = vst [vmem:[#allocation2 + $0x8c] sm:$0x3] 0
        %268 = vst [vmem:[#allocation2 + $0x90] sm:$0xf] 0
        %269 = vst [vmem:[#allocation2 + $0x94] sm:$0xf] 0
        %270 = vst [vmem:[#allocation2 + $0x98] sm:$0x3] 0
        %271 = vst [vmem:[#allocation2 + $0x9c] sm:$0xf] 0
        %272 = vst [vmem:[#allocation2 + $0xa0] sm:$0xf] 0
        %273 = vst [vmem:[#allocation2 + $0xa4] sm:$0x3] 0
        %274 = vst [vmem:[#allocation2 + $0xa8] sm:$0xf] 0
        %275 = vst [vmem:[#allocation2 + $0xac] sm:$0xf] 0
        %276 = vst [vmem:[#allocation2 + $0xb0] sm:$0x3] 0
        %277 = vst [vmem:[#allocation2 + $0xb4] sm:$0xf] 0
        %278 = vst [vmem:[#allocation2 + $0xb8] sm:$0xf] 0
        %279 = vst [vmem:[#allocation2 + $0xbc] sm:$0x3] 0
        %280 = vst [vmem:[#allocation2 + $0xc0] sm:$0xf] 0
        %281 = vst [vmem:[#allocation2 + $0xc4] sm:$0xf] 0
        %282 = vst [vmem:[#allocation2 + $0xc8] sm:$0x3] 0
        %283 = vst [vmem:[#allocation2 + $0xcc] sm:$0xf] 0
        %284 = vst [vmem:[#allocation2 + $0xd0] sm:$0xf] 0
        %285 = vst [vmem:[#allocation2 + $0xd4] sm:$0x3] 0
        %286 = vst [vmem:[#allocation2 + $0xd8] sm:$0xf] 0
        %287 = vst [vmem:[#allocation2 + $0xdc] sm:$0xf] 0
        %288 = vst [vmem:[#allocation2 + $0xe0] sm:$0x3] 0
        %289 = vst [vmem:[#allocation2 + $0xe4] sm:$0xf] 0
        %290 = vst [vmem:[#allocation2 + $0xe8] sm:$0xf] 0
        %291 = vst [vmem:[#allocation2 + $0xec] sm:$0x3] 0
        %v292 = vld [vmem:[%s202] sm:$0xf]
        %v293 = vld [vmem:[%s202 + $0x4] sm:$0xf]
        %v294 = vld [vmem:[%s202 + $0x8] sm:$0xf]
        %v295 = vld [vmem:[%s202 + $0xc] sm:$0xf]
        %v296 = vld [vmem:[%s202 + $0x10] sm:$0xf]
        %v297 = vld [vmem:[%s202 + $0x14] sm:$0xf]
        %v298 = vld [vmem:[%s202 + $0x18] sm:$0xf]
        %v299 = vld [vmem:[%s202 + $0x1c] sm:$0xf]
        %v300 = vld [vmem:[%s202 + $0x20] sm:$0xf]
        %v301 = vld [vmem:[%s202 + $0x24] sm:$0xf]
        %v302 = vld [vmem:[%s202 + $0x28] sm:$0xf]
        %v303 = vld [vmem:[%s202 + $0x2c] sm:$0xf]
        %v304 = vld [vmem:[%s202 + $0x30] sm:$0xf]
        %v305 = vld [vmem:[%s202 + $0x34] sm:$0xf]
        %v306 = vld [vmem:[%s202 + $0x38] sm:$0xf]
        %v307 = vld [vmem:[%s202 + $0x3c] sm:$0xf]
        %v308 = vld [vmem:[%s202 + $0x40] sm:$0xf]
        %v309 = vld [vmem:[%s202 + $0x44] sm:$0xf]
        %v310 = vld [vmem:[%s202 + $0x48] sm:$0xf]
        %v311 = vld [vmem:[%s202 + $0x4c] sm:$0xf]
        %v312 = vld [vmem:[%s202 + $0x50] sm:$0xf]
        %v313 = vld [vmem:[%s202 + $0x54] sm:$0xf]
        %v314 = vld [vmem:[%s202 + $0x58] sm:$0xf]
        %v315 = vld [vmem:[%s202 + $0x5c] sm:$0xf]
        %v316 = vld [vmem:[%s202 + $0x60] sm:$0xf]
        %v317 = vld [vmem:[%s202 + $0x64] sm:$0xf]
        %v318 = vld [vmem:[%s202 + $0x68] sm:$0xf]
        %v319 = vld [vmem:[%s202 + $0x6c] sm:$0xf]
        %v320 = vld [vmem:[%s202 + $0x70] sm:$0xf]
        %v321 = vld [vmem:[%s202 + $0x74] sm:$0xf]
        %v322 = vld [vmem:[%s202 + $0x78] sm:$0xf]
        %v323 = vld [vmem:[%s202 + $0x7c] sm:$0xf]
        %vm356 = vcmask 1040384
        %vm357 = vcmask 1044484
        %vm358 = vmor %vm356, %vm357
        %v359 = vrot.slane %v292, 7
        %v360 = vrot.slane %v359, 4
        %v361 = vrot.slane %v293, 7
        %v362 = vsel %vm358, %v360, %v361
        %v363 = vrot.slane %v361, 4
        %v364 = vrot.slane %v294, 7
        %v365 = vrot.slane %v364, 4
        %v366 = vrot.slane %v295, 7
        %v367 = vsel %vm358, %v365, %v366
        %v368 = vrot.slane %v366, 4
        %v369 = vrot.slane %v296, 7
        %v370 = vrot.slane %v369, 4
        %v371 = vrot.slane %v297, 7
        %v372 = vsel %vm358, %v370, %v371
        %v373 = vrot.slane %v371, 4
        %v374 = vrot.slane %v298, 7
        %v375 = vrot.slane %v374, 4
        %v376 = vrot.slane %v299, 7
        %v377 = vsel %vm358, %v375, %v376
        %v378 = vrot.slane %v376, 4
        %v379 = vrot.slane %v300, 7
        %v380 = vrot.slane %v379, 4
        %v381 = vrot.slane %v301, 7
        %v382 = vsel %vm358, %v380, %v381
        %v383 = vrot.slane %v381, 4
        %v384 = vrot.slane %v302, 7
        %v385 = vrot.slane %v384, 4
        %v386 = vrot.slane %v303, 7
        %v387 = vsel %vm358, %v385, %v386
        %v388 = vrot.slane %v386, 4
        %v389 = vrot.slane %v304, 7
        %v390 = vrot.slane %v389, 4
        %v391 = vrot.slane %v305, 7
        %v392 = vsel %vm358, %v390, %v391
        %v393 = vrot.slane %v391, 4
        %v394 = vrot.slane %v306, 7
        %v395 = vrot.slane %v394, 4
        %v396 = vrot.slane %v307, 7
        %v397 = vsel %vm358, %v395, %v396
        %v398 = vrot.slane %v396, 4
        %v399 = vrot.slane %v308, 7
        %v400 = vrot.slane %v399, 4
        %v401 = vrot.slane %v309, 7
        %v402 = vsel %vm358, %v400, %v401
        %v403 = vrot.slane %v401, 4
        %v404 = vrot.slane %v310, 7
        %v405 = vrot.slane %v404, 4
        %v406 = vrot.slane %v311, 7
        %v407 = vsel %vm358, %v405, %v406
        %v408 = vrot.slane %v406, 4
        %v409 = vrot.slane %v312, 7
        %v410 = vrot.slane %v409, 4
        %v411 = vrot.slane %v313, 7
        %v412 = vsel %vm358, %v410, %v411
        %v413 = vrot.slane %v411, 4
        %v414 = vrot.slane %v314, 7
        %v415 = vrot.slane %v414, 4
        %v416 = vrot.slane %v315, 7
        %v417 = vsel %vm358, %v415, %v416
        %v418 = vrot.slane %v416, 4
        %v419 = vrot.slane %v316, 7
        %v420 = vrot.slane %v419, 4
        %v421 = vrot.slane %v317, 7
        %v422 = vsel %vm358, %v420, %v421
        %v423 = vrot.slane %v421, 4
        %v424 = vrot.slane %v318, 7
        %v425 = vrot.slane %v424, 4
        %v426 = vrot.slane %v319, 7
        %v427 = vsel %vm358, %v425, %v426
        %v428 = vrot.slane %v426, 4
        %v429 = vrot.slane %v320, 7
        %v430 = vrot.slane %v429, 4
        %v431 = vrot.slane %v321, 7
        %v432 = vsel %vm358, %v430, %v431
        %v433 = vrot.slane %v431, 4
        %v434 = vrot.slane %v322, 7
        %v435 = vrot.slane %v434, 4
        %v436 = vrot.slane %v323, 7
        %v437 = vsel %vm358, %v435, %v436
        %v438 = vrot.slane %v436, 4
        %s487 = scalar_lea.vmem [#allocation2], 24
        %488 = vst [vmem:[%s487] sm:$0xe] %v359
        %489 = vst [vmem:[%s487 + $0x4] sm:$0xf] %v362
        %490 = vst [vmem:[%s487 + $0x8] sm:$0x1] %v363
        %491 = vst [vmem:[%s487 + $0xc] sm:$0xe] %v364
        %492 = vst [vmem:[%s487 + $0x10] sm:$0xf] %v367
        %493 = vst [vmem:[%s487 + $0x14] sm:$0x1] %v368
        %494 = vst [vmem:[%s487 + $0x18] sm:$0xe] %v369
        %495 = vst [vmem:[%s487 + $0x1c] sm:$0xf] %v372
        %496 = vst [vmem:[%s487 + $0x20] sm:$0x1] %v373
        %497 = vst [vmem:[%s487 + $0x24] sm:$0xe] %v374
        %498 = vst [vmem:[%s487 + $0x28] sm:$0xf] %v377
        %499 = vst [vmem:[%s487 + $0x2c] sm:$0x1] %v378
        %500 = vst [vmem:[%s487 + $0x30] sm:$0xe] %v379
        %501 = vst [vmem:[%s487 + $0x34] sm:$0xf] %v382
        %502 = vst [vmem:[%s487 + $0x38] sm:$0x1] %v383
        %503 = vst [vmem:[%s487 + $0x3c] sm:$0xe] %v384
        %504 = vst [vmem:[%s487 + $0x40] sm:$0xf] %v387
        %505 = vst [vmem:[%s487 + $0x44] sm:$0x1] %v388
        %506 = vst [vmem:[%s487 + $0x48] sm:$0xe] %v389
        %507 = vst [vmem:[%s487 + $0x4c] sm:$0xf] %v392
        %508 = vst [vmem:[%s487 + $0x50] sm:$0x1] %v393
        %509 = vst [vmem:[%s487 + $0x54] sm:$0xe] %v394
        %510 = vst [vmem:[%s487 + $0x58] sm:$0xf] %v397
        %511 = vst [vmem:[%s487 + $0x5c] sm:$0x1] %v398
        %512 = vst [vmem:[%s487 + $0x60] sm:$0xe] %v399
        %513 = vst [vmem:[%s487 + $0x64] sm:$0xf] %v402
        %514 = vst [vmem:[%s487 + $0x68] sm:$0x1] %v403
        %515 = vst [vmem:[%s487 + $0x6c] sm:$0xe] %v404
        %516 = vst [vmem:[%s487 + $0x70] sm:$0xf] %v407
        %517 = vst [vmem:[%s487 + $0x74] sm:$0x1] %v408
        %518 = vst [vmem:[%s487 + $0x78] sm:$0xe] %v409
        %519 = vst [vmem:[%s487 + $0x7c] sm:$0xf] %v412
        %520 = vst [vmem:[%s487 + $0x80] sm:$0x1] %v413
        %521 = vst [vmem:[%s487 + $0x84] sm:$0xe] %v414
        %522 = vst [vmem:[%s487 + $0x88] sm:$0xf] %v417
        %523 = vst [vmem:[%s487 + $0x8c] sm:$0x1] %v418
        %524 = vst [vmem:[%s487 + $0x90] sm:$0xe] %v419
        %525 = vst [vmem:[%s487 + $0x94] sm:$0xf] %v422
        %526 = vst [vmem:[%s487 + $0x98] sm:$0x1] %v423
        %527 = vst [vmem:[%s487 + $0x9c] sm:$0xe] %v424
        %528 = vst [vmem:[%s487 + $0xa0] sm:$0xf] %v427
        %529 = vst [vmem:[%s487 + $0xa4] sm:$0x1] %v428
        %530 = vst [vmem:[%s487 + $0xa8] sm:$0xe] %v429
        %531 = vst [vmem:[%s487 + $0xac] sm:$0xf] %v432
        %532 = vst [vmem:[%s487 + $0xb0] sm:$0x1] %v433
        %533 = vst [vmem:[%s487 + $0xb4] sm:$0xe] %v434
        %534 = vst [vmem:[%s487 + $0xb8] sm:$0xf] %v437
        %535 = vst [vmem:[%s487 + $0xbc] sm:$0x1] %v438
        %v536 = vld [vmem:[#allocation2] sm:$0xf]
        %v537 = vld [vmem:[#allocation2 + $0x4] sm:$0xf]
        %v538 = vld [vmem:[#allocation2 + $0xc] sm:$0xf]
        %v539 = vld [vmem:[#allocation2 + $0x10] sm:$0xf]
        %v540 = vld [vmem:[#allocation2 + $0x18] sm:$0xf]
        %v541 = vld [vmem:[#allocation2 + $0x1c] sm:$0xf]
        %v542 = vld [vmem:[#allocation2 + $0x24] sm:$0xf]
        %v543 = vld [vmem:[#allocation2 + $0x28] sm:$0xf]
        %v544 = vld [vmem:[#allocation2 + $0x30] sm:$0xf]
        %v545 = vld [vmem:[#allocation2 + $0x34] sm:$0xf]
        %v546 = vld [vmem:[#allocation2 + $0x3c] sm:$0xf]
        %v547 = vld [vmem:[#allocation2 + $0x40] sm:$0xf]
        %v548 = vld [vmem:[#allocation2 + $0x48] sm:$0xf]
        %v549 = vld [vmem:[#allocation2 + $0x4c] sm:$0xf]
        %v550 = vld [vmem:[#allocation2 + $0x54] sm:$0xf]
        %v551 = vld [vmem:[#allocation2 + $0x58] sm:$0xf]
        %v552 = vld [vmem:[#allocation2 + $0x60] sm:$0xf]
        %v553 = vld [vmem:[#allocation2 + $0x64] sm:$0xf]
        %v554 = vld [vmem:[#allocation2 + $0x6c] sm:$0xf]
        %v555 = vld [vmem:[#allocation2 + $0x70] sm:$0xf]
        %v556 = vld [vmem:[#allocation2 + $0x78] sm:$0xf]
        %v557 = vld [vmem:[#allocation2 + $0x7c] sm:$0xf]
        %v558 = vld [vmem:[#allocation2 + $0x84] sm:$0xf]
        %v559 = vld [vmem:[#allocation2 + $0x88] sm:$0xf]
        %v560 = vld [vmem:[#allocation2 + $0x90] sm:$0xf]
        %v561 = vld [vmem:[#allocation2 + $0x94] sm:$0xf]
        %v562 = vld [vmem:[#allocation2 + $0x9c] sm:$0xf]
        %v563 = vld [vmem:[#allocation2 + $0xa0] sm:$0xf]
        %v564 = vld [vmem:[#allocation2 + $0xa8] sm:$0xf]
        %v565 = vld [vmem:[#allocation2 + $0xac] sm:$0xf]
        %v566 = vld [vmem:[#allocation2 + $0xb4] sm:$0xf]
        %v567 = vld [vmem:[#allocation2 + $0xb8] sm:$0xf]
        %v600 = vunpack.c.l.b16 %v536
        %v601 = vunpack.c.l.b16 %v537
        %v602 = vunpack.c.l.b16 %v538
        %v603 = vunpack.c.l.b16 %v539
        %v604 = vunpack.c.l.b16 %v540
        %v605 = vunpack.c.l.b16 %v541
        %v606 = vunpack.c.l.b16 %v542
        %v607 = vunpack.c.l.b16 %v543
        %v608 = vunpack.c.l.b16 %v544
        %v609 = vunpack.c.l.b16 %v545
        %v610 = vunpack.c.l.b16 %v546
        %v611 = vunpack.c.l.b16 %v547
        %v612 = vunpack.c.l.b16 %v548
        %v613 = vunpack.c.l.b16 %v549
        %v614 = vunpack.c.l.b16 %v550
        %v615 = vunpack.c.l.b16 %v551
        %v616 = vunpack.c.l.b16 %v552
        %v617 = vunpack.c.l.b16 %v553
        %v618 = vunpack.c.l.b16 %v554
        %v619 = vunpack.c.l.b16 %v555
        %v620 = vunpack.c.l.b16 %v556
        %v621 = vunpack.c.l.b16 %v557
        %v622 = vunpack.c.l.b16 %v558
        %v623 = vunpack.c.l.b16 %v559
        %v624 = vunpack.c.l.b16 %v560
        %v625 = vunpack.c.l.b16 %v561
        %v626 = vunpack.c.l.b16 %v562
        %v627 = vunpack.c.l.b16 %v563
        %v628 = vunpack.c.l.b16 %v564
        %v629 = vunpack.c.l.b16 %v565
        %v630 = vunpack.c.l.b16 %v566
        %v631 = vunpack.c.l.b16 %v567
        %v632 = vpack.c.b16 %v601, %v600
        %v633 = vpack.c.b16 %v603, %v602
        %v634 = vpack.c.b16 %v605, %v604
        %v635 = vpack.c.b16 %v607, %v606
        %v636 = vpack.c.b16 %v609, %v608
        %v637 = vpack.c.b16 %v611, %v610
        %v638 = vpack.c.b16 %v613, %v612
        %v639 = vpack.c.b16 %v615, %v614
        %v640 = vpack.c.b16 %v617, %v616
        %v641 = vpack.c.b16 %v619, %v618
        %v642 = vpack.c.b16 %v621, %v620
        %v643 = vpack.c.b16 %v623, %v622
        %v644 = vpack.c.b16 %v625, %v624
        %v645 = vpack.c.b16 %v627, %v626
        %v646 = vpack.c.b16 %v629, %v628
        %v647 = vpack.c.b16 %v631, %v630
        %664 = vst [vmem:[#allocation3] sm:$0xff] %v632
        %665 = vst [vmem:[#allocation3 + $0x48] sm:$0xff] %v633
        %666 = vst [vmem:[#allocation3 + $0x90] sm:$0xff] %v634
        %667 = vst [vmem:[#allocation3 + $0xd8] sm:$0xff] %v635
        %668 = vst [vmem:[#allocation3 + $0x120] sm:$0xff] %v636
        %669 = vst [vmem:[#allocation3 + $0x168] sm:$0xff] %v637
        %670 = vst [vmem:[#allocation3 + $0x1b0] sm:$0xff] %v638
        %671 = vst [vmem:[#allocation3 + $0x1f8] sm:$0xff] %v639
        %672 = vst [vmem:[#allocation3 + $0x240] sm:$0xff] %v640
        %673 = vst [vmem:[#allocation3 + $0x288] sm:$0xff] %v641
        %674 = vst [vmem:[#allocation3 + $0x2d0] sm:$0xff] %v642
        %675 = vst [vmem:[#allocation3 + $0x318] sm:$0xff] %v643
        %676 = vst [vmem:[#allocation3 + $0x360] sm:$0xff] %v644
        %677 = vst [vmem:[#allocation3 + $0x3a8] sm:$0xff] %v645
        %678 = vst [vmem:[#allocation3 + $0x3f0] sm:$0xff] %v646
        %679 = vst [vmem:[#allocation3 + $0x438] sm:$0xff] %v647
        %v680 = vld [vmem:[#allocation2] sm:$0xe]
        %v681 = vld [vmem:[#allocation2 + $0x4] sm:$0xf]
        %v682 = vld [vmem:[#allocation2 + $0x8] sm:$0x1]
        %v683 = vld [vmem:[#allocation2 + $0xc] sm:$0xe]
        %v684 = vld [vmem:[#allocation2 + $0x10] sm:$0xf]
        %v685 = vld [vmem:[#allocation2 + $0x14] sm:$0x1]
        %v686 = vld [vmem:[#allocation2 + $0x18] sm:$0xe]
        %v687 = vld [vmem:[#allocation2 + $0x1c] sm:$0xf]
        %v688 = vld [vmem:[#allocation2 + $0x20] sm:$0x1]
        %v689 = vld [vmem:[#allocation2 + $0x24] sm:$0xe]
        %v690 = vld [vmem:[#allocation2 + $0x28] sm:$0xf]
        %v691 = vld [vmem:[#allocation2 + $0x2c] sm:$0x1]
        %v692 = vld [vmem:[#allocation2 + $0x30] sm:$0xe]
        %v693 = vld [vmem:[#allocation2 + $0x34] sm:$0xf]
        %v694 = vld [vmem:[#allocation2 + $0x38] sm:$0x1]
        %v695 = vld [vmem:[#allocation2 + $0x3c] sm:$0xe]
        %v696 = vld [vmem:[#allocation2 + $0x40] sm:$0xf]
        %v697 = vld [vmem:[#allocation2 + $0x44] sm:$0x1]
        %v698 = vld [vmem:[#allocation2 + $0x48] sm:$0xe]
        %v699 = vld [vmem:[#allocation2 + $0x4c] sm:$0xf]
        %v700 = vld [vmem:[#allocation2 + $0x50] sm:$0x1]
        %v701 = vld [vmem:[#allocation2 + $0x54] sm:$0xe]
        %v702 = vld [vmem:[#allocation2 + $0x58] sm:$0xf]
        %v703 = vld [vmem:[#allocation2 + $0x5c] sm:$0x1]
        %v704 = vld [vmem:[#allocation2 + $0x60] sm:$0xe]
        %v705 = vld [vmem:[#allocation2 + $0x64] sm:$0xf]
        %v706 = vld [vmem:[#allocation2 + $0x68] sm:$0x1]
        %v707 = vld [vmem:[#allocation2 + $0x6c] sm:$0xe]
        %v708 = vld [vmem:[#allocation2 + $0x70] sm:$0xf]
        %v709 = vld [vmem:[#allocation2 + $0x74] sm:$0x1]
        %v710 = vld [vmem:[#allocation2 + $0x78] sm:$0xe]
        %v711 = vld [vmem:[#allocation2 + $0x7c] sm:$0xf]
        %v712 = vld [vmem:[#allocation2 + $0x80] sm:$0x1]
        %v713 = vld [vmem:[#allocation2 + $0x84] sm:$0xe]
        %v714 = vld [vmem:[#allocation2 + $0x88] sm:$0xf]
        %v715 = vld [vmem:[#allocation2 + $0x8c] sm:$0x1]
        %v716 = vld [vmem:[#allocation2 + $0x90] sm:$0xe]
        %v717 = vld [vmem:[#allocation2 + $0x94] sm:$0xf]
        %v718 = vld [vmem:[#allocation2 + $0x98] sm:$0x1]
        %v719 = vld [vmem:[#allocation2 + $0x9c] sm:$0xe]
        %v720 = vld [vmem:[#allocation2 + $0xa0] sm:$0xf]
        %v721 = vld [vmem:[#allocation2 + $0xa4] sm:$0x1]
        %v722 = vld [vmem:[#allocation2 + $0xa8] sm:$0xe]
        %v723 = vld [vmem:[#allocation2 + $0xac] sm:$0xf]
        %v724 = vld [vmem:[#allocation2 + $0xb0] sm:$0x1]
        %v725 = vld [vmem:[#allocation2 + $0xb4] sm:$0xe]
        %v726 = vld [vmem:[#allocation2 + $0xb8] sm:$0xf]
        %v727 = vld [vmem:[#allocation2 + $0xbc] sm:$0x1]
        %vm776 = vcmask 1042432
        %vm777 = vcmask 1046532
        %vm778 = vmor %vm776, %vm777
        %v779 = vrot.slane %v680, 5
        %v780 = vrot.slane %v779, 4
        %v781 = vrot.slane %v681, 5
        %v782 = vsel %vm778, %v780, %v781
        %v783 = vrot.slane %v781, 4
        %v784 = vrot.slane %v682, 5
        %v785 = vsel %vm778, %v783, %v784
        %v786 = vrot.slane %v683, 5
        %v787 = vrot.slane %v786, 4
        %v788 = vrot.slane %v684, 5
        %v789 = vsel %vm778, %v787, %v788
        %v790 = vrot.slane %v788, 4
        %v791 = vrot.slane %v685, 5
        %v792 = vsel %vm778, %v790, %v791
        %v793 = vrot.slane %v686, 5
        %v794 = vrot.slane %v793, 4
        %v795 = vrot.slane %v687, 5
        %v796 = vsel %vm778, %v794, %v795
        %v797 = vrot.slane %v795, 4
        %v798 = vrot.slane %v688, 5
        %v799 = vsel %vm778, %v797, %v798
        %v800 = vrot.slane %v689, 5
        %v801 = vrot.slane %v800, 4
        %v802 = vrot.slane %v690, 5
        %v803 = vsel %vm778, %v801, %v802
        %v804 = vrot.slane %v802, 4
        %v805 = vrot.slane %v691, 5
        %v806 = vsel %vm778, %v804, %v805
        %v807 = vrot.slane %v692, 5
        %v808 = vrot.slane %v807, 4
        %v809 = vrot.slane %v693, 5
        %v810 = vsel %vm778, %v808, %v809
        %v811 = vrot.slane %v809, 4
        %v812 = vrot.slane %v694, 5
        %v813 = vsel %vm778, %v811, %v812
        %v814 = vrot.slane %v695, 5
        %v815 = vrot.slane %v814, 4
        %v816 = vrot.slane %v696, 5
        %v817 = vsel %vm778, %v815, %v816
        %v818 = vrot.slane %v816, 4
        %v819 = vrot.slane %v697, 5
        %v820 = vsel %vm778, %v818, %v819
        %v821 = vrot.slane %v698, 5
        %v822 = vrot.slane %v821, 4
        %v823 = vrot.slane %v699, 5
        %v824 = vsel %vm778, %v822, %v823
        %v825 = vrot.slane %v823, 4
        %v826 = vrot.slane %v700, 5
        %v827 = vsel %vm778, %v825, %v826
        %v828 = vrot.slane %v701, 5
        %v829 = vrot.slane %v828, 4
        %v830 = vrot.slane %v702, 5
        %v831 = vsel %vm778, %v829, %v830
        %v832 = vrot.slane %v830, 4
        %v833 = vrot.slane %v703, 5
        %v834 = vsel %vm778, %v832, %v833
        %v835 = vrot.slane %v704, 5
        %v836 = vrot.slane %v835, 4
        %v837 = vrot.slane %v705, 5
        %v838 = vsel %vm778, %v836, %v837
        %v839 = vrot.slane %v837, 4
        %v840 = vrot.slane %v706, 5
        %v841 = vsel %vm778, %v839, %v840
        %v842 = vrot.slane %v707, 5
        %v843 = vrot.slane %v842, 4
        %v844 = vrot.slane %v708, 5
        %v845 = vsel %vm778, %v843, %v844
        %v846 = vrot.slane %v844, 4
        %v847 = vrot.slane %v709, 5
        %v848 = vsel %vm778, %v846, %v847
        %v849 = vrot.slane %v710, 5
        %v850 = vrot.slane %v849, 4
        %v851 = vrot.slane %v711, 5
        %v852 = vsel %vm778, %v850, %v851
        %v853 = vrot.slane %v851, 4
        %v854 = vrot.slane %v712, 5
        %v855 = vsel %vm778, %v853, %v854
        %v856 = vrot.slane %v713, 5
        %v857 = vrot.slane %v856, 4
        %v858 = vrot.slane %v714, 5
        %v859 = vsel %vm778, %v857, %v858
        %v860 = vrot.slane %v858, 4
        %v861 = vrot.slane %v715, 5
        %v862 = vsel %vm778, %v860, %v861
        %v863 = vrot.slane %v716, 5
        %v864 = vrot.slane %v863, 4
        %v865 = vrot.slane %v717, 5
        %v866 = vsel %vm778, %v864, %v865
        %v867 = vrot.slane %v865, 4
        %v868 = vrot.slane %v718, 5
        %v869 = vsel %vm778, %v867, %v868
        %v870 = vrot.slane %v719, 5
        %v871 = vrot.slane %v870, 4
        %v872 = vrot.slane %v720, 5
        %v873 = vsel %vm778, %v871, %v872
        %v874 = vrot.slane %v872, 4
        %v875 = vrot.slane %v721, 5
        %v876 = vsel %vm778, %v874, %v875
        %v877 = vrot.slane %v722, 5
        %v878 = vrot.slane %v877, 4
        %v879 = vrot.slane %v723, 5
        %v880 = vsel %vm778, %v878, %v879
        %v881 = vrot.slane %v879, 4
        %v882 = vrot.slane %v724, 5
        %v883 = vsel %vm778, %v881, %v882
        %v884 = vrot.slane %v725, 5
        %v885 = vrot.slane %v884, 4
        %v886 = vrot.slane %v726, 5
        %v887 = vsel %vm778, %v885, %v886
        %v888 = vrot.slane %v886, 4
        %v889 = vrot.slane %v727, 5
        %v890 = vsel %vm778, %v888, %v889
        %v891 = vunpack.c.l.b16 %v782
        %v892 = vunpack.c.l.b16 %v785
        %v893 = vunpack.c.l.b16 %v789
        %v894 = vunpack.c.l.b16 %v792
        %v895 = vunpack.c.l.b16 %v796
        %v896 = vunpack.c.l.b16 %v799
        %v897 = vunpack.c.l.b16 %v803
        %v898 = vunpack.c.l.b16 %v806
        %v899 = vunpack.c.l.b16 %v810
        %v900 = vunpack.c.l.b16 %v813
        %v901 = vunpack.c.l.b16 %v817
        %v902 = vunpack.c.l.b16 %v820
        %v903 = vunpack.c.l.b16 %v824
        %v904 = vunpack.c.l.b16 %v827
        %v905 = vunpack.c.l.b16 %v831
        %v906 = vunpack.c.l.b16 %v834
        %v907 = vunpack.c.l.b16 %v838
        %v908 = vunpack.c.l.b16 %v841
        %v909 = vunpack.c.l.b16 %v845
        %v910 = vunpack.c.l.b16 %v848
        %v911 = vunpack.c.l.b16 %v852
        %v912 = vunpack.c.l.b16 %v855
        %v913 = vunpack.c.l.b16 %v859
        %v914 = vunpack.c.l.b16 %v862
        %v915 = vunpack.c.l.b16 %v866
        %v916 = vunpack.c.l.b16 %v869
        %v917 = vunpack.c.l.b16 %v873
        %v918 = vunpack.c.l.b16 %v876
        %v919 = vunpack.c.l.b16 %v880
        %v920 = vunpack.c.l.b16 %v883
        %v921 = vunpack.c.l.b16 %v887
        %v922 = vunpack.c.l.b16 %v890
        %v923 = vpack.c.b16 %v892, %v891
        %v924 = vpack.c.b16 %v894, %v893
        %v925 = vpack.c.b16 %v896, %v895
        %v926 = vpack.c.b16 %v898, %v897
        %v927 = vpack.c.b16 %v900, %v899
        %v928 = vpack.c.b16 %v902, %v901
        %v929 = vpack.c.b16 %v904, %v903
        %v930 = vpack.c.b16 %v906, %v905
        %v931 = vpack.c.b16 %v908, %v907
        %v932 = vpack.c.b16 %v910, %v909
        %v933 = vpack.c.b16 %v912, %v911
        %v934 = vpack.c.b16 %v914, %v913
        %v935 = vpack.c.b16 %v916, %v915
        %v936 = vpack.c.b16 %v918, %v917
        %v937 = vpack.c.b16 %v920, %v919
        %v938 = vpack.c.b16 %v922, %v921
        %955 = vst [vmem:[#allocation3 + $0x8] sm:$0xff] %v923
        %956 = vst [vmem:[#allocation3 + $0x50] sm:$0xff] %v924
        %957 = vst [vmem:[#allocation3 + $0x98] sm:$0xff] %v925
        %958 = vst [vmem:[#allocation3 + $0xe0] sm:$0xff] %v926
        %959 = vst [vmem:[#allocation3 + $0x128] sm:$0xff] %v927
        %960 = vst [vmem:[#allocation3 + $0x170] sm:$0xff] %v928
        %961 = vst [vmem:[#allocation3 + $0x1b8] sm:$0xff] %v929
        %962 = vst [vmem:[#allocation3 + $0x200] sm:$0xff] %v930
        %963 = vst [vmem:[#allocation3 + $0x248] sm:$0xff] %v931
        %964 = vst [vmem:[#allocation3 + $0x290] sm:$0xff] %v932
        %965 = vst [vmem:[#allocation3 + $0x2d8] sm:$0xff] %v933
        %966 = vst [vmem:[#allocation3 + $0x320] sm:$0xff] %v934
        %967 = vst [vmem:[#allocation3 + $0x368] sm:$0xff] %v935
        %968 = vst [vmem:[#allocation3 + $0x3b0] sm:$0xff] %v936
        %969 = vst [vmem:[#allocation3 + $0x3f8] sm:$0xff] %v937
        %970 = vst [vmem:[#allocation3 + $0x440] sm:$0xff] %v938
        %v971 = vld [vmem:[#allocation2] sm:$0xc]
        %v972 = vld [vmem:[#allocation2 + $0x4] sm:$0xf]
        %v973 = vld [vmem:[#allocation2 + $0x8] sm:$0x3]
        %v974 = vld [vmem:[#allocation2 + $0xc] sm:$0xc]
        %v975 = vld [vmem:[#allocation2 + $0x10] sm:$0xf]
        %v976 = vld [vmem:[#allocation2 + $0x14] sm:$0x3]
        %v977 = vld [vmem:[#allocation2 + $0x18] sm:$0xc]
        %v978 = vld [vmem:[#allocation2 + $0x1c] sm:$0xf]
        %v979 = vld [vmem:[#allocation2 + $0x20] sm:$0x3]
        %v980 = vld [vmem:[#allocation2 + $0x24] sm:$0xc]
        %v981 = vld [vmem:[#allocation2 + $0x28] sm:$0xf]
        %v982 = vld [vmem:[#allocation2 + $0x2c] sm:$0x3]
        %v983 = vld [vmem:[#allocation2 + $0x30] sm:$0xc]
        %v984 = vld [vmem:[#allocation2 + $0x34] sm:$0xf]
        %v985 = vld [vmem:[#allocation2 + $0x38] sm:$0x3]
        %v986 = vld [vmem:[#allocation2 + $0x3c] sm:$0xc]
        %v987 = vld [vmem:[#allocation2 + $0x40] sm:$0xf]
        %v988 = vld [vmem:[#allocation2 + $0x44] sm:$0x3]
        %v989 = vld [vmem:[#allocation2 + $0x48] sm:$0xc]
        %v990 = vld [vmem:[#allocation2 + $0x4c] sm:$0xf]
        %v991 = vld [vmem:[#allocation2 + $0x50] sm:$0x3]
        %v992 = vld [vmem:[#allocation2 + $0x54] sm:$0xc]
        %v993 = vld [vmem:[#allocation2 + $0x58] sm:$0xf]
        %v994 = vld [vmem:[#allocation2 + $0x5c] sm:$0x3]
        %v995 = vld [vmem:[#allocation2 + $0x60] sm:$0xc]
        %v996 = vld [vmem:[#allocation2 + $0x64] sm:$0xf]
        %v997 = vld [vmem:[#allocation2 + $0x68] sm:$0x3]
        %v998 = vld [vmem:[#allocation2 + $0x6c] sm:$0xc]
        %v999 = vld [vmem:[#allocation2 + $0x70] sm:$0xf]
        %v1000 = vld [vmem:[#allocation2 + $0x74] sm:$0x3]
        %v1001 = vld [vmem:[#allocation2 + $0x78] sm:$0xc]
        %v1002 = vld [vmem:[#allocation2 + $0x7c] sm:$0xf]
        %v1003 = vld [vmem:[#allocation2 + $0x80] sm:$0x3]
        %v1004 = vld [vmem:[#allocation2 + $0x84] sm:$0xc]
        %v1005 = vld [vmem:[#allocation2 + $0x88] sm:$0xf]
        %v1006 = vld [vmem:[#allocation2 + $0x8c] sm:$0x3]
        %v1007 = vld [vmem:[#allocation2 + $0x90] sm:$0xc]
        %v1008 = vld [vmem:[#allocation2 + $0x94] sm:$0xf]
        %v1009 = vld [vmem:[#allocation2 + $0x98] sm:$0x3]
        %v1010 = vld [vmem:[#allocation2 + $0x9c] sm:$0xc]
        %v1011 = vld [vmem:[#allocation2 + $0xa0] sm:$0xf]
        %v1012 = vld [vmem:[#allocation2 + $0xa4] sm:$0x3]
        %v1013 = vld [vmem:[#allocation2 + $0xa8] sm:$0xc]
        %v1014 = vld [vmem:[#allocation2 + $0xac] sm:$0xf]
        %v1015 = vld [vmem:[#allocation2 + $0xb0] sm:$0x3]
        %v1016 = vld [vmem:[#allocation2 + $0xb4] sm:$0xc]
        %v1017 = vld [vmem:[#allocation2 + $0xb8] sm:$0xf]
        %v1018 = vld [vmem:[#allocation2 + $0xbc] sm:$0x3]
        %vm1067 = vcmask 1041408
        %vm1068 = vcmask 1045508
        %vm1069 = vmor %vm1067, %vm1068
        %v1070 = vrot.slane %v971, 6
        %v1071 = vrot.slane %v1070, 4
        %v1072 = vrot.slane %v972, 6
        %v1073 = vsel %vm1069, %v1071, %v1072
        %v1074 = vrot.slane %v1072, 4
        %v1075 = vrot.slane %v973, 6
        %v1076 = vsel %vm1069, %v1074, %v1075
        %v1077 = vrot.slane %v974, 6
        %v1078 = vrot.slane %v1077, 4
        %v1079 = vrot.slane %v975, 6
        %v1080 = vsel %vm1069, %v1078, %v1079
        %v1081 = vrot.slane %v1079, 4
        %v1082 = vrot.slane %v976, 6
        %v1083 = vsel %vm1069, %v1081, %v1082
        %v1084 = vrot.slane %v977, 6
        %v1085 = vrot.slane %v1084, 4
        %v1086 = vrot.slane %v978, 6
        %v1087 = vsel %vm1069, %v1085, %v1086
        %v1088 = vrot.slane %v1086, 4
        %v1089 = vrot.slane %v979, 6
        %v1090 = vsel %vm1069, %v1088, %v1089
        %v1091 = vrot.slane %v980, 6
        %v1092 = vrot.slane %v1091, 4
        %v1093 = vrot.slane %v981, 6
        %v1094 = vsel %vm1069, %v1092, %v1093
        %v1095 = vrot.slane %v1093, 4
        %v1096 = vrot.slane %v982, 6
        %v1097 = vsel %vm1069, %v1095, %v1096
        %v1098 = vrot.slane %v983, 6
        %v1099 = vrot.slane %v1098, 4
        %v1100 = vrot.slane %v984, 6
        %v1101 = vsel %vm1069, %v1099, %v1100
        %v1102 = vrot.slane %v1100, 4
        %v1103 = vrot.slane %v985, 6
        %v1104 = vsel %vm1069, %v1102, %v1103
        %v1105 = vrot.slane %v986, 6
        %v1106 = vrot.slane %v1105, 4
        %v1107 = vrot.slane %v987, 6
        %v1108 = vsel %vm1069, %v1106, %v1107
        %v1109 = vrot.slane %v1107, 4
        %v1110 = vrot.slane %v988, 6
        %v1111 = vsel %vm1069, %v1109, %v1110
        %v1112 = vrot.slane %v989, 6
        %v1113 = vrot.slane %v1112, 4
        %v1114 = vrot.slane %v990, 6
        %v1115 = vsel %vm1069, %v1113, %v1114
        %v1116 = vrot.slane %v1114, 4
        %v1117 = vrot.slane %v991, 6
        %v1118 = vsel %vm1069, %v1116, %v1117
        %v1119 = vrot.slane %v992, 6
        %v1120 = vrot.slane %v1119, 4
        %v1121 = vrot.slane %v993, 6
        %v1122 = vsel %vm1069, %v1120, %v1121
        %v1123 = vrot.slane %v1121, 4
        %v1124 = vrot.slane %v994, 6
        %v1125 = vsel %vm1069, %v1123, %v1124
        %v1126 = vrot.slane %v995, 6
        %v1127 = vrot.slane %v1126, 4
        %v1128 = vrot.slane %v996, 6
        %v1129 = vsel %vm1069, %v1127, %v1128
        %v1130 = vrot.slane %v1128, 4
        %v1131 = vrot.slane %v997, 6
        %v1132 = vsel %vm1069, %v1130, %v1131
        %v1133 = vrot.slane %v998, 6
        %v1134 = vrot.slane %v1133, 4
        %v1135 = vrot.slane %v999, 6
        %v1136 = vsel %vm1069, %v1134, %v1135
        %v1137 = vrot.slane %v1135, 4
        %v1138 = vrot.slane %v1000, 6
        %v1139 = vsel %vm1069, %v1137, %v1138
        %v1140 = vrot.slane %v1001, 6
        %v1141 = vrot.slane %v1140, 4
        %v1142 = vrot.slane %v1002, 6
        %v1143 = vsel %vm1069, %v1141, %v1142
        %v1144 = vrot.slane %v1142, 4
        %v1145 = vrot.slane %v1003, 6
        %v1146 = vsel %vm1069, %v1144, %v1145
        %v1147 = vrot.slane %v1004, 6
        %v1148 = vrot.slane %v1147, 4
        %v1149 = vrot.slane %v1005, 6
        %v1150 = vsel %vm1069, %v1148, %v1149
        %v1151 = vrot.slane %v1149, 4
        %v1152 = vrot.slane %v1006, 6
        %v1153 = vsel %vm1069, %v1151, %v1152
        %v1154 = vrot.slane %v1007, 6
        %v1155 = vrot.slane %v1154, 4
        %v1156 = vrot.slane %v1008, 6
        %v1157 = vsel %vm1069, %v1155, %v1156
        %v1158 = vrot.slane %v1156, 4
        %v1159 = vrot.slane %v1009, 6
        %v1160 = vsel %vm1069, %v1158, %v1159
        %v1161 = vrot.slane %v1010, 6
        %v1162 = vrot.slane %v1161, 4
        %v1163 = vrot.slane %v1011, 6
        %v1164 = vsel %vm1069, %v1162, %v1163
        %v1165 = vrot.slane %v1163, 4
        %v1166 = vrot.slane %v1012, 6
        %v1167 = vsel %vm1069, %v1165, %v1166
        %v1168 = vrot.slane %v1013, 6
        %v1169 = vrot.slane %v1168, 4
        %v1170 = vrot.slane %v1014, 6
        %v1171 = vsel %vm1069, %v1169, %v1170
        %v1172 = vrot.slane %v1170, 4
        %v1173 = vrot.slane %v1015, 6
        %v1174 = vsel %vm1069, %v1172, %v1173
        %v1175 = vrot.slane %v1016, 6
        %v1176 = vrot.slane %v1175, 4
        %v1177 = vrot.slane %v1017, 6
        %v1178 = vsel %vm1069, %v1176, %v1177
        %v1179 = vrot.slane %v1177, 4
        %v1180 = vrot.slane %v1018, 6
        %v1181 = vsel %vm1069, %v1179, %v1180
        %v1182 = vunpack.c.l.b16 %v1073
        %v1183 = vunpack.c.l.b16 %v1076
        %v1184 = vunpack.c.l.b16 %v1080
        %v1185 = vunpack.c.l.b16 %v1083
        %v1186 = vunpack.c.l.b16 %v1087
        %v1187 = vunpack.c.l.b16 %v1090
        %v1188 = vunpack.c.l.b16 %v1094
        %v1189 = vunpack.c.l.b16 %v1097
        %v1190 = vunpack.c.l.b16 %v1101
        %v1191 = vunpack.c.l.b16 %v1104
        %v1192 = vunpack.c.l.b16 %v1108
        %v1193 = vunpack.c.l.b16 %v1111
        %v1194 = vunpack.c.l.b16 %v1115
        %v1195 = vunpack.c.l.b16 %v1118
        %v1196 = vunpack.c.l.b16 %v1122
        %v1197 = vunpack.c.l.b16 %v1125
        %v1198 = vunpack.c.l.b16 %v1129
        %v1199 = vunpack.c.l.b16 %v1132
        %v1200 = vunpack.c.l.b16 %v1136
        %v1201 = vunpack.c.l.b16 %v1139
        %v1202 = vunpack.c.l.b16 %v1143
        %v1203 = vunpack.c.l.b16 %v1146
        %v1204 = vunpack.c.l.b16 %v1150
        %v1205 = vunpack.c.l.b16 %v1153
        %v1206 = vunpack.c.l.b16 %v1157
        %v1207 = vunpack.c.l.b16 %v1160
        %v1208 = vunpack.c.l.b16 %v1164
        %v1209 = vunpack.c.l.b16 %v1167
        %v1210 = vunpack.c.l.b16 %v1171
        %v1211 = vunpack.c.l.b16 %v1174
        %v1212 = vunpack.c.l.b16 %v1178
        %v1213 = vunpack.c.l.b16 %v1181
        %v1214 = vpack.c.b16 %v1183, %v1182
        %v1215 = vpack.c.b16 %v1185, %v1184
        %v1216 = vpack.c.b16 %v1187, %v1186
        %v1217 = vpack.c.b16 %v1189, %v1188
        %v1218 = vpack.c.b16 %v1191, %v1190
        %v1219 = vpack.c.b16 %v1193, %v1192
        %v1220 = vpack.c.b16 %v1195, %v1194
        %v1221 = vpack.c.b16 %v1197, %v1196
        %v1222 = vpack.c.b16 %v1199, %v1198
        %v1223 = vpack.c.b16 %v1201, %v1200
        %v1224 = vpack.c.b16 %v1203, %v1202
        %v1225 = vpack.c.b16 %v1205, %v1204
        %v1226 = vpack.c.b16 %v1207, %v1206
        %v1227 = vpack.c.b16 %v1209, %v1208
        %v1228 = vpack.c.b16 %v1211, %v1210
        %v1229 = vpack.c.b16 %v1213, %v1212
        %1246 = vst [vmem:[#allocation3 + $0x10] sm:$0xff] %v1214
        %1247 = vst [vmem:[#allocation3 + $0x58] sm:$0xff] %v1215
        %1248 = vst [vmem:[#allocation3 + $0xa0] sm:$0xff] %v1216
        %1249 = vst [vmem:[#allocation3 + $0xe8] sm:$0xff] %v1217
        %1250 = vst [vmem:[#allocation3 + $0x130] sm:$0xff] %v1218
        %1251 = vst [vmem:[#allocation3 + $0x178] sm:$0xff] %v1219
        %1252 = vst [vmem:[#allocation3 + $0x1c0] sm:$0xff] %v1220
        %1253 = vst [vmem:[#allocation3 + $0x208] sm:$0xff] %v1221
        %1254 = vst [vmem:[#allocation3 + $0x250] sm:$0xff] %v1222
        %1255 = vst [vmem:[#allocation3 + $0x298] sm:$0xff] %v1223
        %1256 = vst [vmem:[#allocation3 + $0x2e0] sm:$0xff] %v1224
        %1257 = vst [vmem:[#allocation3 + $0x328] sm:$0xff] %v1225
        %1258 = vst [vmem:[#allocation3 + $0x370] sm:$0xff] %v1226
        %1259 = vst [vmem:[#allocation3 + $0x3b8] sm:$0xff] %v1227
        %1260 = vst [vmem:[#allocation3 + $0x400] sm:$0xff] %v1228
        %1261 = vst [vmem:[#allocation3 + $0x448] sm:$0xff] %v1229
        %v1262 = vld [vmem:[%s487] sm:$0xf]
        %v1263 = vld [vmem:[%s487 + $0x4] sm:$0xf]
        %v1264 = vld [vmem:[%s487 + $0xc] sm:$0xf]
        %v1265 = vld [vmem:[%s487 + $0x10] sm:$0xf]
        %v1266 = vld [vmem:[%s487 + $0x18] sm:$0xf]
        %v1267 = vld [vmem:[%s487 + $0x1c] sm:$0xf]
        %v1268 = vld [vmem:[%s487 + $0x24] sm:$0xf]
        %v1269 = vld [vmem:[%s487 + $0x28] sm:$0xf]
        %v1270 = vld [vmem:[%s487 + $0x30] sm:$0xf]
        %v1271 = vld [vmem:[%s487 + $0x34] sm:$0xf]
        %v1272 = vld [vmem:[%s487 + $0x3c] sm:$0xf]
        %v1273 = vld [vmem:[%s487 + $0x40] sm:$0xf]
        %v1274 = vld [vmem:[%s487 + $0x48] sm:$0xf]
        %v1275 = vld [vmem:[%s487 + $0x4c] sm:$0xf]
        %v1276 = vld [vmem:[%s487 + $0x54] sm:$0xf]
        %v1277 = vld [vmem:[%s487 + $0x58] sm:$0xf]
        %v1278 = vld [vmem:[%s487 + $0x60] sm:$0xf]
        %v1279 = vld [vmem:[%s487 + $0x64] sm:$0xf]
        %v1280 = vld [vmem:[%s487 + $0x6c] sm:$0xf]
        %v1281 = vld [vmem:[%s487 + $0x70] sm:$0xf]
        %v1282 = vld [vmem:[%s487 + $0x78] sm:$0xf]
        %v1283 = vld [vmem:[%s487 + $0x7c] sm:$0xf]
        %v1284 = vld [vmem:[%s487 + $0x84] sm:$0xf]
        %v1285 = vld [vmem:[%s487 + $0x88] sm:$0xf]
        %v1286 = vld [vmem:[%s487 + $0x90] sm:$0xf]
        %v1287 = vld [vmem:[%s487 + $0x94] sm:$0xf]
        %v1288 = vld [vmem:[%s487 + $0x9c] sm:$0xf]
        %v1289 = vld [vmem:[%s487 + $0xa0] sm:$0xf]
        %v1290 = vld [vmem:[%s487 + $0xa8] sm:$0xf]
        %v1291 = vld [vmem:[%s487 + $0xac] sm:$0xf]
        %v1292 = vld [vmem:[%s487 + $0xb4] sm:$0xf]
        %v1293 = vld [vmem:[%s487 + $0xb8] sm:$0xf]
        %v1326 = vunpack.c.l.b16 %v1262
        %v1327 = vunpack.c.l.b16 %v1263
        %v1328 = vunpack.c.l.b16 %v1264
        %v1329 = vunpack.c.l.b16 %v1265
        %v1330 = vunpack.c.l.b16 %v1266
        %v1331 = vunpack.c.l.b16 %v1267
        %v1332 = vunpack.c.l.b16 %v1268
        %v1333 = vunpack.c.l.b16 %v1269
        %v1334 = vunpack.c.l.b16 %v1270
        %v1335 = vunpack.c.l.b16 %v1271
        %v1336 = vunpack.c.l.b16 %v1272
        %v1337 = vunpack.c.l.b16 %v1273
        %v1338 = vunpack.c.l.b16 %v1274
        %v1339 = vunpack.c.l.b16 %v1275
        %v1340 = vunpack.c.l.b16 %v1276
        %v1341 = vunpack.c.l.b16 %v1277
        %v1342 = vunpack.c.l.b16 %v1278
        %v1343 = vunpack.c.l.b16 %v1279
        %v1344 = vunpack.c.l.b16 %v1280
        %v1345 = vunpack.c.l.b16 %v1281
        %v1346 = vunpack.c.l.b16 %v1282
        %v1347 = vunpack.c.l.b16 %v1283
        %v1348 = vunpack.c.l.b16 %v1284
        %v1349 = vunpack.c.l.b16 %v1285
        %v1350 = vunpack.c.l.b16 %v1286
        %v1351 = vunpack.c.l.b16 %v1287
        %v1352 = vunpack.c.l.b16 %v1288
        %v1353 = vunpack.c.l.b16 %v1289
        %v1354 = vunpack.c.l.b16 %v1290
        %v1355 = vunpack.c.l.b16 %v1291
        %v1356 = vunpack.c.l.b16 %v1292
        %v1357 = vunpack.c.l.b16 %v1293
        %v1358 = vpack.c.b16 %v1327, %v1326
        %v1359 = vpack.c.b16 %v1329, %v1328
        %v1360 = vpack.c.b16 %v1331, %v1330
        %v1361 = vpack.c.b16 %v1333, %v1332
        %v1362 = vpack.c.b16 %v1335, %v1334
        %v1363 = vpack.c.b16 %v1337, %v1336
        %v1364 = vpack.c.b16 %v1339, %v1338
        %v1365 = vpack.c.b16 %v1341, %v1340
        %v1366 = vpack.c.b16 %v1343, %v1342
        %v1367 = vpack.c.b16 %v1345, %v1344
        %v1368 = vpack.c.b16 %v1347, %v1346
        %v1369 = vpack.c.b16 %v1349, %v1348
        %v1370 = vpack.c.b16 %v1351, %v1350
        %v1371 = vpack.c.b16 %v1353, %v1352
        %v1372 = vpack.c.b16 %v1355, %v1354
        %v1373 = vpack.c.b16 %v1357, %v1356
        %1390 = vst [vmem:[#allocation3 + $0x18] sm:$0xff] %v1358
        %1391 = vst [vmem:[#allocation3 + $0x60] sm:$0xff] %v1359
        %1392 = vst [vmem:[#allocation3 + $0xa8] sm:$0xff] %v1360
        %1393 = vst [vmem:[#allocation3 + $0xf0] sm:$0xff] %v1361
        %1394 = vst [vmem:[#allocation3 + $0x138] sm:$0xff] %v1362
        %1395 = vst [vmem:[#allocation3 + $0x180] sm:$0xff] %v1363
        %1396 = vst [vmem:[#allocation3 + $0x1c8] sm:$0xff] %v1364
        %1397 = vst [vmem:[#allocation3 + $0x210] sm:$0xff] %v1365
        %1398 = vst [vmem:[#allocation3 + $0x258] sm:$0xff] %v1366
        %1399 = vst [vmem:[#allocation3 + $0x2a0] sm:$0xff] %v1367
        %1400 = vst [vmem:[#allocation3 + $0x2e8] sm:$0xff] %v1368
        %1401 = vst [vmem:[#allocation3 + $0x330] sm:$0xff] %v1369
        %1402 = vst [vmem:[#allocation3 + $0x378] sm:$0xff] %v1370
        %1403 = vst [vmem:[#allocation3 + $0x3c0] sm:$0xff] %v1371
        %1404 = vst [vmem:[#allocation3 + $0x408] sm:$0xff] %v1372
        %1405 = vst [vmem:[#allocation3 + $0x450] sm:$0xff] %v1373
        %v1406 = vld [vmem:[%s487] sm:$0xe]
        %v1407 = vld [vmem:[%s487 + $0x4] sm:$0xf]
        %v1408 = vld [vmem:[%s487 + $0x8] sm:$0x1]
        %v1409 = vld [vmem:[%s487 + $0xc] sm:$0xe]
        %v1410 = vld [vmem:[%s487 + $0x10] sm:$0xf]
        %v1411 = vld [vmem:[%s487 + $0x14] sm:$0x1]
        %v1412 = vld [vmem:[%s487 + $0x18] sm:$0xe]
        %v1413 = vld [vmem:[%s487 + $0x1c] sm:$0xf]
        %v1414 = vld [vmem:[%s487 + $0x20] sm:$0x1]
        %v1415 = vld [vmem:[%s487 + $0x24] sm:$0xe]
        %v1416 = vld [vmem:[%s487 + $0x28] sm:$0xf]
        %v1417 = vld [vmem:[%s487 + $0x2c] sm:$0x1]
        %v1418 = vld [vmem:[%s487 + $0x30] sm:$0xe]
        %v1419 = vld [vmem:[%s487 + $0x34] sm:$0xf]
        %v1420 = vld [vmem:[%s487 + $0x38] sm:$0x1]
        %v1421 = vld [vmem:[%s487 + $0x3c] sm:$0xe]
        %v1422 = vld [vmem:[%s487 + $0x40] sm:$0xf]
        %v1423 = vld [vmem:[%s487 + $0x44] sm:$0x1]
        %v1424 = vld [vmem:[%s487 + $0x48] sm:$0xe]
        %v1425 = vld [vmem:[%s487 + $0x4c] sm:$0xf]
        %v1426 = vld [vmem:[%s487 + $0x50] sm:$0x1]
        %v1427 = vld [vmem:[%s487 + $0x54] sm:$0xe]
        %v1428 = vld [vmem:[%s487 + $0x58] sm:$0xf]
        %v1429 = vld [vmem:[%s487 + $0x5c] sm:$0x1]
        %v1430 = vld [vmem:[%s487 + $0x60] sm:$0xe]
        %v1431 = vld [vmem:[%s487 + $0x64] sm:$0xf]
        %v1432 = vld [vmem:[%s487 + $0x68] sm:$0x1]
        %v1433 = vld [vmem:[%s487 + $0x6c] sm:$0xe]
        %v1434 = vld [vmem:[%s487 + $0x70] sm:$0xf]
        %v1435 = vld [vmem:[%s487 + $0x74] sm:$0x1]
        %v1436 = vld [vmem:[%s487 + $0x78] sm:$0xe]
        %v1437 = vld [vmem:[%s487 + $0x7c] sm:$0xf]
        %v1438 = vld [vmem:[%s487 + $0x80] sm:$0x1]
        %v1439 = vld [vmem:[%s487 + $0x84] sm:$0xe]
        %v1440 = vld [vmem:[%s487 + $0x88] sm:$0xf]
        %v1441 = vld [vmem:[%s487 + $0x8c] sm:$0x1]
        %v1442 = vld [vmem:[%s487 + $0x90] sm:$0xe]
        %v1443 = vld [vmem:[%s487 + $0x94] sm:$0xf]
        %v1444 = vld [vmem:[%s487 + $0x98] sm:$0x1]
        %v1445 = vld [vmem:[%s487 + $0x9c] sm:$0xe]
        %v1446 = vld [vmem:[%s487 + $0xa0] sm:$0xf]
        %v1447 = vld [vmem:[%s487 + $0xa4] sm:$0x1]
        %v1448 = vld [vmem:[%s487 + $0xa8] sm:$0xe]
        %v1449 = vld [vmem:[%s487 + $0xac] sm:$0xf]
        %v1450 = vld [vmem:[%s487 + $0xb0] sm:$0x1]
        %v1451 = vld [vmem:[%s487 + $0xb4] sm:$0xe]
        %v1452 = vld [vmem:[%s487 + $0xb8] sm:$0xf]
        %v1453 = vld [vmem:[%s487 + $0xbc] sm:$0x1]
        %v1502 = vrot.slane %v1406, 5
        %v1503 = vrot.slane %v1502, 4
        %v1504 = vrot.slane %v1407, 5
        %v1505 = vsel %vm778, %v1503, %v1504
        %v1506 = vrot.slane %v1504, 4
        %v1507 = vrot.slane %v1408, 5
        %v1508 = vsel %vm778, %v1506, %v1507
        %v1509 = vrot.slane %v1409, 5
        %v1510 = vrot.slane %v1509, 4
        %v1511 = vrot.slane %v1410, 5
        %v1512 = vsel %vm778, %v1510, %v1511
        %v1513 = vrot.slane %v1511, 4
        %v1514 = vrot.slane %v1411, 5
        %v1515 = vsel %vm778, %v1513, %v1514
        %v1516 = vrot.slane %v1412, 5
        %v1517 = vrot.slane %v1516, 4
        %v1518 = vrot.slane %v1413, 5
        %v1519 = vsel %vm778, %v1517, %v1518
        %v1520 = vrot.slane %v1518, 4
        %v1521 = vrot.slane %v1414, 5
        %v1522 = vsel %vm778, %v1520, %v1521
        %v1523 = vrot.slane %v1415, 5
        %v1524 = vrot.slane %v1523, 4
        %v1525 = vrot.slane %v1416, 5
        %v1526 = vsel %vm778, %v1524, %v1525
        %v1527 = vrot.slane %v1525, 4
        %v1528 = vrot.slane %v1417, 5
        %v1529 = vsel %vm778, %v1527, %v1528
        %v1530 = vrot.slane %v1418, 5
        %v1531 = vrot.slane %v1530, 4
        %v1532 = vrot.slane %v1419, 5
        %v1533 = vsel %vm778, %v1531, %v1532
        %v1534 = vrot.slane %v1532, 4
        %v1535 = vrot.slane %v1420, 5
        %v1536 = vsel %vm778, %v1534, %v1535
        %v1537 = vrot.slane %v1421, 5
        %v1538 = vrot.slane %v1537, 4
        %v1539 = vrot.slane %v1422, 5
        %v1540 = vsel %vm778, %v1538, %v1539
        %v1541 = vrot.slane %v1539, 4
        %v1542 = vrot.slane %v1423, 5
        %v1543 = vsel %vm778, %v1541, %v1542
        %v1544 = vrot.slane %v1424, 5
        %v1545 = vrot.slane %v1544, 4
        %v1546 = vrot.slane %v1425, 5
        %v1547 = vsel %vm778, %v1545, %v1546
        %v1548 = vrot.slane %v1546, 4
        %v1549 = vrot.slane %v1426, 5
        %v1550 = vsel %vm778, %v1548, %v1549
        %v1551 = vrot.slane %v1427, 5
        %v1552 = vrot.slane %v1551, 4
        %v1553 = vrot.slane %v1428, 5
        %v1554 = vsel %vm778, %v1552, %v1553
        %v1555 = vrot.slane %v1553, 4
        %v1556 = vrot.slane %v1429, 5
        %v1557 = vsel %vm778, %v1555, %v1556
        %v1558 = vrot.slane %v1430, 5
        %v1559 = vrot.slane %v1558, 4
        %v1560 = vrot.slane %v1431, 5
        %v1561 = vsel %vm778, %v1559, %v1560
        %v1562 = vrot.slane %v1560, 4
        %v1563 = vrot.slane %v1432, 5
        %v1564 = vsel %vm778, %v1562, %v1563
        %v1565 = vrot.slane %v1433, 5
        %v1566 = vrot.slane %v1565, 4
        %v1567 = vrot.slane %v1434, 5
        %v1568 = vsel %vm778, %v1566, %v1567
        %v1569 = vrot.slane %v1567, 4
        %v1570 = vrot.slane %v1435, 5
        %v1571 = vsel %vm778, %v1569, %v1570
        %v1572 = vrot.slane %v1436, 5
        %v1573 = vrot.slane %v1572, 4
        %v1574 = vrot.slane %v1437, 5
        %v1575 = vsel %vm778, %v1573, %v1574
        %v1576 = vrot.slane %v1574, 4
        %v1577 = vrot.slane %v1438, 5
        %v1578 = vsel %vm778, %v1576, %v1577
        %v1579 = vrot.slane %v1439, 5
        %v1580 = vrot.slane %v1579, 4
        %v1581 = vrot.slane %v1440, 5
        %v1582 = vsel %vm778, %v1580, %v1581
        %v1583 = vrot.slane %v1581, 4
        %v1584 = vrot.slane %v1441, 5
        %v1585 = vsel %vm778, %v1583, %v1584
        %v1586 = vrot.slane %v1442, 5
        %v1587 = vrot.slane %v1586, 4
        %v1588 = vrot.slane %v1443, 5
        %v1589 = vsel %vm778, %v1587, %v1588
        %v1590 = vrot.slane %v1588, 4
        %v1591 = vrot.slane %v1444, 5
        %v1592 = vsel %vm778, %v1590, %v1591
        %v1593 = vrot.slane %v1445, 5
        %v1594 = vrot.slane %v1593, 4
        %v1595 = vrot.slane %v1446, 5
        %v1596 = vsel %vm778, %v1594, %v1595
        %v1597 = vrot.slane %v1595, 4
        %v1598 = vrot.slane %v1447, 5
        %v1599 = vsel %vm778, %v1597, %v1598
        %v1600 = vrot.slane %v1448, 5
        %v1601 = vrot.slane %v1600, 4
        %v1602 = vrot.slane %v1449, 5
        %v1603 = vsel %vm778, %v1601, %v1602
        %v1604 = vrot.slane %v1602, 4
        %v1605 = vrot.slane %v1450, 5
        %v1606 = vsel %vm778, %v1604, %v1605
        %v1607 = vrot.slane %v1451, 5
        %v1608 = vrot.slane %v1607, 4
        %v1609 = vrot.slane %v1452, 5
        %v1610 = vsel %vm778, %v1608, %v1609
        %v1611 = vrot.slane %v1609, 4
        %v1612 = vrot.slane %v1453, 5
        %v1613 = vsel %vm778, %v1611, %v1612
        %v1614 = vunpack.c.l.b16 %v1505
        %v1615 = vunpack.c.l.b16 %v1508
        %v1616 = vunpack.c.l.b16 %v1512
        %v1617 = vunpack.c.l.b16 %v1515
        %v1618 = vunpack.c.l.b16 %v1519
        %v1619 = vunpack.c.l.b16 %v1522
        %v1620 = vunpack.c.l.b16 %v1526
        %v1621 = vunpack.c.l.b16 %v1529
        %v1622 = vunpack.c.l.b16 %v1533
        %v1623 = vunpack.c.l.b16 %v1536
        %v1624 = vunpack.c.l.b16 %v1540
        %v1625 = vunpack.c.l.b16 %v1543
        %v1626 = vunpack.c.l.b16 %v1547
        %v1627 = vunpack.c.l.b16 %v1550
        %v1628 = vunpack.c.l.b16 %v1554
        %v1629 = vunpack.c.l.b16 %v1557
        %v1630 = vunpack.c.l.b16 %v1561
        %v1631 = vunpack.c.l.b16 %v1564
        %v1632 = vunpack.c.l.b16 %v1568
        %v1633 = vunpack.c.l.b16 %v1571
        %v1634 = vunpack.c.l.b16 %v1575
        %v1635 = vunpack.c.l.b16 %v1578
        %v1636 = vunpack.c.l.b16 %v1582
        %v1637 = vunpack.c.l.b16 %v1585
        %v1638 = vunpack.c.l.b16 %v1589
        %v1639 = vunpack.c.l.b16 %v1592
        %v1640 = vunpack.c.l.b16 %v1596
        %v1641 = vunpack.c.l.b16 %v1599
        %v1642 = vunpack.c.l.b16 %v1603
        %v1643 = vunpack.c.l.b16 %v1606
        %v1644 = vunpack.c.l.b16 %v1610
        %v1645 = vunpack.c.l.b16 %v1613
        %v1646 = vpack.c.b16 %v1615, %v1614
        %v1647 = vpack.c.b16 %v1617, %v1616
        %v1648 = vpack.c.b16 %v1619, %v1618
        %v1649 = vpack.c.b16 %v1621, %v1620
        %v1650 = vpack.c.b16 %v1623, %v1622
        %v1651 = vpack.c.b16 %v1625, %v1624
        %v1652 = vpack.c.b16 %v1627, %v1626
        %v1653 = vpack.c.b16 %v1629, %v1628
        %v1654 = vpack.c.b16 %v1631, %v1630
        %v1655 = vpack.c.b16 %v1633, %v1632
        %v1656 = vpack.c.b16 %v1635, %v1634
        %v1657 = vpack.c.b16 %v1637, %v1636
        %v1658 = vpack.c.b16 %v1639, %v1638
        %v1659 = vpack.c.b16 %v1641, %v1640
        %v1660 = vpack.c.b16 %v1643, %v1642
        %v1661 = vpack.c.b16 %v1645, %v1644
        %1678 = vst [vmem:[#allocation3 + $0x20] sm:$0xff] %v1646
        %1679 = vst [vmem:[#allocation3 + $0x68] sm:$0xff] %v1647
        %1680 = vst [vmem:[#allocation3 + $0xb0] sm:$0xff] %v1648
        %1681 = vst [vmem:[#allocation3 + $0xf8] sm:$0xff] %v1649
        %1682 = vst [vmem:[#allocation3 + $0x140] sm:$0xff] %v1650
        %1683 = vst [vmem:[#allocation3 + $0x188] sm:$0xff] %v1651
        %1684 = vst [vmem:[#allocation3 + $0x1d0] sm:$0xff] %v1652
        %1685 = vst [vmem:[#allocation3 + $0x218] sm:$0xff] %v1653
        %1686 = vst [vmem:[#allocation3 + $0x260] sm:$0xff] %v1654
        %1687 = vst [vmem:[#allocation3 + $0x2a8] sm:$0xff] %v1655
        %1688 = vst [vmem:[#allocation3 + $0x2f0] sm:$0xff] %v1656
        %1689 = vst [vmem:[#allocation3 + $0x338] sm:$0xff] %v1657
        %1690 = vst [vmem:[#allocation3 + $0x380] sm:$0xff] %v1658
        %1691 = vst [vmem:[#allocation3 + $0x3c8] sm:$0xff] %v1659
        %1692 = vst [vmem:[#allocation3 + $0x410] sm:$0xff] %v1660
        %1693 = vst [vmem:[#allocation3 + $0x458] sm:$0xff] %v1661
        %v1694 = vld [vmem:[%s487] sm:$0xc]
        %v1695 = vld [vmem:[%s487 + $0x4] sm:$0xf]
        %v1696 = vld [vmem:[%s487 + $0x8] sm:$0x3]
        %v1697 = vld [vmem:[%s487 + $0xc] sm:$0xc]
        %v1698 = vld [vmem:[%s487 + $0x10] sm:$0xf]
        %v1699 = vld [vmem:[%s487 + $0x14] sm:$0x3]
        %v1700 = vld [vmem:[%s487 + $0x18] sm:$0xc]
        %v1701 = vld [vmem:[%s487 + $0x1c] sm:$0xf]
        %v1702 = vld [vmem:[%s487 + $0x20] sm:$0x3]
        %v1703 = vld [vmem:[%s487 + $0x24] sm:$0xc]
        %v1704 = vld [vmem:[%s487 + $0x28] sm:$0xf]
        %v1705 = vld [vmem:[%s487 + $0x2c] sm:$0x3]
        %v1706 = vld [vmem:[%s487 + $0x30] sm:$0xc]
        %v1707 = vld [vmem:[%s487 + $0x34] sm:$0xf]
        %v1708 = vld [vmem:[%s487 + $0x38] sm:$0x3]
        %v1709 = vld [vmem:[%s487 + $0x3c] sm:$0xc]
        %v1710 = vld [vmem:[%s487 + $0x40] sm:$0xf]
        %v1711 = vld [vmem:[%s487 + $0x44] sm:$0x3]
        %v1712 = vld [vmem:[%s487 + $0x48] sm:$0xc]
        %v1713 = vld [vmem:[%s487 + $0x4c] sm:$0xf]
        %v1714 = vld [vmem:[%s487 + $0x50] sm:$0x3]
        %v1715 = vld [vmem:[%s487 + $0x54] sm:$0xc]
        %v1716 = vld [vmem:[%s487 + $0x58] sm:$0xf]
        %v1717 = vld [vmem:[%s487 + $0x5c] sm:$0x3]
        %v1718 = vld [vmem:[%s487 + $0x60] sm:$0xc]
        %v1719 = vld [vmem:[%s487 + $0x64] sm:$0xf]
        %v1720 = vld [vmem:[%s487 + $0x68] sm:$0x3]
        %v1721 = vld [vmem:[%s487 + $0x6c] sm:$0xc]
        %v1722 = vld [vmem:[%s487 + $0x70] sm:$0xf]
        %v1723 = vld [vmem:[%s487 + $0x74] sm:$0x3]
        %v1724 = vld [vmem:[%s487 + $0x78] sm:$0xc]
        %v1725 = vld [vmem:[%s487 + $0x7c] sm:$0xf]
        %v1726 = vld [vmem:[%s487 + $0x80] sm:$0x3]
        %v1727 = vld [vmem:[%s487 + $0x84] sm:$0xc]
        %v1728 = vld [vmem:[%s487 + $0x88] sm:$0xf]
        %v1729 = vld [vmem:[%s487 + $0x8c] sm:$0x3]
        %v1730 = vld [vmem:[%s487 + $0x90] sm:$0xc]
        %v1731 = vld [vmem:[%s487 + $0x94] sm:$0xf]
        %v1732 = vld [vmem:[%s487 + $0x98] sm:$0x3]
        %v1733 = vld [vmem:[%s487 + $0x9c] sm:$0xc]
        %v1734 = vld [vmem:[%s487 + $0xa0] sm:$0xf]
        %v1735 = vld [vmem:[%s487 + $0xa4] sm:$0x3]
        %v1736 = vld [vmem:[%s487 + $0xa8] sm:$0xc]
        %v1737 = vld [vmem:[%s487 + $0xac] sm:$0xf]
        %v1738 = vld [vmem:[%s487 + $0xb0] sm:$0x3]
        %v1739 = vld [vmem:[%s487 + $0xb4] sm:$0xc]
        %v1740 = vld [vmem:[%s487 + $0xb8] sm:$0xf]
        %v1741 = vld [vmem:[%s487 + $0xbc] sm:$0x3]
        %v1790 = vrot.slane %v1694, 6
        %v1791 = vrot.slane %v1790, 4
        %v1792 = vrot.slane %v1695, 6
        %v1793 = vsel %vm1069, %v1791, %v1792
        %v1794 = vrot.slane %v1792, 4
        %v1795 = vrot.slane %v1696, 6
        %v1796 = vsel %vm1069, %v1794, %v1795
        %v1797 = vrot.slane %v1697, 6
        %v1798 = vrot.slane %v1797, 4
        %v1799 = vrot.slane %v1698, 6
        %v1800 = vsel %vm1069, %v1798, %v1799
        %v1801 = vrot.slane %v1799, 4
        %v1802 = vrot.slane %v1699, 6
        %v1803 = vsel %vm1069, %v1801, %v1802
        %v1804 = vrot.slane %v1700, 6
        %v1805 = vrot.slane %v1804, 4
        %v1806 = vrot.slane %v1701, 6
        %v1807 = vsel %vm1069, %v1805, %v1806
        %v1808 = vrot.slane %v1806, 4
        %v1809 = vrot.slane %v1702, 6
        %v1810 = vsel %vm1069, %v1808, %v1809
        %v1811 = vrot.slane %v1703, 6
        %v1812 = vrot.slane %v1811, 4
        %v1813 = vrot.slane %v1704, 6
        %v1814 = vsel %vm1069, %v1812, %v1813
        %v1815 = vrot.slane %v1813, 4
        %v1816 = vrot.slane %v1705, 6
        %v1817 = vsel %vm1069, %v1815, %v1816
        %v1818 = vrot.slane %v1706, 6
        %v1819 = vrot.slane %v1818, 4
        %v1820 = vrot.slane %v1707, 6
        %v1821 = vsel %vm1069, %v1819, %v1820
        %v1822 = vrot.slane %v1820, 4
        %v1823 = vrot.slane %v1708, 6
        %v1824 = vsel %vm1069, %v1822, %v1823
        %v1825 = vrot.slane %v1709, 6
        %v1826 = vrot.slane %v1825, 4
        %v1827 = vrot.slane %v1710, 6
        %v1828 = vsel %vm1069, %v1826, %v1827
        %v1829 = vrot.slane %v1827, 4
        %v1830 = vrot.slane %v1711, 6
        %v1831 = vsel %vm1069, %v1829, %v1830
        %v1832 = vrot.slane %v1712, 6
        %v1833 = vrot.slane %v1832, 4
        %v1834 = vrot.slane %v1713, 6
        %v1835 = vsel %vm1069, %v1833, %v1834
        %v1836 = vrot.slane %v1834, 4
        %v1837 = vrot.slane %v1714, 6
        %v1838 = vsel %vm1069, %v1836, %v1837
        %v1839 = vrot.slane %v1715, 6
        %v1840 = vrot.slane %v1839, 4
        %v1841 = vrot.slane %v1716, 6
        %v1842 = vsel %vm1069, %v1840, %v1841
        %v1843 = vrot.slane %v1841, 4
        %v1844 = vrot.slane %v1717, 6
        %v1845 = vsel %vm1069, %v1843, %v1844
        %v1846 = vrot.slane %v1718, 6
        %v1847 = vrot.slane %v1846, 4
        %v1848 = vrot.slane %v1719, 6
        %v1849 = vsel %vm1069, %v1847, %v1848
        %v1850 = vrot.slane %v1848, 4
        %v1851 = vrot.slane %v1720, 6
        %v1852 = vsel %vm1069, %v1850, %v1851
        %v1853 = vrot.slane %v1721, 6
        %v1854 = vrot.slane %v1853, 4
        %v1855 = vrot.slane %v1722, 6
        %v1856 = vsel %vm1069, %v1854, %v1855
        %v1857 = vrot.slane %v1855, 4
        %v1858 = vrot.slane %v1723, 6
        %v1859 = vsel %vm1069, %v1857, %v1858
        %v1860 = vrot.slane %v1724, 6
        %v1861 = vrot.slane %v1860, 4
        %v1862 = vrot.slane %v1725, 6
        %v1863 = vsel %vm1069, %v1861, %v1862
        %v1864 = vrot.slane %v1862, 4
        %v1865 = vrot.slane %v1726, 6
        %v1866 = vsel %vm1069, %v1864, %v1865
        %v1867 = vrot.slane %v1727, 6
        %v1868 = vrot.slane %v1867, 4
        %v1869 = vrot.slane %v1728, 6
        %v1870 = vsel %vm1069, %v1868, %v1869
        %v1871 = vrot.slane %v1869, 4
        %v1872 = vrot.slane %v1729, 6
        %v1873 = vsel %vm1069, %v1871, %v1872
        %v1874 = vrot.slane %v1730, 6
        %v1875 = vrot.slane %v1874, 4
        %v1876 = vrot.slane %v1731, 6
        %v1877 = vsel %vm1069, %v1875, %v1876
        %v1878 = vrot.slane %v1876, 4
        %v1879 = vrot.slane %v1732, 6
        %v1880 = vsel %vm1069, %v1878, %v1879
        %v1881 = vrot.slane %v1733, 6
        %v1882 = vrot.slane %v1881, 4
        %v1883 = vrot.slane %v1734, 6
        %v1884 = vsel %vm1069, %v1882, %v1883
        %v1885 = vrot.slane %v1883, 4
        %v1886 = vrot.slane %v1735, 6
        %v1887 = vsel %vm1069, %v1885, %v1886
        %v1888 = vrot.slane %v1736, 6
        %v1889 = vrot.slane %v1888, 4
        %v1890 = vrot.slane %v1737, 6
        %v1891 = vsel %vm1069, %v1889, %v1890
        %v1892 = vrot.slane %v1890, 4
        %v1893 = vrot.slane %v1738, 6
        %v1894 = vsel %vm1069, %v1892, %v1893
        %v1895 = vrot.slane %v1739, 6
        %v1896 = vrot.slane %v1895, 4
        %v1897 = vrot.slane %v1740, 6
        %v1898 = vsel %vm1069, %v1896, %v1897
        %v1899 = vrot.slane %v1897, 4
        %v1900 = vrot.slane %v1741, 6
        %v1901 = vsel %vm1069, %v1899, %v1900
        %v1902 = vunpack.c.l.b16 %v1793
        %v1903 = vunpack.c.l.b16 %v1796
        %v1904 = vunpack.c.l.b16 %v1800
        %v1905 = vunpack.c.l.b16 %v1803
        %v1906 = vunpack.c.l.b16 %v1807
        %v1907 = vunpack.c.l.b16 %v1810
        %v1908 = vunpack.c.l.b16 %v1814
        %v1909 = vunpack.c.l.b16 %v1817
        %v1910 = vunpack.c.l.b16 %v1821
        %v1911 = vunpack.c.l.b16 %v1824
        %v1912 = vunpack.c.l.b16 %v1828
        %v1913 = vunpack.c.l.b16 %v1831
        %v1914 = vunpack.c.l.b16 %v1835
        %v1915 = vunpack.c.l.b16 %v1838
        %v1916 = vunpack.c.l.b16 %v1842
        %v1917 = vunpack.c.l.b16 %v1845
        %v1918 = vunpack.c.l.b16 %v1849
        %v1919 = vunpack.c.l.b16 %v1852
        %v1920 = vunpack.c.l.b16 %v1856
        %v1921 = vunpack.c.l.b16 %v1859
        %v1922 = vunpack.c.l.b16 %v1863
        %v1923 = vunpack.c.l.b16 %v1866
        %v1924 = vunpack.c.l.b16 %v1870
        %v1925 = vunpack.c.l.b16 %v1873
        %v1926 = vunpack.c.l.b16 %v1877
        %v1927 = vunpack.c.l.b16 %v1880
        %v1928 = vunpack.c.l.b16 %v1884
        %v1929 = vunpack.c.l.b16 %v1887
        %v1930 = vunpack.c.l.b16 %v1891
        %v1931 = vunpack.c.l.b16 %v1894
        %v1932 = vunpack.c.l.b16 %v1898
        %v1933 = vunpack.c.l.b16 %v1901
        %v1934 = vpack.c.b16 %v1903, %v1902
        %v1935 = vpack.c.b16 %v1905, %v1904
        %v1936 = vpack.c.b16 %v1907, %v1906
        %v1937 = vpack.c.b16 %v1909, %v1908
        %v1938 = vpack.c.b16 %v1911, %v1910
        %v1939 = vpack.c.b16 %v1913, %v1912
        %v1940 = vpack.c.b16 %v1915, %v1914
        %v1941 = vpack.c.b16 %v1917, %v1916
        %v1942 = vpack.c.b16 %v1919, %v1918
        %v1943 = vpack.c.b16 %v1921, %v1920
        %v1944 = vpack.c.b16 %v1923, %v1922
        %v1945 = vpack.c.b16 %v1925, %v1924
        %v1946 = vpack.c.b16 %v1927, %v1926
        %v1947 = vpack.c.b16 %v1929, %v1928
        %v1948 = vpack.c.b16 %v1931, %v1930
        %v1949 = vpack.c.b16 %v1933, %v1932
        %1966 = vst [vmem:[#allocation3 + $0x28] sm:$0xff] %v1934
        %1967 = vst [vmem:[#allocation3 + $0x70] sm:$0xff] %v1935
        %1968 = vst [vmem:[#allocation3 + $0xb8] sm:$0xff] %v1936
        %1969 = vst [vmem:[#allocation3 + $0x100] sm:$0xff] %v1937
        %1970 = vst [vmem:[#allocation3 + $0x148] sm:$0xff] %v1938
        %1971 = vst [vmem:[#allocation3 + $0x190] sm:$0xff] %v1939
        %1972 = vst [vmem:[#allocation3 + $0x1d8] sm:$0xff] %v1940
        %1973 = vst [vmem:[#allocation3 + $0x220] sm:$0xff] %v1941
        %1974 = vst [vmem:[#allocation3 + $0x268] sm:$0xff] %v1942
        %1975 = vst [vmem:[#allocation3 + $0x2b0] sm:$0xff] %v1943
        %1976 = vst [vmem:[#allocation3 + $0x2f8] sm:$0xff] %v1944
        %1977 = vst [vmem:[#allocation3 + $0x340] sm:$0xff] %v1945
        %1978 = vst [vmem:[#allocation3 + $0x388] sm:$0xff] %v1946
        %1979 = vst [vmem:[#allocation3 + $0x3d0] sm:$0xff] %v1947
        %1980 = vst [vmem:[#allocation3 + $0x418] sm:$0xff] %v1948
        %1981 = vst [vmem:[#allocation3 + $0x460] sm:$0xff] %v1949
        %s1982 = scalar_lea.vmem [#allocation2], 48
        %v1983 = vld [vmem:[%s1982] sm:$0xf]
        %v1984 = vld [vmem:[%s1982 + $0x4] sm:$0xf]
        %v1985 = vld [vmem:[%s1982 + $0xc] sm:$0xf]
        %v1986 = vld [vmem:[%s1982 + $0x10] sm:$0xf]
        %v1987 = vld [vmem:[%s1982 + $0x18] sm:$0xf]
        %v1988 = vld [vmem:[%s1982 + $0x1c] sm:$0xf]
        %v1989 = vld [vmem:[%s1982 + $0x24] sm:$0xf]
        %v1990 = vld [vmem:[%s1982 + $0x28] sm:$0xf]
        %v1991 = vld [vmem:[%s1982 + $0x30] sm:$0xf]
        %v1992 = vld [vmem:[%s1982 + $0x34] sm:$0xf]
        %v1993 = vld [vmem:[%s1982 + $0x3c] sm:$0xf]
        %v1994 = vld [vmem:[%s1982 + $0x40] sm:$0xf]
        %v1995 = vld [vmem:[%s1982 + $0x48] sm:$0xf]
        %v1996 = vld [vmem:[%s1982 + $0x4c] sm:$0xf]
        %v1997 = vld [vmem:[%s1982 + $0x54] sm:$0xf]
        %v1998 = vld [vmem:[%s1982 + $0x58] sm:$0xf]
        %v1999 = vld [vmem:[%s1982 + $0x60] sm:$0xf]
        %v2000 = vld [vmem:[%s1982 + $0x64] sm:$0xf]
        %v2001 = vld [vmem:[%s1982 + $0x6c] sm:$0xf]
        %v2002 = vld [vmem:[%s1982 + $0x70] sm:$0xf]
        %v2003 = vld [vmem:[%s1982 + $0x78] sm:$0xf]
        %v2004 = vld [vmem:[%s1982 + $0x7c] sm:$0xf]
        %v2005 = vld [vmem:[%s1982 + $0x84] sm:$0xf]
        %v2006 = vld [vmem:[%s1982 + $0x88] sm:$0xf]
        %v2007 = vld [vmem:[%s1982 + $0x90] sm:$0xf]
        %v2008 = vld [vmem:[%s1982 + $0x94] sm:$0xf]
        %v2009 = vld [vmem:[%s1982 + $0x9c] sm:$0xf]
        %v2010 = vld [vmem:[%s1982 + $0xa0] sm:$0xf]
        %v2011 = vld [vmem:[%s1982 + $0xa8] sm:$0xf]
        %v2012 = vld [vmem:[%s1982 + $0xac] sm:$0xf]
        %v2013 = vld [vmem:[%s1982 + $0xb4] sm:$0xf]
        %v2014 = vld [vmem:[%s1982 + $0xb8] sm:$0xf]
        %v2047 = vunpack.c.l.b16 %v1983
        %v2048 = vunpack.c.l.b16 %v1984
        %v2049 = vunpack.c.l.b16 %v1985
        %v2050 = vunpack.c.l.b16 %v1986
        %v2051 = vunpack.c.l.b16 %v1987
        %v2052 = vunpack.c.l.b16 %v1988
        %v2053 = vunpack.c.l.b16 %v1989
        %v2054 = vunpack.c.l.b16 %v1990
        %v2055 = vunpack.c.l.b16 %v1991
        %v2056 = vunpack.c.l.b16 %v1992
        %v2057 = vunpack.c.l.b16 %v1993
        %v2058 = vunpack.c.l.b16 %v1994
        %v2059 = vunpack.c.l.b16 %v1995
        %v2060 = vunpack.c.l.b16 %v1996
        %v2061 = vunpack.c.l.b16 %v1997
        %v2062 = vunpack.c.l.b16 %v1998
        %v2063 = vunpack.c.l.b16 %v1999
        %v2064 = vunpack.c.l.b16 %v2000
        %v2065 = vunpack.c.l.b16 %v2001
        %v2066 = vunpack.c.l.b16 %v2002
        %v2067 = vunpack.c.l.b16 %v2003
        %v2068 = vunpack.c.l.b16 %v2004
        %v2069 = vunpack.c.l.b16 %v2005
        %v2070 = vunpack.c.l.b16 %v2006
        %v2071 = vunpack.c.l.b16 %v2007
        %v2072 = vunpack.c.l.b16 %v2008
        %v2073 = vunpack.c.l.b16 %v2009
        %v2074 = vunpack.c.l.b16 %v2010
        %v2075 = vunpack.c.l.b16 %v2011
        %v2076 = vunpack.c.l.b16 %v2012
        %v2077 = vunpack.c.l.b16 %v2013
        %v2078 = vunpack.c.l.b16 %v2014
        %v2079 = vpack.c.b16 %v2048, %v2047
        %v2080 = vpack.c.b16 %v2050, %v2049
        %v2081 = vpack.c.b16 %v2052, %v2051
        %v2082 = vpack.c.b16 %v2054, %v2053
        %v2083 = vpack.c.b16 %v2056, %v2055
        %v2084 = vpack.c.b16 %v2058, %v2057
        %v2085 = vpack.c.b16 %v2060, %v2059
        %v2086 = vpack.c.b16 %v2062, %v2061
        %v2087 = vpack.c.b16 %v2064, %v2063
        %v2088 = vpack.c.b16 %v2066, %v2065
        %v2089 = vpack.c.b16 %v2068, %v2067
        %v2090 = vpack.c.b16 %v2070, %v2069
        %v2091 = vpack.c.b16 %v2072, %v2071
        %v2092 = vpack.c.b16 %v2074, %v2073
        %v2093 = vpack.c.b16 %v2076, %v2075
        %v2094 = vpack.c.b16 %v2078, %v2077
        %2111 = vst [vmem:[#allocation3 + $0x30] sm:$0xff] %v2079
        %2112 = vst [vmem:[#allocation3 + $0x78] sm:$0xff] %v2080
        %2113 = vst [vmem:[#allocation3 + $0xc0] sm:$0xff] %v2081
        %2114 = vst [vmem:[#allocation3 + $0x108] sm:$0xff] %v2082
        %2115 = vst [vmem:[#allocation3 + $0x150] sm:$0xff] %v2083
        %2116 = vst [vmem:[#allocation3 + $0x198] sm:$0xff] %v2084
        %2117 = vst [vmem:[#allocation3 + $0x1e0] sm:$0xff] %v2085
        %2118 = vst [vmem:[#allocation3 + $0x228] sm:$0xff] %v2086
        %2119 = vst [vmem:[#allocation3 + $0x270] sm:$0xff] %v2087
        %2120 = vst [vmem:[#allocation3 + $0x2b8] sm:$0xff] %v2088
        %2121 = vst [vmem:[#allocation3 + $0x300] sm:$0xff] %v2089
        %2122 = vst [vmem:[#allocation3 + $0x348] sm:$0xff] %v2090
        %2123 = vst [vmem:[#allocation3 + $0x390] sm:$0xff] %v2091
        %2124 = vst [vmem:[#allocation3 + $0x3d8] sm:$0xff] %v2092
        %2125 = vst [vmem:[#allocation3 + $0x420] sm:$0xff] %v2093
        %2126 = vst [vmem:[#allocation3 + $0x468] sm:$0xff] %v2094
        %v2127 = vld [vmem:[%s1982] sm:$0xe]
        %v2128 = vld [vmem:[%s1982 + $0x4] sm:$0xf]
        %v2129 = vld [vmem:[%s1982 + $0x8] sm:$0x1]
        %v2130 = vld [vmem:[%s1982 + $0xc] sm:$0xe]
        %v2131 = vld [vmem:[%s1982 + $0x10] sm:$0xf]
        %v2132 = vld [vmem:[%s1982 + $0x14] sm:$0x1]
        %v2133 = vld [vmem:[%s1982 + $0x18] sm:$0xe]
        %v2134 = vld [vmem:[%s1982 + $0x1c] sm:$0xf]
        %v2135 = vld [vmem:[%s1982 + $0x20] sm:$0x1]
        %v2136 = vld [vmem:[%s1982 + $0x24] sm:$0xe]
        %v2137 = vld [vmem:[%s1982 + $0x28] sm:$0xf]
        %v2138 = vld [vmem:[%s1982 + $0x2c] sm:$0x1]
        %v2139 = vld [vmem:[%s1982 + $0x30] sm:$0xe]
        %v2140 = vld [vmem:[%s1982 + $0x34] sm:$0xf]
        %v2141 = vld [vmem:[%s1982 + $0x38] sm:$0x1]
        %v2142 = vld [vmem:[%s1982 + $0x3c] sm:$0xe]
        %v2143 = vld [vmem:[%s1982 + $0x40] sm:$0xf]
        %v2144 = vld [vmem:[%s1982 + $0x44] sm:$0x1]
        %v2145 = vld [vmem:[%s1982 + $0x48] sm:$0xe]
        %v2146 = vld [vmem:[%s1982 + $0x4c] sm:$0xf]
        %v2147 = vld [vmem:[%s1982 + $0x50] sm:$0x1]
        %v2148 = vld [vmem:[%s1982 + $0x54] sm:$0xe]
        %v2149 = vld [vmem:[%s1982 + $0x58] sm:$0xf]
        %v2150 = vld [vmem:[%s1982 + $0x5c] sm:$0x1]
        %v2151 = vld [vmem:[%s1982 + $0x60] sm:$0xe]
        %v2152 = vld [vmem:[%s1982 + $0x64] sm:$0xf]
        %v2153 = vld [vmem:[%s1982 + $0x68] sm:$0x1]
        %v2154 = vld [vmem:[%s1982 + $0x6c] sm:$0xe]
        %v2155 = vld [vmem:[%s1982 + $0x70] sm:$0xf]
        %v2156 = vld [vmem:[%s1982 + $0x74] sm:$0x1]
        %v2157 = vld [vmem:[%s1982 + $0x78] sm:$0xe]
        %v2158 = vld [vmem:[%s1982 + $0x7c] sm:$0xf]
        %v2159 = vld [vmem:[%s1982 + $0x80] sm:$0x1]
        %v2160 = vld [vmem:[%s1982 + $0x84] sm:$0xe]
        %v2161 = vld [vmem:[%s1982 + $0x88] sm:$0xf]
        %v2162 = vld [vmem:[%s1982 + $0x8c] sm:$0x1]
        %v2163 = vld [vmem:[%s1982 + $0x90] sm:$0xe]
        %v2164 = vld [vmem:[%s1982 + $0x94] sm:$0xf]
        %v2165 = vld [vmem:[%s1982 + $0x98] sm:$0x1]
        %v2166 = vld [vmem:[%s1982 + $0x9c] sm:$0xe]
        %v2167 = vld [vmem:[%s1982 + $0xa0] sm:$0xf]
        %v2168 = vld [vmem:[%s1982 + $0xa4] sm:$0x1]
        %v2169 = vld [vmem:[%s1982 + $0xa8] sm:$0xe]
        %v2170 = vld [vmem:[%s1982 + $0xac] sm:$0xf]
        %v2171 = vld [vmem:[%s1982 + $0xb0] sm:$0x1]
        %v2172 = vld [vmem:[%s1982 + $0xb4] sm:$0xe]
        %v2173 = vld [vmem:[%s1982 + $0xb8] sm:$0xf]
        %v2174 = vld [vmem:[%s1982 + $0xbc] sm:$0x1]
        %v2223 = vrot.slane %v2127, 5
        %v2224 = vrot.slane %v2223, 4
        %v2225 = vrot.slane %v2128, 5
        %v2226 = vsel %vm778, %v2224, %v2225
        %v2227 = vrot.slane %v2225, 4
        %v2228 = vrot.slane %v2129, 5
        %v2229 = vsel %vm778, %v2227, %v2228
        %v2230 = vrot.slane %v2130, 5
        %v2231 = vrot.slane %v2230, 4
        %v2232 = vrot.slane %v2131, 5
        %v2233 = vsel %vm778, %v2231, %v2232
        %v2234 = vrot.slane %v2232, 4
        %v2235 = vrot.slane %v2132, 5
        %v2236 = vsel %vm778, %v2234, %v2235
        %v2237 = vrot.slane %v2133, 5
        %v2238 = vrot.slane %v2237, 4
        %v2239 = vrot.slane %v2134, 5
        %v2240 = vsel %vm778, %v2238, %v2239
        %v2241 = vrot.slane %v2239, 4
        %v2242 = vrot.slane %v2135, 5
        %v2243 = vsel %vm778, %v2241, %v2242
        %v2244 = vrot.slane %v2136, 5
        %v2245 = vrot.slane %v2244, 4
        %v2246 = vrot.slane %v2137, 5
        %v2247 = vsel %vm778, %v2245, %v2246
        %v2248 = vrot.slane %v2246, 4
        %v2249 = vrot.slane %v2138, 5
        %v2250 = vsel %vm778, %v2248, %v2249
        %v2251 = vrot.slane %v2139, 5
        %v2252 = vrot.slane %v2251, 4
        %v2253 = vrot.slane %v2140, 5
        %v2254 = vsel %vm778, %v2252, %v2253
        %v2255 = vrot.slane %v2253, 4
        %v2256 = vrot.slane %v2141, 5
        %v2257 = vsel %vm778, %v2255, %v2256
        %v2258 = vrot.slane %v2142, 5
        %v2259 = vrot.slane %v2258, 4
        %v2260 = vrot.slane %v2143, 5
        %v2261 = vsel %vm778, %v2259, %v2260
        %v2262 = vrot.slane %v2260, 4
        %v2263 = vrot.slane %v2144, 5
        %v2264 = vsel %vm778, %v2262, %v2263
        %v2265 = vrot.slane %v2145, 5
        %v2266 = vrot.slane %v2265, 4
        %v2267 = vrot.slane %v2146, 5
        %v2268 = vsel %vm778, %v2266, %v2267
        %v2269 = vrot.slane %v2267, 4
        %v2270 = vrot.slane %v2147, 5
        %v2271 = vsel %vm778, %v2269, %v2270
        %v2272 = vrot.slane %v2148, 5
        %v2273 = vrot.slane %v2272, 4
        %v2274 = vrot.slane %v2149, 5
        %v2275 = vsel %vm778, %v2273, %v2274
        %v2276 = vrot.slane %v2274, 4
        %v2277 = vrot.slane %v2150, 5
        %v2278 = vsel %vm778, %v2276, %v2277
        %v2279 = vrot.slane %v2151, 5
        %v2280 = vrot.slane %v2279, 4
        %v2281 = vrot.slane %v2152, 5
        %v2282 = vsel %vm778, %v2280, %v2281
        %v2283 = vrot.slane %v2281, 4
        %v2284 = vrot.slane %v2153, 5
        %v2285 = vsel %vm778, %v2283, %v2284
        %v2286 = vrot.slane %v2154, 5
        %v2287 = vrot.slane %v2286, 4
        %v2288 = vrot.slane %v2155, 5
        %v2289 = vsel %vm778, %v2287, %v2288
        %v2290 = vrot.slane %v2288, 4
        %v2291 = vrot.slane %v2156, 5
        %v2292 = vsel %vm778, %v2290, %v2291
        %v2293 = vrot.slane %v2157, 5
        %v2294 = vrot.slane %v2293, 4
        %v2295 = vrot.slane %v2158, 5
        %v2296 = vsel %vm778, %v2294, %v2295
        %v2297 = vrot.slane %v2295, 4
        %v2298 = vrot.slane %v2159, 5
        %v2299 = vsel %vm778, %v2297, %v2298
        %v2300 = vrot.slane %v2160, 5
        %v2301 = vrot.slane %v2300, 4
        %v2302 = vrot.slane %v2161, 5
        %v2303 = vsel %vm778, %v2301, %v2302
        %v2304 = vrot.slane %v2302, 4
        %v2305 = vrot.slane %v2162, 5
        %v2306 = vsel %vm778, %v2304, %v2305
        %v2307 = vrot.slane %v2163, 5
        %v2308 = vrot.slane %v2307, 4
        %v2309 = vrot.slane %v2164, 5
        %v2310 = vsel %vm778, %v2308, %v2309
        %v2311 = vrot.slane %v2309, 4
        %v2312 = vrot.slane %v2165, 5
        %v2313 = vsel %vm778, %v2311, %v2312
        %v2314 = vrot.slane %v2166, 5
        %v2315 = vrot.slane %v2314, 4
        %v2316 = vrot.slane %v2167, 5
        %v2317 = vsel %vm778, %v2315, %v2316
        %v2318 = vrot.slane %v2316, 4
        %v2319 = vrot.slane %v2168, 5
        %v2320 = vsel %vm778, %v2318, %v2319
        %v2321 = vrot.slane %v2169, 5
        %v2322 = vrot.slane %v2321, 4
        %v2323 = vrot.slane %v2170, 5
        %v2324 = vsel %vm778, %v2322, %v2323
        %v2325 = vrot.slane %v2323, 4
        %v2326 = vrot.slane %v2171, 5
        %v2327 = vsel %vm778, %v2325, %v2326
        %v2328 = vrot.slane %v2172, 5
        %v2329 = vrot.slane %v2328, 4
        %v2330 = vrot.slane %v2173, 5
        %v2331 = vsel %vm778, %v2329, %v2330
        %v2332 = vrot.slane %v2330, 4
        %v2333 = vrot.slane %v2174, 5
        %v2334 = vsel %vm778, %v2332, %v2333
        %v2335 = vunpack.c.l.b16 %v2226
        %v2336 = vunpack.c.l.b16 %v2229
        %v2337 = vunpack.c.l.b16 %v2233
        %v2338 = vunpack.c.l.b16 %v2236
        %v2339 = vunpack.c.l.b16 %v2240
        %v2340 = vunpack.c.l.b16 %v2243
        %v2341 = vunpack.c.l.b16 %v2247
        %v2342 = vunpack.c.l.b16 %v2250
        %v2343 = vunpack.c.l.b16 %v2254
        %v2344 = vunpack.c.l.b16 %v2257
        %v2345 = vunpack.c.l.b16 %v2261
        %v2346 = vunpack.c.l.b16 %v2264
        %v2347 = vunpack.c.l.b16 %v2268
        %v2348 = vunpack.c.l.b16 %v2271
        %v2349 = vunpack.c.l.b16 %v2275
        %v2350 = vunpack.c.l.b16 %v2278
        %v2351 = vunpack.c.l.b16 %v2282
        %v2352 = vunpack.c.l.b16 %v2285
        %v2353 = vunpack.c.l.b16 %v2289
        %v2354 = vunpack.c.l.b16 %v2292
        %v2355 = vunpack.c.l.b16 %v2296
        %v2356 = vunpack.c.l.b16 %v2299
        %v2357 = vunpack.c.l.b16 %v2303
        %v2358 = vunpack.c.l.b16 %v2306
        %v2359 = vunpack.c.l.b16 %v2310
        %v2360 = vunpack.c.l.b16 %v2313
        %v2361 = vunpack.c.l.b16 %v2317
        %v2362 = vunpack.c.l.b16 %v2320
        %v2363 = vunpack.c.l.b16 %v2324
        %v2364 = vunpack.c.l.b16 %v2327
        %v2365 = vunpack.c.l.b16 %v2331
        %v2366 = vunpack.c.l.b16 %v2334
        %v2367 = vpack.c.b16 %v2336, %v2335
        %v2368 = vpack.c.b16 %v2338, %v2337
        %v2369 = vpack.c.b16 %v2340, %v2339
        %v2370 = vpack.c.b16 %v2342, %v2341
        %v2371 = vpack.c.b16 %v2344, %v2343
        %v2372 = vpack.c.b16 %v2346, %v2345
        %v2373 = vpack.c.b16 %v2348, %v2347
        %v2374 = vpack.c.b16 %v2350, %v2349
        %v2375 = vpack.c.b16 %v2352, %v2351
        %v2376 = vpack.c.b16 %v2354, %v2353
        %v2377 = vpack.c.b16 %v2356, %v2355
        %v2378 = vpack.c.b16 %v2358, %v2357
        %v2379 = vpack.c.b16 %v2360, %v2359
        %v2380 = vpack.c.b16 %v2362, %v2361
        %v2381 = vpack.c.b16 %v2364, %v2363
        %v2382 = vpack.c.b16 %v2366, %v2365
        %2399 = vst [vmem:[#allocation3 + $0x38] sm:$0xff] %v2367
        %2400 = vst [vmem:[#allocation3 + $0x80] sm:$0xff] %v2368
        %2401 = vst [vmem:[#allocation3 + $0xc8] sm:$0xff] %v2369
        %2402 = vst [vmem:[#allocation3 + $0x110] sm:$0xff] %v2370
        %2403 = vst [vmem:[#allocation3 + $0x158] sm:$0xff] %v2371
        %2404 = vst [vmem:[#allocation3 + $0x1a0] sm:$0xff] %v2372
        %2405 = vst [vmem:[#allocation3 + $0x1e8] sm:$0xff] %v2373
        %2406 = vst [vmem:[#allocation3 + $0x230] sm:$0xff] %v2374
        %2407 = vst [vmem:[#allocation3 + $0x278] sm:$0xff] %v2375
        %2408 = vst [vmem:[#allocation3 + $0x2c0] sm:$0xff] %v2376
        %2409 = vst [vmem:[#allocation3 + $0x308] sm:$0xff] %v2377
        %2410 = vst [vmem:[#allocation3 + $0x350] sm:$0xff] %v2378
        %2411 = vst [vmem:[#allocation3 + $0x398] sm:$0xff] %v2379
        %2412 = vst [vmem:[#allocation3 + $0x3e0] sm:$0xff] %v2380
        %2413 = vst [vmem:[#allocation3 + $0x428] sm:$0xff] %v2381
        %2414 = vst [vmem:[#allocation3 + $0x470] sm:$0xff] %v2382
        %v2415 = vld [vmem:[%s1982] sm:$0xc]
        %v2416 = vld [vmem:[%s1982 + $0x4] sm:$0xf]
        %v2417 = vld [vmem:[%s1982 + $0x8] sm:$0x3]
        %v2418 = vld [vmem:[%s1982 + $0xc] sm:$0xc]
        %v2419 = vld [vmem:[%s1982 + $0x10] sm:$0xf]
        %v2420 = vld [vmem:[%s1982 + $0x14] sm:$0x3]
        %v2421 = vld [vmem:[%s1982 + $0x18] sm:$0xc]
        %v2422 = vld [vmem:[%s1982 + $0x1c] sm:$0xf]
        %v2423 = vld [vmem:[%s1982 + $0x20] sm:$0x3]
        %v2424 = vld [vmem:[%s1982 + $0x24] sm:$0xc]
        %v2425 = vld [vmem:[%s1982 + $0x28] sm:$0xf]
        %v2426 = vld [vmem:[%s1982 + $0x2c] sm:$0x3]
        %v2427 = vld [vmem:[%s1982 + $0x30] sm:$0xc]
        %v2428 = vld [vmem:[%s1982 + $0x34] sm:$0xf]
        %v2429 = vld [vmem:[%s1982 + $0x38] sm:$0x3]
        %v2430 = vld [vmem:[%s1982 + $0x3c] sm:$0xc]
        %v2431 = vld [vmem:[%s1982 + $0x40] sm:$0xf]
        %v2432 = vld [vmem:[%s1982 + $0x44] sm:$0x3]
        %v2433 = vld [vmem:[%s1982 + $0x48] sm:$0xc]
        %v2434 = vld [vmem:[%s1982 + $0x4c] sm:$0xf]
        %v2435 = vld [vmem:[%s1982 + $0x50] sm:$0x3]
        %v2436 = vld [vmem:[%s1982 + $0x54] sm:$0xc]
        %v2437 = vld [vmem:[%s1982 + $0x58] sm:$0xf]
        %v2438 = vld [vmem:[%s1982 + $0x5c] sm:$0x3]
        %v2439 = vld [vmem:[%s1982 + $0x60] sm:$0xc]
        %v2440 = vld [vmem:[%s1982 + $0x64] sm:$0xf]
        %v2441 = vld [vmem:[%s1982 + $0x68] sm:$0x3]
        %v2442 = vld [vmem:[%s1982 + $0x6c] sm:$0xc]
        %v2443 = vld [vmem:[%s1982 + $0x70] sm:$0xf]
        %v2444 = vld [vmem:[%s1982 + $0x74] sm:$0x3]
        %v2445 = vld [vmem:[%s1982 + $0x78] sm:$0xc]
        %v2446 = vld [vmem:[%s1982 + $0x7c] sm:$0xf]
        %v2447 = vld [vmem:[%s1982 + $0x80] sm:$0x3]
        %v2448 = vld [vmem:[%s1982 + $0x84] sm:$0xc]
        %v2449 = vld [vmem:[%s1982 + $0x88] sm:$0xf]
        %v2450 = vld [vmem:[%s1982 + $0x8c] sm:$0x3]
        %v2451 = vld [vmem:[%s1982 + $0x90] sm:$0xc]
        %v2452 = vld [vmem:[%s1982 + $0x94] sm:$0xf]
        %v2453 = vld [vmem:[%s1982 + $0x98] sm:$0x3]
        %v2454 = vld [vmem:[%s1982 + $0x9c] sm:$0xc]
        %v2455 = vld [vmem:[%s1982 + $0xa0] sm:$0xf]
        %v2456 = vld [vmem:[%s1982 + $0xa4] sm:$0x3]
        %v2457 = vld [vmem:[%s1982 + $0xa8] sm:$0xc]
        %v2458 = vld [vmem:[%s1982 + $0xac] sm:$0xf]
        %v2459 = vld [vmem:[%s1982 + $0xb0] sm:$0x3]
        %v2460 = vld [vmem:[%s1982 + $0xb4] sm:$0xc]
        %v2461 = vld [vmem:[%s1982 + $0xb8] sm:$0xf]
        %v2462 = vld [vmem:[%s1982 + $0xbc] sm:$0x3]
        %v2511 = vrot.slane %v2415, 6
        %v2512 = vrot.slane %v2511, 4
        %v2513 = vrot.slane %v2416, 6
        %v2514 = vsel %vm1069, %v2512, %v2513
        %v2515 = vrot.slane %v2513, 4
        %v2516 = vrot.slane %v2417, 6
        %v2517 = vsel %vm1069, %v2515, %v2516
        %v2518 = vrot.slane %v2418, 6
        %v2519 = vrot.slane %v2518, 4
        %v2520 = vrot.slane %v2419, 6
        %v2521 = vsel %vm1069, %v2519, %v2520
        %v2522 = vrot.slane %v2520, 4
        %v2523 = vrot.slane %v2420, 6
        %v2524 = vsel %vm1069, %v2522, %v2523
        %v2525 = vrot.slane %v2421, 6
        %v2526 = vrot.slane %v2525, 4
        %v2527 = vrot.slane %v2422, 6
        %v2528 = vsel %vm1069, %v2526, %v2527
        %v2529 = vrot.slane %v2527, 4
        %v2530 = vrot.slane %v2423, 6
        %v2531 = vsel %vm1069, %v2529, %v2530
        %v2532 = vrot.slane %v2424, 6
        %v2533 = vrot.slane %v2532, 4
        %v2534 = vrot.slane %v2425, 6
        %v2535 = vsel %vm1069, %v2533, %v2534
        %v2536 = vrot.slane %v2534, 4
        %v2537 = vrot.slane %v2426, 6
        %v2538 = vsel %vm1069, %v2536, %v2537
        %v2539 = vrot.slane %v2427, 6
        %v2540 = vrot.slane %v2539, 4
        %v2541 = vrot.slane %v2428, 6
        %v2542 = vsel %vm1069, %v2540, %v2541
        %v2543 = vrot.slane %v2541, 4
        %v2544 = vrot.slane %v2429, 6
        %v2545 = vsel %vm1069, %v2543, %v2544
        %v2546 = vrot.slane %v2430, 6
        %v2547 = vrot.slane %v2546, 4
        %v2548 = vrot.slane %v2431, 6
        %v2549 = vsel %vm1069, %v2547, %v2548
        %v2550 = vrot.slane %v2548, 4
        %v2551 = vrot.slane %v2432, 6
        %v2552 = vsel %vm1069, %v2550, %v2551
        %v2553 = vrot.slane %v2433, 6
        %v2554 = vrot.slane %v2553, 4
        %v2555 = vrot.slane %v2434, 6
        %v2556 = vsel %vm1069, %v2554, %v2555
        %v2557 = vrot.slane %v2555, 4
        %v2558 = vrot.slane %v2435, 6
        %v2559 = vsel %vm1069, %v2557, %v2558
        %v2560 = vrot.slane %v2436, 6
        %v2561 = vrot.slane %v2560, 4
        %v2562 = vrot.slane %v2437, 6
        %v2563 = vsel %vm1069, %v2561, %v2562
        %v2564 = vrot.slane %v2562, 4
        %v2565 = vrot.slane %v2438, 6
        %v2566 = vsel %vm1069, %v2564, %v2565
        %v2567 = vrot.slane %v2439, 6
        %v2568 = vrot.slane %v2567, 4
        %v2569 = vrot.slane %v2440, 6
        %v2570 = vsel %vm1069, %v2568, %v2569
        %v2571 = vrot.slane %v2569, 4
        %v2572 = vrot.slane %v2441, 6
        %v2573 = vsel %vm1069, %v2571, %v2572
        %v2574 = vrot.slane %v2442, 6
        %v2575 = vrot.slane %v2574, 4
        %v2576 = vrot.slane %v2443, 6
        %v2577 = vsel %vm1069, %v2575, %v2576
        %v2578 = vrot.slane %v2576, 4
        %v2579 = vrot.slane %v2444, 6
        %v2580 = vsel %vm1069, %v2578, %v2579
        %v2581 = vrot.slane %v2445, 6
        %v2582 = vrot.slane %v2581, 4
        %v2583 = vrot.slane %v2446, 6
        %v2584 = vsel %vm1069, %v2582, %v2583
        %v2585 = vrot.slane %v2583, 4
        %v2586 = vrot.slane %v2447, 6
        %v2587 = vsel %vm1069, %v2585, %v2586
        %v2588 = vrot.slane %v2448, 6
        %v2589 = vrot.slane %v2588, 4
        %v2590 = vrot.slane %v2449, 6
        %v2591 = vsel %vm1069, %v2589, %v2590
        %v2592 = vrot.slane %v2590, 4
        %v2593 = vrot.slane %v2450, 6
        %v2594 = vsel %vm1069, %v2592, %v2593
        %v2595 = vrot.slane %v2451, 6
        %v2596 = vrot.slane %v2595, 4
        %v2597 = vrot.slane %v2452, 6
        %v2598 = vsel %vm1069, %v2596, %v2597
        %v2599 = vrot.slane %v2597, 4
        %v2600 = vrot.slane %v2453, 6
        %v2601 = vsel %vm1069, %v2599, %v2600
        %v2602 = vrot.slane %v2454, 6
        %v2603 = vrot.slane %v2602, 4
        %v2604 = vrot.slane %v2455, 6
        %v2605 = vsel %vm1069, %v2603, %v2604
        %v2606 = vrot.slane %v2604, 4
        %v2607 = vrot.slane %v2456, 6
        %v2608 = vsel %vm1069, %v2606, %v2607
        %v2609 = vrot.slane %v2457, 6
        %v2610 = vrot.slane %v2609, 4
        %v2611 = vrot.slane %v2458, 6
        %v2612 = vsel %vm1069, %v2610, %v2611
        %v2613 = vrot.slane %v2611, 4
        %v2614 = vrot.slane %v2459, 6
        %v2615 = vsel %vm1069, %v2613, %v2614
        %v2616 = vrot.slane %v2460, 6
        %v2617 = vrot.slane %v2616, 4
        %v2618 = vrot.slane %v2461, 6
        %v2619 = vsel %vm1069, %v2617, %v2618
        %v2620 = vrot.slane %v2618, 4
        %v2621 = vrot.slane %v2462, 6
        %v2622 = vsel %vm1069, %v2620, %v2621
        %v2623 = vunpack.c.l.b16 %v2514
        %v2624 = vunpack.c.l.b16 %v2517
        %v2625 = vunpack.c.l.b16 %v2521
        %v2626 = vunpack.c.l.b16 %v2524
        %v2627 = vunpack.c.l.b16 %v2528
        %v2628 = vunpack.c.l.b16 %v2531
        %v2629 = vunpack.c.l.b16 %v2535
        %v2630 = vunpack.c.l.b16 %v2538
        %v2631 = vunpack.c.l.b16 %v2542
        %v2632 = vunpack.c.l.b16 %v2545
        %v2633 = vunpack.c.l.b16 %v2549
        %v2634 = vunpack.c.l.b16 %v2552
        %v2635 = vunpack.c.l.b16 %v2556
        %v2636 = vunpack.c.l.b16 %v2559
        %v2637 = vunpack.c.l.b16 %v2563
        %v2638 = vunpack.c.l.b16 %v2566
        %v2639 = vunpack.c.l.b16 %v2570
        %v2640 = vunpack.c.l.b16 %v2573
        %v2641 = vunpack.c.l.b16 %v2577
        %v2642 = vunpack.c.l.b16 %v2580
        %v2643 = vunpack.c.l.b16 %v2584
        %v2644 = vunpack.c.l.b16 %v2587
        %v2645 = vunpack.c.l.b16 %v2591
        %v2646 = vunpack.c.l.b16 %v2594
        %v2647 = vunpack.c.l.b16 %v2598
        %v2648 = vunpack.c.l.b16 %v2601
        %v2649 = vunpack.c.l.b16 %v2605
        %v2650 = vunpack.c.l.b16 %v2608
        %v2651 = vunpack.c.l.b16 %v2612
        %v2652 = vunpack.c.l.b16 %v2615
        %v2653 = vunpack.c.l.b16 %v2619
        %v2654 = vunpack.c.l.b16 %v2622
        %v2655 = vpack.c.b16 %v2624, %v2623
        %v2656 = vpack.c.b16 %v2626, %v2625
        %v2657 = vpack.c.b16 %v2628, %v2627
        %v2658 = vpack.c.b16 %v2630, %v2629
        %v2659 = vpack.c.b16 %v2632, %v2631
        %v2660 = vpack.c.b16 %v2634, %v2633
        %v2661 = vpack.c.b16 %v2636, %v2635
        %v2662 = vpack.c.b16 %v2638, %v2637
        %v2663 = vpack.c.b16 %v2640, %v2639
        %v2664 = vpack.c.b16 %v2642, %v2641
        %v2665 = vpack.c.b16 %v2644, %v2643
        %v2666 = vpack.c.b16 %v2646, %v2645
        %v2667 = vpack.c.b16 %v2648, %v2647
        %v2668 = vpack.c.b16 %v2650, %v2649
        %v2669 = vpack.c.b16 %v2652, %v2651
        %v2670 = vpack.c.b16 %v2654, %v2653
        %2687 = vst [vmem:[#allocation3 + $0x40] sm:$0xff] %v2655
        %2688 = vst [vmem:[#allocation3 + $0x88] sm:$0xff] %v2656
        %2689 = vst [vmem:[#allocation3 + $0xd0] sm:$0xff] %v2657
        %2690 = vst [vmem:[#allocation3 + $0x118] sm:$0xff] %v2658
        %2691 = vst [vmem:[#allocation3 + $0x160] sm:$0xff] %v2659
        %2692 = vst [vmem:[#allocation3 + $0x1a8] sm:$0xff] %v2660
        %2693 = vst [vmem:[#allocation3 + $0x1f0] sm:$0xff] %v2661
        %2694 = vst [vmem:[#allocation3 + $0x238] sm:$0xff] %v2662
        %2695 = vst [vmem:[#allocation3 + $0x280] sm:$0xff] %v2663
        %2696 = vst [vmem:[#allocation3 + $0x2c8] sm:$0xff] %v2664
        %2697 = vst [vmem:[#allocation3 + $0x310] sm:$0xff] %v2665
        %2698 = vst [vmem:[#allocation3 + $0x358] sm:$0xff] %v2666
        %2699 = vst [vmem:[#allocation3 + $0x3a0] sm:$0xff] %v2667
        %2700 = vst [vmem:[#allocation3 + $0x3e8] sm:$0xff] %v2668
        %2701 = vst [vmem:[#allocation3 + $0x430] sm:$0xff] %v2669
        %2702 = vst [vmem:[#allocation3 + $0x478] sm:$0xff] %v2670
        %v2703 = vld [vmem:[#allocation3] sm:$0xff]
        %v2704 = vld [vmem:[#allocation3 + $0x8] sm:$0xff]
        %v2705 = vld [vmem:[#allocation3 + $0x10] sm:$0xff]
        %v2706 = vld [vmem:[#allocation3 + $0x18] sm:$0xff]
        %v2707 = vld [vmem:[#allocation3 + $0x20] sm:$0xff]
        %v2708 = vld [vmem:[#allocation3 + $0x28] sm:$0xff]
        %v2709 = vld [vmem:[#allocation3 + $0x30] sm:$0xff]
        %v2710 = vld [vmem:[#allocation3 + $0x38] sm:$0xff]
        %v2711 = vld [vmem:[#allocation3 + $0x40] sm:$0xff]
        %v2712 = vld [vmem:[#allocation3 + $0x48] sm:$0xff]
        %v2713 = vld [vmem:[#allocation3 + $0x50] sm:$0xff]
        %v2714 = vld [vmem:[#allocation3 + $0x58] sm:$0xff]
        %v2715 = vld [vmem:[#allocation3 + $0x60] sm:$0xff]
        %v2716 = vld [vmem:[#allocation3 + $0x68] sm:$0xff]
        %v2717 = vld [vmem:[#allocation3 + $0x70] sm:$0xff]
        %v2718 = vld [vmem:[#allocation3 + $0x78] sm:$0xff]
        %v2719 = vld [vmem:[#allocation3 + $0x80] sm:$0xff]
        %v2720 = vld [vmem:[#allocation3 + $0x88] sm:$0xff]
        %v2721 = vld [vmem:[#allocation3 + $0x90] sm:$0xff]
        %v2722 = vld [vmem:[#allocation3 + $0x98] sm:$0xff]
        %v2723 = vld [vmem:[#allocation3 + $0xa0] sm:$0xff]
        %v2724 = vld [vmem:[#allocation3 + $0xa8] sm:$0xff]
        %v2725 = vld [vmem:[#allocation3 + $0xb0] sm:$0xff]
        %v2726 = vld [vmem:[#allocation3 + $0xb8] sm:$0xff]
        %v2727 = vld [vmem:[#allocation3 + $0xc0] sm:$0xff]
        %v2728 = vld [vmem:[#allocation3 + $0xc8] sm:$0xff]
        %v2729 = vld [vmem:[#allocation3 + $0xd0] sm:$0xff]
        %v2730 = vld [vmem:[#allocation3 + $0xd8] sm:$0xff]
        %v2731 = vld [vmem:[#allocation3 + $0xe0] sm:$0xff]
        %v2732 = vld [vmem:[#allocation3 + $0xe8] sm:$0xff]
        %v2733 = vld [vmem:[#allocation3 + $0xf0] sm:$0xff]
        %v2734 = vld [vmem:[#allocation3 + $0xf8] sm:$0xff]
        %v2735 = vld [vmem:[#allocation3 + $0x100] sm:$0xff]
        %v2736 = vld [vmem:[#allocation3 + $0x108] sm:$0xff]
        %v2737 = vld [vmem:[#allocation3 + $0x110] sm:$0xff]
        %v2738 = vld [vmem:[#allocation3 + $0x118] sm:$0xff]
        %v2739 = vld [vmem:[#allocation3 + $0x120] sm:$0xff]
        %v2740 = vld [vmem:[#allocation3 + $0x128] sm:$0xff]
        %v2741 = vld [vmem:[#allocation3 + $0x130] sm:$0xff]
        %v2742 = vld [vmem:[#allocation3 + $0x138] sm:$0xff]
        %v2743 = vld [vmem:[#allocation3 + $0x140] sm:$0xff]
        %v2744 = vld [vmem:[#allocation3 + $0x148] sm:$0xff]
        %v2745 = vld [vmem:[#allocation3 + $0x150] sm:$0xff]
        %v2746 = vld [vmem:[#allocation3 + $0x158] sm:$0xff]
        %v2747 = vld [vmem:[#allocation3 + $0x160] sm:$0xff]
        %v2748 = vld [vmem:[#allocation3 + $0x168] sm:$0xff]
        %v2749 = vld [vmem:[#allocation3 + $0x170] sm:$0xff]
        %v2750 = vld [vmem:[#allocation3 + $0x178] sm:$0xff]
        %v2751 = vld [vmem:[#allocation3 + $0x180] sm:$0xff]
        %v2752 = vld [vmem:[#allocation3 + $0x188] sm:$0xff]
        %v2753 = vld [vmem:[#allocation3 + $0x190] sm:$0xff]
        %v2754 = vld [vmem:[#allocation3 + $0x198] sm:$0xff]
        %v2755 = vld [vmem:[#allocation3 + $0x1a0] sm:$0xff]
        %v2756 = vld [vmem:[#allocation3 + $0x1a8] sm:$0xff]
        %v2757 = vld [vmem:[#allocation3 + $0x1b0] sm:$0xff]
        %v2758 = vld [vmem:[#allocation3 + $0x1b8] sm:$0xff]
        %v2759 = vld [vmem:[#allocation3 + $0x1c0] sm:$0xff]
        %v2760 = vld [vmem:[#allocation3 + $0x1c8] sm:$0xff]
        %v2761 = vld [vmem:[#allocation3 + $0x1d0] sm:$0xff]
        %v2762 = vld [vmem:[#allocation3 + $0x1d8] sm:$0xff]
        %v2763 = vld [vmem:[#allocation3 + $0x1e0] sm:$0xff]
        %v2764 = vld [vmem:[#allocation3 + $0x1e8] sm:$0xff]
        %v2765 = vld [vmem:[#allocation3 + $0x1f0] sm:$0xff]
        %v2766 = vld [vmem:[#allocation3 + $0x1f8] sm:$0xff]
        %v2767 = vld [vmem:[#allocation3 + $0x200] sm:$0xff]
        %v2768 = vld [vmem:[#allocation3 + $0x208] sm:$0xff]
        %v2769 = vld [vmem:[#allocation3 + $0x210] sm:$0xff]
        %v2770 = vld [vmem:[#allocation3 + $0x218] sm:$0xff]
        %v2771 = vld [vmem:[#allocation3 + $0x220] sm:$0xff]
        %v2772 = vld [vmem:[#allocation3 + $0x228] sm:$0xff]
        %v2773 = vld [vmem:[#allocation3 + $0x230] sm:$0xff]
        %v2774 = vld [vmem:[#allocation3 + $0x238] sm:$0xff]
        %v2775 = vld [vmem:[#allocation3 + $0x240] sm:$0xff]
        %v2776 = vld [vmem:[#allocation3 + $0x248] sm:$0xff]
        %v2777 = vld [vmem:[#allocation3 + $0x250] sm:$0xff]
        %v2778 = vld [vmem:[#allocation3 + $0x258] sm:$0xff]
        %v2779 = vld [vmem:[#allocation3 + $0x260] sm:$0xff]
        %v2780 = vld [vmem:[#allocation3 + $0x268] sm:$0xff]
        %v2781 = vld [vmem:[#allocation3 + $0x270] sm:$0xff]
        %v2782 = vld [vmem:[#allocation3 + $0x278] sm:$0xff]
        %v2783 = vld [vmem:[#allocation3 + $0x280] sm:$0xff]
        %v2784 = vld [vmem:[#allocation3 + $0x288] sm:$0xff]
        %v2785 = vld [vmem:[#allocation3 + $0x290] sm:$0xff]
        %v2786 = vld [vmem:[#allocation3 + $0x298] sm:$0xff]
        %v2787 = vld [vmem:[#allocation3 + $0x2a0] sm:$0xff]
        %v2788 = vld [vmem:[#allocation3 + $0x2a8] sm:$0xff]
        %v2789 = vld [vmem:[#allocation3 + $0x2b0] sm:$0xff]
        %v2790 = vld [vmem:[#allocation3 + $0x2b8] sm:$0xff]
        %v2791 = vld [vmem:[#allocation3 + $0x2c0] sm:$0xff]
        %v2792 = vld [vmem:[#allocation3 + $0x2c8] sm:$0xff]
        %v2793 = vld [vmem:[#allocation3 + $0x2d0] sm:$0xff]
        %v2794 = vld [vmem:[#allocation3 + $0x2d8] sm:$0xff]
        %v2795 = vld [vmem:[#allocation3 + $0x2e0] sm:$0xff]
        %v2796 = vld [vmem:[#allocation3 + $0x2e8] sm:$0xff]
        %v2797 = vld [vmem:[#allocation3 + $0x2f0] sm:$0xff]
        %v2798 = vld [vmem:[#allocation3 + $0x2f8] sm:$0xff]
        %v2799 = vld [vmem:[#allocation3 + $0x300] sm:$0xff]
        %v2800 = vld [vmem:[#allocation3 + $0x308] sm:$0xff]
        %v2801 = vld [vmem:[#allocation3 + $0x310] sm:$0xff]
        %v2802 = vld [vmem:[#allocation3 + $0x318] sm:$0xff]
        %v2803 = vld [vmem:[#allocation3 + $0x320] sm:$0xff]
        %v2804 = vld [vmem:[#allocation3 + $0x328] sm:$0xff]
        %v2805 = vld [vmem:[#allocation3 + $0x330] sm:$0xff]
        %v2806 = vld [vmem:[#allocation3 + $0x338] sm:$0xff]
        %v2807 = vld [vmem:[#allocation3 + $0x340] sm:$0xff]
        %v2808 = vld [vmem:[#allocation3 + $0x348] sm:$0xff]
        %v2809 = vld [vmem:[#allocation3 + $0x350] sm:$0xff]
        %v2810 = vld [vmem:[#allocation3 + $0x358] sm:$0xff]
        %v2811 = vld [vmem:[#allocation3 + $0x360] sm:$0xff]
        %v2812 = vld [vmem:[#allocation3 + $0x368] sm:$0xff]
        %v2813 = vld [vmem:[#allocation3 + $0x370] sm:$0xff]
        %v2814 = vld [vmem:[#allocation3 + $0x378] sm:$0xff]
        %v2815 = vld [vmem:[#allocation3 + $0x380] sm:$0xff]
        %v2816 = vld [vmem:[#allocation3 + $0x388] sm:$0xff]
        %v2817 = vld [vmem:[#allocation3 + $0x390] sm:$0xff]
        %v2818 = vld [vmem:[#allocation3 + $0x398] sm:$0xff]
        %v2819 = vld [vmem:[#allocation3 + $0x3a0] sm:$0xff]
        %v2820 = vld [vmem:[#allocation3 + $0x3a8] sm:$0xff]
        %v2821 = vld [vmem:[#allocation3 + $0x3b0] sm:$0xff]
        %v2822 = vld [vmem:[#allocation3 + $0x3b8] sm:$0xff]
        %v2823 = vld [vmem:[#allocation3 + $0x3c0] sm:$0xff]
        %v2824 = vld [vmem:[#allocation3 + $0x3c8] sm:$0xff]
        %v2825 = vld [vmem:[#allocation3 + $0x3d0] sm:$0xff]
        %v2826 = vld [vmem:[#allocation3 + $0x3d8] sm:$0xff]
        %v2827 = vld [vmem:[#allocation3 + $0x3e0] sm:$0xff]
        %v2828 = vld [vmem:[#allocation3 + $0x3e8] sm:$0xff]
        %v2829 = vld [vmem:[#allocation3 + $0x3f0] sm:$0xff]
        %v2830 = vld [vmem:[#allocation3 + $0x3f8] sm:$0xff]
        %v2831 = vld [vmem:[#allocation3 + $0x400] sm:$0xff]
        %v2832 = vld [vmem:[#allocation3 + $0x408] sm:$0xff]
        %v2833 = vld [vmem:[#allocation3 + $0x410] sm:$0xff]
        %v2834 = vld [vmem:[#allocation3 + $0x418] sm:$0xff]
        %v2835 = vld [vmem:[#allocation3 + $0x420] sm:$0xff]
        %v2836 = vld [vmem:[#allocation3 + $0x428] sm:$0xff]
        %v2837 = vld [vmem:[#allocation3 + $0x430] sm:$0xff]
        %v2838 = vld [vmem:[#allocation3 + $0x438] sm:$0xff]
        %v2839 = vld [vmem:[#allocation3 + $0x440] sm:$0xff]
        %v2840 = vld [vmem:[#allocation3 + $0x448] sm:$0xff]
        %v2841 = vld [vmem:[#allocation3 + $0x450] sm:$0xff]
        %v2842 = vld [vmem:[#allocation3 + $0x458] sm:$0xff]
        %v2843 = vld [vmem:[#allocation3 + $0x460] sm:$0xff]
        %v2844 = vld [vmem:[#allocation3 + $0x468] sm:$0xff]
        %v2845 = vld [vmem:[#allocation3 + $0x470] sm:$0xff]
        %v2846 = vld [vmem:[#allocation3 + $0x478] sm:$0xff]
        %v2847 = vld [vmem:[#allocation7] sm:$0xf]
        %v2848 = vld [vmem:[#allocation7 + $0x4] sm:$0xf]
        %v2849 = vld [vmem:[#allocation7 + $0x8] sm:$0xf]
        %v2850 = vld [vmem:[#allocation7 + $0xc] sm:$0xf]
        %v2851 = vld [vmem:[#allocation7 + $0x10] sm:$0xf]
        %v2852 = vld [vmem:[#allocation7 + $0x14] sm:$0xf]
        %v2853 = vld [vmem:[#allocation7 + $0x18] sm:$0xf]
        %v2854 = vld [vmem:[#allocation7 + $0x1c] sm:$0xf]
        %v2855 = vld [vmem:[#allocation7 + $0x20] sm:$0xf]
        %v2856 = vld [vmem:[#allocation7 + $0x24] sm:$0xf]
        %v2857 = vld [vmem:[#allocation7 + $0x28] sm:$0xf]
        %v2858 = vld [vmem:[#allocation7 + $0x2c] sm:$0xf]
        %v2859 = vld [vmem:[#allocation7 + $0x30] sm:$0xf]
        %v2860 = vld [vmem:[#allocation7 + $0x34] sm:$0xf]
        %v2861 = vld [vmem:[#allocation7 + $0x38] sm:$0xf]
        %v2862 = vld [vmem:[#allocation7 + $0x3c] sm:$0xf]
        %v2863 = vld [vmem:[#allocation7 + $0x40] sm:$0xf]
        %v2864 = vld [vmem:[#allocation7 + $0x44] sm:$0xf]
        %v2865 = vld [vmem:[#allocation7 + $0x48] sm:$0xf]
        %v2866 = vld [vmem:[#allocation7 + $0x4c] sm:$0xf]
        %v2867 = vld [vmem:[#allocation7 + $0x50] sm:$0xf]
        %v2868 = vld [vmem:[#allocation7 + $0x54] sm:$0xf]
        %v2869 = vld [vmem:[#allocation7 + $0x58] sm:$0xf]
        %v2870 = vld [vmem:[#allocation7 + $0x5c] sm:$0xf]
        %v2871 = vld [vmem:[#allocation7 + $0x60] sm:$0xf]
        %v2872 = vld [vmem:[#allocation7 + $0x64] sm:$0xf]
        %v2873 = vld [vmem:[#allocation7 + $0x68] sm:$0xf]
        %v2874 = vld [vmem:[#allocation7 + $0x6c] sm:$0xf]
        %v2875 = vld [vmem:[#allocation7 + $0x70] sm:$0xf]
        %v2876 = vld [vmem:[#allocation7 + $0x74] sm:$0xf]
        %v2877 = vld [vmem:[#allocation7 + $0x78] sm:$0xf]
        %v2878 = vld [vmem:[#allocation7 + $0x7c] sm:$0xf]
        %v2879 = vld [vmem:[#allocation7 + $0x80] sm:$0xf]
        %v2880 = vld [vmem:[#allocation7 + $0x84] sm:$0xf]
        %v2881 = vld [vmem:[#allocation7 + $0x88] sm:$0xf]
        %v2882 = vld [vmem:[#allocation7 + $0x8c] sm:$0xf]
        %v2883 = vld [vmem:[#allocation7 + $0x90] sm:$0xf]
        %v2884 = vld [vmem:[#allocation7 + $0x94] sm:$0xf]
        %v2885 = vld [vmem:[#allocation7 + $0x98] sm:$0xf]
        %v2886 = vld [vmem:[#allocation7 + $0x9c] sm:$0xf]
        %v2887 = vld [vmem:[#allocation7 + $0xa0] sm:$0xf]
        %v2888 = vld [vmem:[#allocation7 + $0xa4] sm:$0xf]
        %v2889 = vld [vmem:[#allocation7 + $0xa8] sm:$0xf]
        %v2890 = vld [vmem:[#allocation7 + $0xac] sm:$0xf]
        %v2891 = vld [vmem:[#allocation7 + $0xb0] sm:$0xf]
        %v2892 = vld [vmem:[#allocation7 + $0xb4] sm:$0xf]
        %v2893 = vld [vmem:[#allocation7 + $0xb8] sm:$0xf]
        %v2894 = vld [vmem:[#allocation7 + $0xbc] sm:$0xf]
        %v2895 = vld [vmem:[#allocation7 + $0xc0] sm:$0xf]
        %v2896 = vld [vmem:[#allocation7 + $0xc4] sm:$0xf]
        %v2897 = vld [vmem:[#allocation7 + $0xc8] sm:$0xf]
        %v2898 = vld [vmem:[#allocation7 + $0xcc] sm:$0xf]
        %v2899 = vld [vmem:[#allocation7 + $0xd0] sm:$0xf]
        %v2900 = vld [vmem:[#allocation7 + $0xd4] sm:$0xf]
        %v2901 = vld [vmem:[#allocation7 + $0xd8] sm:$0xf]
        %v2902 = vld [vmem:[#allocation7 + $0xdc] sm:$0xf]
        %v2903 = vld [vmem:[#allocation7 + $0xe0] sm:$0xf]
        %v2904 = vld [vmem:[#allocation7 + $0xe4] sm:$0xf]
        %v2905 = vld [vmem:[#allocation7 + $0xe8] sm:$0xf]
        %v2906 = vld [vmem:[#allocation7 + $0xec] sm:$0xf]
        %v2907 = vld [vmem:[#allocation7 + $0xf0] sm:$0xf]
        %v2908 = vld [vmem:[#allocation7 + $0xf4] sm:$0xf]
        %v2909 = vld [vmem:[#allocation7 + $0xf8] sm:$0xf]
        %v2910 = vld [vmem:[#allocation7 + $0xfc] sm:$0xf]
        %v2911 = vld [vmem:[#allocation7 + $0x100] sm:$0xf]
        %v2912 = vld [vmem:[#allocation7 + $0x104] sm:$0xf]
        %v2913 = vld [vmem:[#allocation7 + $0x108] sm:$0xf]
        %v2914 = vld [vmem:[#allocation7 + $0x10c] sm:$0xf]
        %v2915 = vld [vmem:[#allocation7 + $0x110] sm:$0xf]
        %v2916 = vld [vmem:[#allocation7 + $0x114] sm:$0xf]
        %v2917 = vld [vmem:[#allocation7 + $0x118] sm:$0xf]
        %v2918 = vld [vmem:[#allocation7 + $0x11c] sm:$0xf]
        %v2919 = vld [vmem:[#allocation7 + $0x120] sm:$0xf]
        %v2920 = vld [vmem:[#allocation7 + $0x124] sm:$0xf]
        %v2921 = vld [vmem:[#allocation7 + $0x128] sm:$0xf]
        %v2922 = vld [vmem:[#allocation7 + $0x12c] sm:$0xf]
        %v2923 = vld [vmem:[#allocation7 + $0x130] sm:$0xf]
        %v2924 = vld [vmem:[#allocation7 + $0x134] sm:$0xf]
        %v2925 = vld [vmem:[#allocation7 + $0x138] sm:$0xf]
        %v2926 = vld [vmem:[#allocation7 + $0x13c] sm:$0xf]
        %v2927 = vld [vmem:[#allocation7 + $0x140] sm:$0xf]
        %v2928 = vld [vmem:[#allocation7 + $0x144] sm:$0xf]
        %v2929 = vld [vmem:[#allocation7 + $0x148] sm:$0xf]
        %v2930 = vld [vmem:[#allocation7 + $0x14c] sm:$0xf]
        %v2931 = vld [vmem:[#allocation7 + $0x150] sm:$0xf]
        %v2932 = vld [vmem:[#allocation7 + $0x154] sm:$0xf]
        %v2933 = vld [vmem:[#allocation7 + $0x158] sm:$0xf]
        %v2934 = vld [vmem:[#allocation7 + $0x15c] sm:$0xf]
        %v2935 = vld [vmem:[#allocation7 + $0x160] sm:$0xf]
        %v2936 = vld [vmem:[#allocation7 + $0x164] sm:$0xf]
        %v2937 = vld [vmem:[#allocation7 + $0x168] sm:$0xf]
        %v2938 = vld [vmem:[#allocation7 + $0x16c] sm:$0xf]
        %v2939 = vld [vmem:[#allocation7 + $0x170] sm:$0xf]
        %v2940 = vld [vmem:[#allocation7 + $0x174] sm:$0xf]
        %v2941 = vld [vmem:[#allocation7 + $0x178] sm:$0xf]
        %v2942 = vld [vmem:[#allocation7 + $0x17c] sm:$0xf]
        %v2943 = vld [vmem:[#allocation7 + $0x180] sm:$0xf]
        %v2944 = vld [vmem:[#allocation7 + $0x184] sm:$0xf]
        %v2945 = vld [vmem:[#allocation7 + $0x188] sm:$0xf]
        %v2946 = vld [vmem:[#allocation7 + $0x18c] sm:$0xf]
        %v2947 = vld [vmem:[#allocation7 + $0x190] sm:$0xf]
        %v2948 = vld [vmem:[#allocation7 + $0x194] sm:$0xf]
        %v2949 = vld [vmem:[#allocation7 + $0x198] sm:$0xf]
        %v2950 = vld [vmem:[#allocation7 + $0x19c] sm:$0xf]
        %v2951 = vld [vmem:[#allocation7 + $0x1a0] sm:$0xf]
        %v2952 = vld [vmem:[#allocation7 + $0x1a4] sm:$0xf]
        %v2953 = vld [vmem:[#allocation7 + $0x1a8] sm:$0xf]
        %v2954 = vld [vmem:[#allocation7 + $0x1ac] sm:$0xf]
        %v2955 = vld [vmem:[#allocation7 + $0x1b0] sm:$0xf]
        %v2956 = vld [vmem:[#allocation7 + $0x1b4] sm:$0xf]
        %v2957 = vld [vmem:[#allocation7 + $0x1b8] sm:$0xf]
        %v2958 = vld [vmem:[#allocation7 + $0x1bc] sm:$0xf]
        %v2959 = vld [vmem:[#allocation7 + $0x1c0] sm:$0xf]
        %v2960 = vld [vmem:[#allocation7 + $0x1c4] sm:$0xf]
        %v2961 = vld [vmem:[#allocation7 + $0x1c8] sm:$0xf]
        %v2962 = vld [vmem:[#allocation7 + $0x1cc] sm:$0xf]
        %v2963 = vld [vmem:[#allocation7 + $0x1d0] sm:$0xf]
        %v2964 = vld [vmem:[#allocation7 + $0x1d4] sm:$0xf]
        %v2965 = vld [vmem:[#allocation7 + $0x1d8] sm:$0xf]
        %v2966 = vld [vmem:[#allocation7 + $0x1dc] sm:$0xf]
        %v2967 = vld [vmem:[#allocation7 + $0x1e0] sm:$0xf]
        %v2968 = vld [vmem:[#allocation7 + $0x1e4] sm:$0xf]
        %v2969 = vld [vmem:[#allocation7 + $0x1e8] sm:$0xf]
        %v2970 = vld [vmem:[#allocation7 + $0x1ec] sm:$0xf]
        %v2971 = vld [vmem:[#allocation7 + $0x1f0] sm:$0xf]
        %v2972 = vld [vmem:[#allocation7 + $0x1f4] sm:$0xf]
        %v2973 = vld [vmem:[#allocation7 + $0x1f8] sm:$0xf]
        %v2974 = vld [vmem:[#allocation7 + $0x1fc] sm:$0xf]
        %v2975 = vld [vmem:[#allocation7 + $0x200] sm:$0xf]
        %v2976 = vld [vmem:[#allocation7 + $0x204] sm:$0xf]
        %v2977 = vld [vmem:[#allocation7 + $0x208] sm:$0xf]
        %v2978 = vld [vmem:[#allocation7 + $0x20c] sm:$0xf]
        %v2979 = vld [vmem:[#allocation7 + $0x210] sm:$0xf]
        %v2980 = vld [vmem:[#allocation7 + $0x214] sm:$0xf]
        %v2981 = vld [vmem:[#allocation7 + $0x218] sm:$0xf]
        %v2982 = vld [vmem:[#allocation7 + $0x21c] sm:$0xf]
        %v2983 = vld [vmem:[#allocation7 + $0x220] sm:$0xf]
        %v2984 = vld [vmem:[#allocation7 + $0x224] sm:$0xf]
        %v2985 = vld [vmem:[#allocation7 + $0x228] sm:$0xf]
        %v2986 = vld [vmem:[#allocation7 + $0x22c] sm:$0xf]
        %v2987 = vld [vmem:[#allocation7 + $0x230] sm:$0xf]
        %v2988 = vld [vmem:[#allocation7 + $0x234] sm:$0xf]
        %v2989 = vld [vmem:[#allocation7 + $0x238] sm:$0xf]
        %v2990 = vld [vmem:[#allocation7 + $0x23c] sm:$0xf]
        %v3135 = vunpack.c.l.b16 %v2847
        %v3136 = vunpack.c.l.b16 %v2848
        %v3137 = vunpack.c.l.b16 %v2849
        %v3138 = vunpack.c.l.b16 %v2850
        %v3139 = vunpack.c.l.b16 %v2851
        %v3140 = vunpack.c.l.b16 %v2852
        %v3141 = vunpack.c.l.b16 %v2853
        %v3142 = vunpack.c.l.b16 %v2854
        %v3143 = vunpack.c.l.b16 %v2855
        %v3144 = vunpack.c.l.b16 %v2856
        %v3145 = vunpack.c.l.b16 %v2857
        %v3146 = vunpack.c.l.b16 %v2858
        %v3147 = vunpack.c.l.b16 %v2859
        %v3148 = vunpack.c.l.b16 %v2860
        %v3149 = vunpack.c.l.b16 %v2861
        %v3150 = vunpack.c.l.b16 %v2862
        %v3151 = vunpack.c.l.b16 %v2863
        %v3152 = vunpack.c.l.b16 %v2864
        %v3153 = vunpack.c.l.b16 %v2865
        %v3154 = vunpack.c.l.b16 %v2866
        %v3155 = vunpack.c.l.b16 %v2867
        %v3156 = vunpack.c.l.b16 %v2868
        %v3157 = vunpack.c.l.b16 %v2869
        %v3158 = vunpack.c.l.b16 %v2870
        %v3159 = vunpack.c.l.b16 %v2871
        %v3160 = vunpack.c.l.b16 %v2872
        %v3161 = vunpack.c.l.b16 %v2873
        %v3162 = vunpack.c.l.b16 %v2874
        %v3163 = vunpack.c.l.b16 %v2875
        %v3164 = vunpack.c.l.b16 %v2876
        %v3165 = vunpack.c.l.b16 %v2877
        %v3166 = vunpack.c.l.b16 %v2878
        %v3167 = vunpack.c.l.b16 %v2879
        %v3168 = vunpack.c.l.b16 %v2880
        %v3169 = vunpack.c.l.b16 %v2881
        %v3170 = vunpack.c.l.b16 %v2882
        %v3171 = vunpack.c.l.b16 %v2883
        %v3172 = vunpack.c.l.b16 %v2884
        %v3173 = vunpack.c.l.b16 %v2885
        %v3174 = vunpack.c.l.b16 %v2886
        %v3175 = vunpack.c.l.b16 %v2887
        %v3176 = vunpack.c.l.b16 %v2888
        %v3177 = vunpack.c.l.b16 %v2889
        %v3178 = vunpack.c.l.b16 %v2890
        %v3179 = vunpack.c.l.b16 %v2891
        %v3180 = vunpack.c.l.b16 %v2892
        %v3181 = vunpack.c.l.b16 %v2893
        %v3182 = vunpack.c.l.b16 %v2894
        %v3183 = vunpack.c.l.b16 %v2895
        %v3184 = vunpack.c.l.b16 %v2896
        %v3185 = vunpack.c.l.b16 %v2897
        %v3186 = vunpack.c.l.b16 %v2898
        %v3187 = vunpack.c.l.b16 %v2899
        %v3188 = vunpack.c.l.b16 %v2900
        %v3189 = vunpack.c.l.b16 %v2901
        %v3190 = vunpack.c.l.b16 %v2902
        %v3191 = vunpack.c.l.b16 %v2903
        %v3192 = vunpack.c.l.b16 %v2904
        %v3193 = vunpack.c.l.b16 %v2905
        %v3194 = vunpack.c.l.b16 %v2906
        %v3195 = vunpack.c.l.b16 %v2907
        %v3196 = vunpack.c.l.b16 %v2908
        %v3197 = vunpack.c.l.b16 %v2909
        %v3198 = vunpack.c.l.b16 %v2910
        %v3199 = vunpack.c.l.b16 %v2911
        %v3200 = vunpack.c.l.b16 %v2912
        %v3201 = vunpack.c.l.b16 %v2913
        %v3202 = vunpack.c.l.b16 %v2914
        %v3203 = vunpack.c.l.b16 %v2915
        %v3204 = vunpack.c.l.b16 %v2916
        %v3205 = vunpack.c.l.b16 %v2917
        %v3206 = vunpack.c.l.b16 %v2918
        %v3207 = vunpack.c.l.b16 %v2919
        %v3208 = vunpack.c.l.b16 %v2920
        %v3209 = vunpack.c.l.b16 %v2921
        %v3210 = vunpack.c.l.b16 %v2922
        %v3211 = vunpack.c.l.b16 %v2923
        %v3212 = vunpack.c.l.b16 %v2924
        %v3213 = vunpack.c.l.b16 %v2925
        %v3214 = vunpack.c.l.b16 %v2926
        %v3215 = vunpack.c.l.b16 %v2927
        %v3216 = vunpack.c.l.b16 %v2928
        %v3217 = vunpack.c.l.b16 %v2929
        %v3218 = vunpack.c.l.b16 %v2930
        %v3219 = vunpack.c.l.b16 %v2931
        %v3220 = vunpack.c.l.b16 %v2932
        %v3221 = vunpack.c.l.b16 %v2933
        %v3222 = vunpack.c.l.b16 %v2934
        %v3223 = vunpack.c.l.b16 %v2935
        %v3224 = vunpack.c.l.b16 %v2936
        %v3225 = vunpack.c.l.b16 %v2937
        %v3226 = vunpack.c.l.b16 %v2938
        %v3227 = vunpack.c.l.b16 %v2939
        %v3228 = vunpack.c.l.b16 %v2940
        %v3229 = vunpack.c.l.b16 %v2941
        %v3230 = vunpack.c.l.b16 %v2942
        %v3231 = vunpack.c.l.b16 %v2943
        %v3232 = vunpack.c.l.b16 %v2944
        %v3233 = vunpack.c.l.b16 %v2945
        %v3234 = vunpack.c.l.b16 %v2946
        %v3235 = vunpack.c.l.b16 %v2947
        %v3236 = vunpack.c.l.b16 %v2948
        %v3237 = vunpack.c.l.b16 %v2949
        %v3238 = vunpack.c.l.b16 %v2950
        %v3239 = vunpack.c.l.b16 %v2951
        %v3240 = vunpack.c.l.b16 %v2952
        %v3241 = vunpack.c.l.b16 %v2953
        %v3242 = vunpack.c.l.b16 %v2954
        %v3243 = vunpack.c.l.b16 %v2955
        %v3244 = vunpack.c.l.b16 %v2956
        %v3245 = vunpack.c.l.b16 %v2957
        %v3246 = vunpack.c.l.b16 %v2958
        %v3247 = vunpack.c.l.b16 %v2959
        %v3248 = vunpack.c.l.b16 %v2960
        %v3249 = vunpack.c.l.b16 %v2961
        %v3250 = vunpack.c.l.b16 %v2962
        %v3251 = vunpack.c.l.b16 %v2963
        %v3252 = vunpack.c.l.b16 %v2964
        %v3253 = vunpack.c.l.b16 %v2965
        %v3254 = vunpack.c.l.b16 %v2966
        %v3255 = vunpack.c.l.b16 %v2967
        %v3256 = vunpack.c.l.b16 %v2968
        %v3257 = vunpack.c.l.b16 %v2969
        %v3258 = vunpack.c.l.b16 %v2970
        %v3259 = vunpack.c.l.b16 %v2971
        %v3260 = vunpack.c.l.b16 %v2972
        %v3261 = vunpack.c.l.b16 %v2973
        %v3262 = vunpack.c.l.b16 %v2974
        %v3263 = vunpack.c.l.b16 %v2975
        %v3264 = vunpack.c.l.b16 %v2976
        %v3265 = vunpack.c.l.b16 %v2977
        %v3266 = vunpack.c.l.b16 %v2978
        %v3267 = vunpack.c.l.b16 %v2979
        %v3268 = vunpack.c.l.b16 %v2980
        %v3269 = vunpack.c.l.b16 %v2981
        %v3270 = vunpack.c.l.b16 %v2982
        %v3271 = vunpack.c.l.b16 %v2983
        %v3272 = vunpack.c.l.b16 %v2984
        %v3273 = vunpack.c.l.b16 %v2985
        %v3274 = vunpack.c.l.b16 %v2986
        %v3275 = vunpack.c.l.b16 %v2987
        %v3276 = vunpack.c.l.b16 %v2988
        %v3277 = vunpack.c.l.b16 %v2989
        %v3278 = vunpack.c.l.b16 %v2990
        %v3279 = vpack.c.b16 %v3136, %v3135
        %v3280 = vpack.c.b16 %v3138, %v3137
        %v3281 = vpack.c.b16 %v3140, %v3139
        %v3282 = vpack.c.b16 %v3142, %v3141
        %v3283 = vpack.c.b16 %v3144, %v3143
        %v3284 = vpack.c.b16 %v3146, %v3145
        %v3285 = vpack.c.b16 %v3148, %v3147
        %v3286 = vpack.c.b16 %v3150, %v3149
        %v3287 = vpack.c.b16 %v3152, %v3151
        %v3288 = vpack.c.b16 %v3154, %v3153
        %v3289 = vpack.c.b16 %v3156, %v3155
        %v3290 = vpack.c.b16 %v3158, %v3157
        %v3291 = vpack.c.b16 %v3160, %v3159
        %v3292 = vpack.c.b16 %v3162, %v3161
        %v3293 = vpack.c.b16 %v3164, %v3163
        %v3294 = vpack.c.b16 %v3166, %v3165
        %v3295 = vpack.c.b16 %v3168, %v3167
        %v3296 = vpack.c.b16 %v3170, %v3169
        %v3297 = vpack.c.b16 %v3172, %v3171
        %v3298 = vpack.c.b16 %v3174, %v3173
        %v3299 = vpack.c.b16 %v3176, %v3175
        %v3300 = vpack.c.b16 %v3178, %v3177
        %v3301 = vpack.c.b16 %v3180, %v3179
        %v3302 = vpack.c.b16 %v3182, %v3181
        %v3303 = vpack.c.b16 %v3184, %v3183
        %v3304 = vpack.c.b16 %v3186, %v3185
        %v3305 = vpack.c.b16 %v3188, %v3187
        %v3306 = vpack.c.b16 %v3190, %v3189
        %v3307 = vpack.c.b16 %v3192, %v3191
        %v3308 = vpack.c.b16 %v3194, %v3193
        %v3309 = vpack.c.b16 %v3196, %v3195
        %v3310 = vpack.c.b16 %v3198, %v3197
        %v3311 = vpack.c.b16 %v3200, %v3199
        %v3312 = vpack.c.b16 %v3202, %v3201
        %v3313 = vpack.c.b16 %v3204, %v3203
        %v3314 = vpack.c.b16 %v3206, %v3205
        %v3315 = vpack.c.b16 %v3208, %v3207
        %v3316 = vpack.c.b16 %v3210, %v3209
        %v3317 = vpack.c.b16 %v3212, %v3211
        %v3318 = vpack.c.b16 %v3214, %v3213
        %v3319 = vpack.c.b16 %v3216, %v3215
        %v3320 = vpack.c.b16 %v3218, %v3217
        %v3321 = vpack.c.b16 %v3220, %v3219
        %v3322 = vpack.c.b16 %v3222, %v3221
        %v3323 = vpack.c.b16 %v3224, %v3223
        %v3324 = vpack.c.b16 %v3226, %v3225
        %v3325 = vpack.c.b16 %v3228, %v3227
        %v3326 = vpack.c.b16 %v3230, %v3229
        %v3327 = vpack.c.b16 %v3232, %v3231
        %v3328 = vpack.c.b16 %v3234, %v3233
        %v3329 = vpack.c.b16 %v3236, %v3235
        %v3330 = vpack.c.b16 %v3238, %v3237
        %v3331 = vpack.c.b16 %v3240, %v3239
        %v3332 = vpack.c.b16 %v3242, %v3241
        %v3333 = vpack.c.b16 %v3244, %v3243
        %v3334 = vpack.c.b16 %v3246, %v3245
        %v3335 = vpack.c.b16 %v3248, %v3247
        %v3336 = vpack.c.b16 %v3250, %v3249
        %v3337 = vpack.c.b16 %v3252, %v3251
        %v3338 = vpack.c.b16 %v3254, %v3253
        %v3339 = vpack.c.b16 %v3256, %v3255
        %v3340 = vpack.c.b16 %v3258, %v3257
        %v3341 = vpack.c.b16 %v3260, %v3259
        %v3342 = vpack.c.b16 %v3262, %v3261
        %v3343 = vpack.c.b16 %v3264, %v3263
        %v3344 = vpack.c.b16 %v3266, %v3265
        %v3345 = vpack.c.b16 %v3268, %v3267
        %v3346 = vpack.c.b16 %v3270, %v3269
        %v3347 = vpack.c.b16 %v3272, %v3271
        %v3348 = vpack.c.b16 %v3274, %v3273
        %v3349 = vpack.c.b16 %v3276, %v3275
        %v3350 = vpack.c.b16 %v3278, %v3277
        %3423 = vmatprep.subr.bf16.mxu0 0
        %3424 = vmatpush1.bf16.msra.mxu0 %v3279
        %3425 = vmatprep.subr.bf16.mxu0 0
        %3426 = vmatpush1.bf16.msra.mxu0 %v3280
        %3427 = vmatprep.subr.bf16.mxu0 0
        %3428 = vmatpush1.bf16.msra.mxu0 %v3281
        %3429 = vmatprep.subr.bf16.mxu0 0
        %3430 = vmatpush1.bf16.msra.mxu0 %v3282
        %3431 = vmatprep.subr.bf16.mxu0 0
        %3432 = vmatpush1.bf16.msra.mxu0 %v3283
        %3433 = vmatprep.subr.bf16.mxu0 0
        %3434 = vmatpush1.bf16.msra.mxu0 %v3284
        %3435 = vmatprep.subr.bf16.mxu0 0
        %3436 = vmatpush1.bf16.msra.mxu0 %v3285
        %3437 = vmatprep.subr.bf16.mxu0 0
        %3438 = vmatpush1.bf16.msra.mxu0 %v3286
        %3439 = vmatprep.subr.bf16.mxu0 0
        %3440 = vmatpush1.bf16.msra.mxu0 %v3287
        %3441 = vmatprep.subr.bf16.mxu0 0
        %3442 = vmatpush1.bf16.msra.mxu0 %v3288
        %3443 = vmatprep.subr.bf16.mxu0 0
        %3444 = vmatpush1.bf16.msra.mxu0 %v3289
        %3445 = vmatprep.subr.bf16.mxu0 0
        %3446 = vmatpush1.bf16.msra.mxu0 %v3290
        %3447 = vmatprep.subr.bf16.mxu0 0
        %3448 = vmatpush1.bf16.msra.mxu0 %v3291
        %3449 = vmatprep.subr.bf16.mxu0 0
        %3450 = vmatpush1.bf16.msra.mxu0 %v3292
        %3451 = vmatprep.subr.bf16.mxu0 0
        %3452 = vmatpush1.bf16.msra.mxu0 %v3293
        %3453 = vmatprep.subr.bf16.mxu0 0
        %3454 = vmatpush1.bf16.msra.mxu0 %v3294
        %3455 = vmatprep.mubr.bf16.mxu0 %v2704
        %3456 = vmatmul.mubr.bf16.gmra.mrb[0].mxu0 %v2703
        %v3457 = vpop.f32.mrb[0].mxu0
        %v3458 = vadd.f32 0.0, %v3457
        %v3459 = vpop.f32.mrb[0].mxu0
        %v3460 = vpop.f32.mrb[0].mxu0
        %v3461 = vadd.f32 0.0, %v3460
        %v3462 = vpop.f32.mrb[0].mxu0
        %3463 = vmatprep.mubr.bf16.mxu0 %v2713
        %3464 = vmatmul.mubr.bf16.gmra.mrb[0].mxu0 %v2712
        %v3465 = vpop.f32.mrb[0].mxu0
        %v3466 = vadd.f32 0.0, %v3465
        %v3467 = vpop.f32.mrb[0].mxu0
        %v3468 = vpop.f32.mrb[0].mxu0
        %v3469 = vadd.f32 0.0, %v3468
        %v3470 = vpop.f32.mrb[0].mxu0
        %3471 = vmatprep.mubr.bf16.mxu0 %v2722
        %3472 = vmatmul.mubr.bf16.gmra.mrb[0].mxu0 %v2721
        %v3473 = vpop.f32.mrb[0].mxu0
        %v3474 = vadd.f32 0.0, %v3473
        %v3475 = vpop.f32.mrb[0].mxu0
        %v3476 = vpop.f32.mrb[0].mxu0
        %v3477 = vadd.f32 0.0, %v3476
        %v3478 = vpop.f32.mrb[0].mxu0
        %3479 = vmatprep.mubr.bf16.mxu0 %v2731
        %3480 = vmatmul.mubr.bf16.gmra.mrb[0].mxu0 %v2730
        %v3481 = vpop.f32.mrb[0].mxu0
        %v3482 = vadd.f32 0.0, %v3481
        %v3483 = vpop.f32.mrb[0].mxu0
        %v3484 = vpop.f32.mrb[0].mxu0
        %v3485 = vadd.f32 0.0, %v3484
        %v3486 = vpop.f32.mrb[0].mxu0
        %3487 = vmatprep.mubr.bf16.mxu0 %v2740
        %3488 = vmatmul.mubr.bf16.gmra.mrb[0].mxu0 %v2739
        %v3489 = vpop.f32.mrb[0].mxu0
        %v3490 = vadd.f32 0.0, %v3489
        %v3491 = vpop.f32.mrb[0].mxu0
        %v3492 = vpop.f32.mrb[0].mxu0
        %v3493 = vadd.f32 0.0, %v3492
        %v3494 = vpop.f32.mrb[0].mxu0
        %3495 = vmatprep.mubr.bf16.mxu0 %v2749
        %3496 = vmatmul.mubr.bf16.gmra.mrb[0].mxu0 %v2748
        %v3497 = vpop.f32.mrb[0].mxu0
        %v3498 = vadd.f32 0.0, %v3497
        %v3499 = vpop.f32.mrb[0].mxu0
        %v3500 = vpop.f32.mrb[0].mxu0
        %v3501 = vadd.f32 0.0, %v3500
        %v3502 = vpop.f32.mrb[0].mxu0
        %3503 = vmatprep.mubr.bf16.mxu0 %v2758
        %3504 = vmatmul.mubr.bf16.gmra.mrb[0].mxu0 %v2757
        %v3505 = vpop.f32.mrb[0].mxu0
        %v3506 = vadd.f32 0.0, %v3505
        %v3507 = vpop.f32.mrb[0].mxu0
        %v3508 = vpop.f32.mrb[0].mxu0
        %v3509 = vadd.f32 0.0, %v3508
        %v3510 = vpop.f32.mrb[0].mxu0
        %3511 = vmatprep.mubr.bf16.mxu0 %v2767
        %3512 = vmatmul.mubr.bf16.gmra.mrb[0].mxu0 %v2766
        %v3513 = vpop.f32.mrb[0].mxu0
        %v3514 = vadd.f32 0.0, %v3513
        %v3515 = vpop.f32.mrb[0].mxu0
        %v3516 = vpop.f32.mrb[0].mxu0
        %v3517 = vadd.f32 0.0, %v3516
        %v3518 = vpop.f32.mrb[0].mxu0
        %3519 = vmatprep.mubr.bf16.mxu0 %v2776
        %3520 = vmatmul.mubr.bf16.gmra.mrb[0].mxu0 %v2775
        %v3521 = vpop.f32.mrb[0].mxu0
        %v3522 = vadd.f32 0.0, %v3521
        %v3523 = vpop.f32.mrb[0].mxu0
        %v3524 = vpop.f32.mrb[0].mxu0
        %v3525 = vadd.f32 0.0, %v3524
        %v3526 = vpop.f32.mrb[0].mxu0
        %3527 = vmatprep.mubr.bf16.mxu0 %v2785
        %3528 = vmatmul.mubr.bf16.gmra.mrb[0].mxu0 %v2784
        %v3529 = vpop.f32.mrb[0].mxu0
        %v3530 = vadd.f32 0.0, %v3529
        %v3531 = vpop.f32.mrb[0].mxu0
        %v3532 = vpop.f32.mrb[0].mxu0
        %v3533 = vadd.f32 0.0, %v3532
        %v3534 = vpop.f32.mrb[0].mxu0
        %3535 = vmatprep.mubr.bf16.mxu0 %v2794
        %3536 = vmatmul.mubr.bf16.gmra.mrb[0].mxu0 %v2793
        %v3537 = vpop.f32.mrb[0].mxu0
        %v3538 = vadd.f32 0.0, %v3537
        %v3539 = vpop.f32.mrb[0].mxu0
        %v3540 = vpop.f32.mrb[0].mxu0
        %v3541 = vadd.f32 0.0, %v3540
        %v3542 = vpop.f32.mrb[0].mxu0
        %3543 = vmatprep.mubr.bf16.mxu0 %v2803
        %3544 = vmatmul.mubr.bf16.gmra.mrb[0].mxu0 %v2802
        %v3545 = vpop.f32.mrb[0].mxu0
        %v3546 = vadd.f32 0.0, %v3545
        %v3547 = vpop.f32.mrb[0].mxu0
        %v3548 = vpop.f32.mrb[0].mxu0
        %v3549 = vadd.f32 0.0, %v3548
        %v3550 = vpop.f32.mrb[0].mxu0
        %3551 = vmatprep.mubr.bf16.mxu0 %v2812
        %3552 = vmatmul.mubr.bf16.gmra.mrb[0].mxu0 %v2811
        %v3553 = vpop.f32.mrb[0].mxu0
        %v3554 = vadd.f32 0.0, %v3553
        %v3555 = vpop.f32.mrb[0].mxu0
        %v3556 = vpop.f32.mrb[0].mxu0
        %v3557 = vadd.f32 0.0, %v3556
        %v3558 = vpop.f32.mrb[0].mxu0
        %3559 = vmatprep.mubr.bf16.mxu0 %v2821
        %3560 = vmatmul.mubr.bf16.gmra.mrb[0].mxu0 %v2820
        %v3561 = vpop.f32.mrb[0].mxu0
        %v3562 = vadd.f32 0.0, %v3561
        %v3563 = vpop.f32.mrb[0].mxu0
        %v3564 = vpop.f32.mrb[0].mxu0
        %v3565 = vadd.f32 0.0, %v3564
        %v3566 = vpop.f32.mrb[0].mxu0
        %3567 = vmatprep.mubr.bf16.mxu0 %v2830
        %3568 = vmatmul.mubr.bf16.gmra.mrb[0].mxu0 %v2829
        %v3569 = vpop.f32.mrb[0].mxu0
        %v3570 = vadd.f32 0.0, %v3569
        %v3571 = vpop.f32.mrb[0].mxu0
        %v3572 = vpop.f32.mrb[0].mxu0
        %v3573 = vadd.f32 0.0, %v3572
        %v3574 = vpop.f32.mrb[0].mxu0
        %3575 = vmatprep.mubr.bf16.mxu0 %v2839
        %3576 = vmatmul.mubr.bf16.gmra.mrb[0].mxu0 %v2838
        %v3577 = vpop.f32.mrb[0].mxu0
        %v3578 = vadd.f32 0.0, %v3577
        %v3579 = vpop.f32.mrb[0].mxu0
        %v3580 = vpop.f32.mrb[0].mxu0
        %v3581 = vadd.f32 0.0, %v3580
        %v3582 = vpop.f32.mrb[0].mxu0
        %3583 = vdwg.mxu0
        %3584 = vmatprep.subr.bf16.mxu0 0
        %3585 = vmatpush1.bf16.msra.mxu0 %v3295
        %3586 = vmatprep.subr.bf16.mxu0 0
        %3587 = vmatpush1.bf16.msra.mxu0 %v3296
        %3588 = vmatprep.subr.bf16.mxu0 0
        %3589 = vmatpush1.bf16.msra.mxu0 %v3297
        %3590 = vmatprep.subr.bf16.mxu0 0
        %3591 = vmatpush1.bf16.msra.mxu0 %v3298
        %3592 = vmatprep.subr.bf16.mxu0 0
        %3593 = vmatpush1.bf16.msra.mxu0 %v3299
        %3594 = vmatprep.subr.bf16.mxu0 0
        %3595 = vmatpush1.bf16.msra.mxu0 %v3300
        %3596 = vmatprep.subr.bf16.mxu0 0
        %3597 = vmatpush1.bf16.msra.mxu0 %v3301
        %3598 = vmatprep.subr.bf16.mxu0 0
        %3599 = vmatpush1.bf16.msra.mxu0 %v3302
        %3600 = vmatprep.subr.bf16.mxu0 0
        %3601 = vmatpush1.bf16.msra.mxu0 %v3303
        %3602 = vmatprep.subr.bf16.mxu0 0
        %3603 = vmatpush1.bf16.msra.mxu0 %v3304
        %3604 = vmatprep.subr.bf16.mxu0 0
        %3605 = vmatpush1.bf16.msra.mxu0 %v3305
        %3606 = vmatprep.subr.bf16.mxu0 0
        %3607 = vmatpush1.bf16.msra.mxu0 %v3306
        %3608 = vmatprep.subr.bf16.mxu0 0
        %3609 = vmatpush1.bf16.msra.mxu0 %v3307
        %3610 = vmatprep.subr.bf16.mxu0 0
        %3611 = vmatpush1.bf16.msra.mxu0 %v3308
        %3612 = vmatprep.subr.bf16.mxu0 0
        %3613 = vmatpush1.bf16.msra.mxu0 %v3309
        %3614 = vmatprep.subr.bf16.mxu0 0
        %3615 = vmatpush1.bf16.msra.mxu0 %v3310
        %3616 = vmatprep.mubr.bf16.mxu0 %v2706
        %3617 = vmatmul.mubr.bf16.gmra.mrb[0].mxu0 %v2705
        %v3618 = vpop.f32.mrb[0].mxu0
        %v3619 = vadd.f32 %v3458, %v3618
        %v3620 = vpop.f32.mrb[0].mxu0
        %v3621 = vpop.f32.mrb[0].mxu0
        %v3622 = vadd.f32 %v3461, %v3621
        %v3623 = vpop.f32.mrb[0].mxu0
        %3624 = vmatprep.mubr.bf16.mxu0 %v2715
        %3625 = vmatmul.mubr.bf16.gmra.mrb[0].mxu0 %v2714
        %v3626 = vpop.f32.mrb[0].mxu0
        %v3627 = vadd.f32 %v3466, %v3626
        %v3628 = vpop.f32.mrb[0].mxu0
        %v3629 = vpop.f32.mrb[0].mxu0
        %v3630 = vadd.f32 %v3469, %v3629
        %v3631 = vpop.f32.mrb[0].mxu0
        %3632 = vmatprep.mubr.bf16.mxu0 %v2724
        %3633 = vmatmul.mubr.bf16.gmra.mrb[0].mxu0 %v2723
        %v3634 = vpop.f32.mrb[0].mxu0
        %v3635 = vadd.f32 %v3474, %v3634
        %v3636 = vpop.f32.mrb[0].mxu0
        %v3637 = vpop.f32.mrb[0].mxu0
        %v3638 = vadd.f32 %v3477, %v3637
        %v3639 = vpop.f32.mrb[0].mxu0
        %3640 = vmatprep.mubr.bf16.mxu0 %v2733
        %3641 = vmatmul.mubr.bf16.gmra.mrb[0].mxu0 %v2732
        %v3642 = vpop.f32.mrb[0].mxu0
        %v3643 = vadd.f32 %v3482, %v3642
        %v3644 = vpop.f32.mrb[0].mxu0
        %v3645 = vpop.f32.mrb[0].mxu0
        %v3646 = vadd.f32 %v3485, %v3645
        %v3647 = vpop.f32.mrb[0].mxu0
        %3648 = vmatprep.mubr.bf16.mxu0 %v2742
        %3649 = vmatmul.mubr.bf16.gmra.mrb[0].mxu0 %v2741
        %v3650 = vpop.f32.mrb[0].mxu0
        %v3651 = vadd.f32 %v3490, %v3650
        %v3652 = vpop.f32.mrb[0].mxu0
        %v3653 = vpop.f32.mrb[0].mxu0
        %v3654 = vadd.f32 %v3493, %v3653
        %v3655 = vpop.f32.mrb[0].mxu0
        %3656 = vmatprep.mubr.bf16.mxu0 %v2751
        %3657 = vmatmul.mubr.bf16.gmra.mrb[0].mxu0 %v2750
        %v3658 = vpop.f32.mrb[0].mxu0
        %v3659 = vadd.f32 %v3498, %v3658
        %v3660 = vpop.f32.mrb[0].mxu0
        %v3661 = vpop.f32.mrb[0].mxu0
        %v3662 = vadd.f32 %v3501, %v3661
        %v3663 = vpop.f32.mrb[0].mxu0
        %3664 = vmatprep.mubr.bf16.mxu0 %v2760
        %3665 = vmatmul.mubr.bf16.gmra.mrb[0].mxu0 %v2759
        %v3666 = vpop.f32.mrb[0].mxu0
        %v3667 = vadd.f32 %v3506, %v3666
        %v3668 = vpop.f32.mrb[0].mxu0
        %v3669 = vpop.f32.mrb[0].mxu0
        %v3670 = vadd.f32 %v3509, %v3669
        %v3671 = vpop.f32.mrb[0].mxu0
        %3672 = vmatprep.mubr.bf16.mxu0 %v2769
        %3673 = vmatmul.mubr.bf16.gmra.mrb[0].mxu0 %v2768
        %v3674 = vpop.f32.mrb[0].mxu0
        %v3675 = vadd.f32 %v3514, %v3674
        %v3676 = vpop.f32.mrb[0].mxu0
        %v3677 = vpop.f32.mrb[0].mxu0
        %v3678 = vadd.f32 %v3517, %v3677
        %v3679 = vpop.f32.mrb[0].mxu0
        %3680 = vmatprep.mubr.bf16.mxu0 %v2778
        %3681 = vmatmul.mubr.bf16.gmra.mrb[0].mxu0 %v2777
        %v3682 = vpop.f32.mrb[0].mxu0
        %v3683 = vadd.f32 %v3522, %v3682
        %v3684 = vpop.f32.mrb[0].mxu0
        %v3685 = vpop.f32.mrb[0].mxu0
        %v3686 = vadd.f32 %v3525, %v3685
        %v3687 = vpop.f32.mrb[0].mxu0
        %3688 = vmatprep.mubr.bf16.mxu0 %v2787
        %3689 = vmatmul.mubr.bf16.gmra.mrb[0].mxu0 %v2786
        %v3690 = vpop.f32.mrb[0].mxu0
        %v3691 = vadd.f32 %v3530, %v3690
        %v3692 = vpop.f32.mrb[0].mxu0
        %v3693 = vpop.f32.mrb[0].mxu0
        %v3694 = vadd.f32 %v3533, %v3693
        %v3695 = vpop.f32.mrb[0].mxu0
        %3696 = vmatprep.mubr.bf16.mxu0 %v2796
        %3697 = vmatmul.mubr.bf16.gmra.mrb[0].mxu0 %v2795
        %v3698 = vpop.f32.mrb[0].mxu0
        %v3699 = vadd.f32 %v3538, %v3698
        %v3700 = vpop.f32.mrb[0].mxu0
        %v3701 = vpop.f32.mrb[0].mxu0
        %v3702 = vadd.f32 %v3541, %v3701
        %v3703 = vpop.f32.mrb[0].mxu0
        %3704 = vmatprep.mubr.bf16.mxu0 %v2805
        %3705 = vmatmul.mubr.bf16.gmra.mrb[0].mxu0 %v2804
        %v3706 = vpop.f32.mrb[0].mxu0
        %v3707 = vadd.f32 %v3546, %v3706
        %v3708 = vpop.f32.mrb[0].mxu0
        %v3709 = vpop.f32.mrb[0].mxu0
        %v3710 = vadd.f32 %v3549, %v3709
        %v3711 = vpop.f32.mrb[0].mxu0
        %3712 = vmatprep.mubr.bf16.mxu0 %v2814
        %3713 = vmatmul.mubr.bf16.gmra.mrb[0].mxu0 %v2813
        %v3714 = vpop.f32.mrb[0].mxu0
        %v3715 = vadd.f32 %v3554, %v3714
        %v3716 = vpop.f32.mrb[0].mxu0
        %v3717 = vpop.f32.mrb[0].mxu0
        %v3718 = vadd.f32 %v3557, %v3717
        %v3719 = vpop.f32.mrb[0].mxu0
        %3720 = vmatprep.mubr.bf16.mxu0 %v2823
        %3721 = vmatmul.mubr.bf16.gmra.mrb[0].mxu0 %v2822
        %v3722 = vpop.f32.mrb[0].mxu0
        %v3723 = vadd.f32 %v3562, %v3722
        %v3724 = vpop.f32.mrb[0].mxu0
        %v3725 = vpop.f32.mrb[0].mxu0
        %v3726 = vadd.f32 %v3565, %v3725
        %v3727 = vpop.f32.mrb[0].mxu0
        %3728 = vmatprep.mubr.bf16.mxu0 %v2832
        %3729 = vmatmul.mubr.bf16.gmra.mrb[0].mxu0 %v2831
        %v3730 = vpop.f32.mrb[0].mxu0
        %v3731 = vadd.f32 %v3570, %v3730
        %v3732 = vpop.f32.mrb[0].mxu0
        %v3733 = vpop.f32.mrb[0].mxu0
        %v3734 = vadd.f32 %v3573, %v3733
        %v3735 = vpop.f32.mrb[0].mxu0
        %3736 = vmatprep.mubr.bf16.mxu0 %v2841
        %3737 = vmatmul.mubr.bf16.gmra.mrb[0].mxu0 %v2840
        %v3738 = vpop.f32.mrb[0].mxu0
        %v3739 = vadd.f32 %v3578, %v3738
        %v3740 = vpop.f32.mrb[0].mxu0
        %v3741 = vpop.f32.mrb[0].mxu0
        %v3742 = vadd.f32 %v3581, %v3741
        %v3743 = vpop.f32.mrb[0].mxu0
        %3744 = vdwg.mxu0
        %3745 = vmatprep.subr.bf16.mxu0 0
        %3746 = vmatpush1.bf16.msra.mxu0 %v3311
        %3747 = vmatprep.subr.bf16.mxu0 0
        %3748 = vmatpush1.bf16.msra.mxu0 %v3312
        %3749 = vmatprep.subr.bf16.mxu0 0
        %3750 = vmatpush1.bf16.msra.mxu0 %v3313
        %3751 = vmatprep.subr.bf16.mxu0 0
        %3752 = vmatpush1.bf16.msra.mxu0 %v3314
        %3753 = vmatprep.subr.bf16.mxu0 0
        %3754 = vmatpush1.bf16.msra.mxu0 %v3315
        %3755 = vmatprep.subr.bf16.mxu0 0
        %3756 = vmatpush1.bf16.msra.mxu0 %v3316
        %3757 = vmatprep.subr.bf16.mxu0 0
        %3758 = vmatpush1.bf16.msra.mxu0 %v3317
        %3759 = vmatprep.subr.bf16.mxu0 0
        %3760 = vmatpush1.bf16.msra.mxu0 %v3318
        %3761 = vmatprep.subr.bf16.mxu0 0
        %3762 = vmatpush1.bf16.msra.mxu0 %v3319
        %3763 = vmatprep.subr.bf16.mxu0 0
        %3764 = vmatpush1.bf16.msra.mxu0 %v3320
        %3765 = vmatprep.subr.bf16.mxu0 0
        %3766 = vmatpush1.bf16.msra.mxu0 %v3321
        %3767 = vmatprep.subr.bf16.mxu0 0
        %3768 = vmatpush1.bf16.msra.mxu0 %v3322
        %3769 = vmatprep.subr.bf16.mxu0 0
        %3770 = vmatpush1.bf16.msra.mxu0 %v3323
        %3771 = vmatprep.subr.bf16.mxu0 0
        %3772 = vmatpush1.bf16.msra.mxu0 %v3324
        %3773 = vmatprep.subr.bf16.mxu0 0
        %3774 = vmatpush1.bf16.msra.mxu0 %v3325
        %3775 = vmatprep.subr.bf16.mxu0 0
        %3776 = vmatpush1.bf16.msra.mxu0 %v3326
        %3777 = vmatprep.mubr.bf16.mxu0 %v2708
        %3778 = vmatmul.mubr.bf16.gmra.mrb[0].mxu0 %v2707
        %v3779 = vpop.f32.mrb[0].mxu0
        %v3780 = vadd.f32 %v3619, %v3779
        %v3781 = vpop.f32.mrb[0].mxu0
        %v3782 = vpop.f32.mrb[0].mxu0
        %v3783 = vadd.f32 %v3622, %v3782
        %v3784 = vpop.f32.mrb[0].mxu0
        %3785 = vmatprep.mubr.bf16.mxu0 %v2717
        %3786 = vmatmul.mubr.bf16.gmra.mrb[0].mxu0 %v2716
        %v3787 = vpop.f32.mrb[0].mxu0
        %v3788 = vadd.f32 %v3627, %v3787
        %v3789 = vpop.f32.mrb[0].mxu0
        %v3790 = vpop.f32.mrb[0].mxu0
        %v3791 = vadd.f32 %v3630, %v3790
        %v3792 = vpop.f32.mrb[0].mxu0
        %3793 = vmatprep.mubr.bf16.mxu0 %v2726
        %3794 = vmatmul.mubr.bf16.gmra.mrb[0].mxu0 %v2725
        %v3795 = vpop.f32.mrb[0].mxu0
        %v3796 = vadd.f32 %v3635, %v3795
        %v3797 = vpop.f32.mrb[0].mxu0
        %v3798 = vpop.f32.mrb[0].mxu0
        %v3799 = vadd.f32 %v3638, %v3798
        %v3800 = vpop.f32.mrb[0].mxu0
        %3801 = vmatprep.mubr.bf16.mxu0 %v2735
        %3802 = vmatmul.mubr.bf16.gmra.mrb[0].mxu0 %v2734
        %v3803 = vpop.f32.mrb[0].mxu0
        %v3804 = vadd.f32 %v3643, %v3803
        %v3805 = vpop.f32.mrb[0].mxu0
        %v3806 = vpop.f32.mrb[0].mxu0
        %v3807 = vadd.f32 %v3646, %v3806
        %v3808 = vpop.f32.mrb[0].mxu0
        %3809 = vmatprep.mubr.bf16.mxu0 %v2744
        %3810 = vmatmul.mubr.bf16.gmra.mrb[0].mxu0 %v2743
        %v3811 = vpop.f32.mrb[0].mxu0
        %v3812 = vadd.f32 %v3651, %v3811
        %v3813 = vpop.f32.mrb[0].mxu0
        %v3814 = vpop.f32.mrb[0].mxu0
        %v3815 = vadd.f32 %v3654, %v3814
        %v3816 = vpop.f32.mrb[0].mxu0
        %3817 = vmatprep.mubr.bf16.mxu0 %v2753
        %3818 = vmatmul.mubr.bf16.gmra.mrb[0].mxu0 %v2752
        %v3819 = vpop.f32.mrb[0].mxu0
        %v3820 = vadd.f32 %v3659, %v3819
        %v3821 = vpop.f32.mrb[0].mxu0
        %v3822 = vpop.f32.mrb[0].mxu0
        %v3823 = vadd.f32 %v3662, %v3822
        %v3824 = vpop.f32.mrb[0].mxu0
        %3825 = vmatprep.mubr.bf16.mxu0 %v2762
        %3826 = vmatmul.mubr.bf16.gmra.mrb[0].mxu0 %v2761
        %v3827 = vpop.f32.mrb[0].mxu0
        %v3828 = vadd.f32 %v3667, %v3827
        %v3829 = vpop.f32.mrb[0].mxu0
        %v3830 = vpop.f32.mrb[0].mxu0
        %v3831 = vadd.f32 %v3670, %v3830
        %v3832 = vpop.f32.mrb[0].mxu0
        %3833 = vmatprep.mubr.bf16.mxu0 %v2771
        %3834 = vmatmul.mubr.bf16.gmra.mrb[0].mxu0 %v2770
        %v3835 = vpop.f32.mrb[0].mxu0
        %v3836 = vadd.f32 %v3675, %v3835
        %v3837 = vpop.f32.mrb[0].mxu0
        %v3838 = vpop.f32.mrb[0].mxu0
        %v3839 = vadd.f32 %v3678, %v3838
        %v3840 = vpop.f32.mrb[0].mxu0
        %3841 = vmatprep.mubr.bf16.mxu0 %v2780
        %3842 = vmatmul.mubr.bf16.gmra.mrb[0].mxu0 %v2779
        %v3843 = vpop.f32.mrb[0].mxu0
        %v3844 = vadd.f32 %v3683, %v3843
        %v3845 = vpop.f32.mrb[0].mxu0
        %v3846 = vpop.f32.mrb[0].mxu0
        %v3847 = vadd.f32 %v3686, %v3846
        %v3848 = vpop.f32.mrb[0].mxu0
        %3849 = vmatprep.mubr.bf16.mxu0 %v2789
        %3850 = vmatmul.mubr.bf16.gmra.mrb[0].mxu0 %v2788
        %v3851 = vpop.f32.mrb[0].mxu0
        %v3852 = vadd.f32 %v3691, %v3851
        %v3853 = vpop.f32.mrb[0].mxu0
        %v3854 = vpop.f32.mrb[0].mxu0
        %v3855 = vadd.f32 %v3694, %v3854
        %v3856 = vpop.f32.mrb[0].mxu0
        %3857 = vmatprep.mubr.bf16.mxu0 %v2798
        %3858 = vmatmul.mubr.bf16.gmra.mrb[0].mxu0 %v2797
        %v3859 = vpop.f32.mrb[0].mxu0
        %v3860 = vadd.f32 %v3699, %v3859
        %v3861 = vpop.f32.mrb[0].mxu0
        %v3862 = vpop.f32.mrb[0].mxu0
        %v3863 = vadd.f32 %v3702, %v3862
        %v3864 = vpop.f32.mrb[0].mxu0
        %3865 = vmatprep.mubr.bf16.mxu0 %v2807
        %3866 = vmatmul.mubr.bf16.gmra.mrb[0].mxu0 %v2806
        %v3867 = vpop.f32.mrb[0].mxu0
        %v3868 = vadd.f32 %v3707, %v3867
        %v3869 = vpop.f32.mrb[0].mxu0
        %v3870 = vpop.f32.mrb[0].mxu0
        %v3871 = vadd.f32 %v3710, %v3870
        %v3872 = vpop.f32.mrb[0].mxu0
        %3873 = vmatprep.mubr.bf16.mxu0 %v2816
        %3874 = vmatmul.mubr.bf16.gmra.mrb[0].mxu0 %v2815
        %v3875 = vpop.f32.mrb[0].mxu0
        %v3876 = vadd.f32 %v3715, %v3875
        %v3877 = vpop.f32.mrb[0].mxu0
        %v3878 = vpop.f32.mrb[0].mxu0
        %v3879 = vadd.f32 %v3718, %v3878
        %v3880 = vpop.f32.mrb[0].mxu0
        %3881 = vmatprep.mubr.bf16.mxu0 %v2825
        %3882 = vmatmul.mubr.bf16.gmra.mrb[0].mxu0 %v2824
        %v3883 = vpop.f32.mrb[0].mxu0
        %v3884 = vadd.f32 %v3723, %v3883
        %v3885 = vpop.f32.mrb[0].mxu0
        %v3886 = vpop.f32.mrb[0].mxu0
        %v3887 = vadd.f32 %v3726, %v3886
        %v3888 = vpop.f32.mrb[0].mxu0
        %3889 = vmatprep.mubr.bf16.mxu0 %v2834
        %3890 = vmatmul.mubr.bf16.gmra.mrb[0].mxu0 %v2833
        %v3891 = vpop.f32.mrb[0].mxu0
        %v3892 = vadd.f32 %v3731, %v3891
        %v3893 = vpop.f32.mrb[0].mxu0
        %v3894 = vpop.f32.mrb[0].mxu0
        %v3895 = vadd.f32 %v3734, %v3894
        %v3896 = vpop.f32.mrb[0].mxu0
        %3897 = vmatprep.mubr.bf16.mxu0 %v2843
        %3898 = vmatmul.mubr.bf16.gmra.mrb[0].mxu0 %v2842
        %v3899 = vpop.f32.mrb[0].mxu0
        %v3900 = vadd.f32 %v3739, %v3899
        %v3901 = vpop.f32.mrb[0].mxu0
        %v3902 = vpop.f32.mrb[0].mxu0
        %v3903 = vadd.f32 %v3742, %v3902
        %v3904 = vpop.f32.mrb[0].mxu0
        %3905 = vdwg.mxu0
        %3906 = vmatprep.subr.bf16.mxu0 0
        %3907 = vmatpush1.bf16.msra.mxu0 %v3327
        %3908 = vmatprep.subr.bf16.mxu0 0
        %3909 = vmatpush1.bf16.msra.mxu0 %v3328
        %3910 = vmatprep.subr.bf16.mxu0 0
        %3911 = vmatpush1.bf16.msra.mxu0 %v3329
        %3912 = vmatprep.subr.bf16.mxu0 0
        %3913 = vmatpush1.bf16.msra.mxu0 %v3330
        %3914 = vmatprep.subr.bf16.mxu0 0
        %3915 = vmatpush1.bf16.msra.mxu0 %v3331
        %3916 = vmatprep.subr.bf16.mxu0 0
        %3917 = vmatpush1.bf16.msra.mxu0 %v3332
        %3918 = vmatprep.subr.bf16.mxu0 0
        %3919 = vmatpush1.bf16.msra.mxu0 %v3333
        %3920 = vmatprep.subr.bf16.mxu0 0
        %3921 = vmatpush1.bf16.msra.mxu0 %v3334
        %3922 = vmatprep.subr.bf16.mxu0 0
        %3923 = vmatpush1.bf16.msra.mxu0 %v3335
        %3924 = vmatprep.subr.bf16.mxu0 0
        %3925 = vmatpush1.bf16.msra.mxu0 %v3336
        %3926 = vmatprep.subr.bf16.mxu0 0
        %3927 = vmatpush1.bf16.msra.mxu0 %v3337
        %3928 = vmatprep.subr.bf16.mxu0 0
        %3929 = vmatpush1.bf16.msra.mxu0 %v3338
        %3930 = vmatprep.subr.bf16.mxu0 0
        %3931 = vmatpush1.bf16.msra.mxu0 %v3339
        %3932 = vmatprep.subr.bf16.mxu0 0
        %3933 = vmatpush1.bf16.msra.mxu0 %v3340
        %3934 = vmatprep.subr.bf16.mxu0 0
        %3935 = vmatpush1.bf16.msra.mxu0 %v3341
        %3936 = vmatprep.subr.bf16.mxu0 0
        %3937 = vmatpush1.bf16.msra.mxu0 %v3342
        %3938 = vmatprep.mubr.bf16.mxu0 %v2710
        %3939 = vmatmul.mubr.bf16.gmra.mrb[0].mxu0 %v2709
        %v3940 = vpop.f32.mrb[0].mxu0
        %v3941 = vadd.f32 %v3780, %v3940
        %v3942 = vpop.f32.mrb[0].mxu0
        %v3943 = vpop.f32.mrb[0].mxu0
        %v3944 = vadd.f32 %v3783, %v3943
        %v3945 = vpop.f32.mrb[0].mxu0
        %3946 = vmatprep.mubr.bf16.mxu0 %v2719
        %3947 = vmatmul.mubr.bf16.gmra.mrb[0].mxu0 %v2718
        %v3948 = vpop.f32.mrb[0].mxu0
        %v3949 = vadd.f32 %v3788, %v3948
        %v3950 = vpop.f32.mrb[0].mxu0
        %v3951 = vpop.f32.mrb[0].mxu0
        %v3952 = vadd.f32 %v3791, %v3951
        %v3953 = vpop.f32.mrb[0].mxu0
        %3954 = vmatprep.mubr.bf16.mxu0 %v2728
        %3955 = vmatmul.mubr.bf16.gmra.mrb[0].mxu0 %v2727
        %v3956 = vpop.f32.mrb[0].mxu0
        %v3957 = vadd.f32 %v3796, %v3956
        %v3958 = vpop.f32.mrb[0].mxu0
        %v3959 = vpop.f32.mrb[0].mxu0
        %v3960 = vadd.f32 %v3799, %v3959
        %v3961 = vpop.f32.mrb[0].mxu0
        %3962 = vmatprep.mubr.bf16.mxu0 %v2737
        %3963 = vmatmul.mubr.bf16.gmra.mrb[0].mxu0 %v2736
        %v3964 = vpop.f32.mrb[0].mxu0
        %v3965 = vadd.f32 %v3804, %v3964
        %v3966 = vpop.f32.mrb[0].mxu0
        %v3967 = vpop.f32.mrb[0].mxu0
        %v3968 = vadd.f32 %v3807, %v3967
        %v3969 = vpop.f32.mrb[0].mxu0
        %3970 = vmatprep.mubr.bf16.mxu0 %v2746
        %3971 = vmatmul.mubr.bf16.gmra.mrb[0].mxu0 %v2745
        %v3972 = vpop.f32.mrb[0].mxu0
        %v3973 = vadd.f32 %v3812, %v3972
        %v3974 = vpop.f32.mrb[0].mxu0
        %v3975 = vpop.f32.mrb[0].mxu0
        %v3976 = vadd.f32 %v3815, %v3975
        %v3977 = vpop.f32.mrb[0].mxu0
        %3978 = vmatprep.mubr.bf16.mxu0 %v2755
        %3979 = vmatmul.mubr.bf16.gmra.mrb[0].mxu0 %v2754
        %v3980 = vpop.f32.mrb[0].mxu0
        %v3981 = vadd.f32 %v3820, %v3980
        %v3982 = vpop.f32.mrb[0].mxu0
        %v3983 = vpop.f32.mrb[0].mxu0
        %v3984 = vadd.f32 %v3823, %v3983
        %v3985 = vpop.f32.mrb[0].mxu0
        %3986 = vmatprep.mubr.bf16.mxu0 %v2764
        %3987 = vmatmul.mubr.bf16.gmra.mrb[0].mxu0 %v2763
        %v3988 = vpop.f32.mrb[0].mxu0
        %v3989 = vadd.f32 %v3828, %v3988
        %v3990 = vpop.f32.mrb[0].mxu0
        %v3991 = vpop.f32.mrb[0].mxu0
        %v3992 = vadd.f32 %v3831, %v3991
        %v3993 = vpop.f32.mrb[0].mxu0
        %3994 = vmatprep.mubr.bf16.mxu0 %v2773
        %3995 = vmatmul.mubr.bf16.gmra.mrb[0].mxu0 %v2772
        %v3996 = vpop.f32.mrb[0].mxu0
        %v3997 = vadd.f32 %v3836, %v3996
        %v3998 = vpop.f32.mrb[0].mxu0
        %v3999 = vpop.f32.mrb[0].mxu0
        %v4000 = vadd.f32 %v3839, %v3999
        %v4001 = vpop.f32.mrb[0].mxu0
        %4002 = vmatprep.mubr.bf16.mxu0 %v2782
        %4003 = vmatmul.mubr.bf16.gmra.mrb[0].mxu0 %v2781
        %v4004 = vpop.f32.mrb[0].mxu0
        %v4005 = vadd.f32 %v3844, %v4004
        %v4006 = vpop.f32.mrb[0].mxu0
        %v4007 = vpop.f32.mrb[0].mxu0
        %v4008 = vadd.f32 %v3847, %v4007
        %v4009 = vpop.f32.mrb[0].mxu0
        %4010 = vmatprep.mubr.bf16.mxu0 %v2791
        %4011 = vmatmul.mubr.bf16.gmra.mrb[0].mxu0 %v2790
        %v4012 = vpop.f32.mrb[0].mxu0
        %v4013 = vadd.f32 %v3852, %v4012
        %v4014 = vpop.f32.mrb[0].mxu0
        %v4015 = vpop.f32.mrb[0].mxu0
        %v4016 = vadd.f32 %v3855, %v4015
        %v4017 = vpop.f32.mrb[0].mxu0
        %4018 = vmatprep.mubr.bf16.mxu0 %v2800
        %4019 = vmatmul.mubr.bf16.gmra.mrb[0].mxu0 %v2799
        %v4020 = vpop.f32.mrb[0].mxu0
        %v4021 = vadd.f32 %v3860, %v4020
        %v4022 = vpop.f32.mrb[0].mxu0
        %v4023 = vpop.f32.mrb[0].mxu0
        %v4024 = vadd.f32 %v3863, %v4023
        %v4025 = vpop.f32.mrb[0].mxu0
        %4026 = vmatprep.mubr.bf16.mxu0 %v2809
        %4027 = vmatmul.mubr.bf16.gmra.mrb[0].mxu0 %v2808
        %v4028 = vpop.f32.mrb[0].mxu0
        %v4029 = vadd.f32 %v3868, %v4028
        %v4030 = vpop.f32.mrb[0].mxu0
        %v4031 = vpop.f32.mrb[0].mxu0
        %v4032 = vadd.f32 %v3871, %v4031
        %v4033 = vpop.f32.mrb[0].mxu0
        %4034 = vmatprep.mubr.bf16.mxu0 %v2818
        %4035 = vmatmul.mubr.bf16.gmra.mrb[0].mxu0 %v2817
        %v4036 = vpop.f32.mrb[0].mxu0
        %v4037 = vadd.f32 %v3876, %v4036
        %v4038 = vpop.f32.mrb[0].mxu0
        %v4039 = vpop.f32.mrb[0].mxu0
        %v4040 = vadd.f32 %v3879, %v4039
        %v4041 = vpop.f32.mrb[0].mxu0
        %4042 = vmatprep.mubr.bf16.mxu0 %v2827
        %4043 = vmatmul.mubr.bf16.gmra.mrb[0].mxu0 %v2826
        %v4044 = vpop.f32.mrb[0].mxu0
        %v4045 = vadd.f32 %v3884, %v4044
        %v4046 = vpop.f32.mrb[0].mxu0
        %v4047 = vpop.f32.mrb[0].mxu0
        %v4048 = vadd.f32 %v3887, %v4047
        %v4049 = vpop.f32.mrb[0].mxu0
        %4050 = vmatprep.mubr.bf16.mxu0 %v2836
        %4051 = vmatmul.mubr.bf16.gmra.mrb[0].mxu0 %v2835
        %v4052 = vpop.f32.mrb[0].mxu0
        %v4053 = vadd.f32 %v3892, %v4052
        %v4054 = vpop.f32.mrb[0].mxu0
        %v4055 = vpop.f32.mrb[0].mxu0
        %v4056 = vadd.f32 %v3895, %v4055
        %v4057 = vpop.f32.mrb[0].mxu0
        %4058 = vmatprep.mubr.bf16.mxu0 %v2845
        %4059 = vmatmul.mubr.bf16.gmra.mrb[0].mxu0 %v2844
        %v4060 = vpop.f32.mrb[0].mxu0
        %v4061 = vadd.f32 %v3900, %v4060
        %v4062 = vpop.f32.mrb[0].mxu0
        %v4063 = vpop.f32.mrb[0].mxu0
        %v4064 = vadd.f32 %v3903, %v4063
        %v4065 = vpop.f32.mrb[0].mxu0
        %4066 = vdwg.mxu0
        %4067 = vmatprep.subr.bf16.mxu0 0
        %4068 = vmatpush1.bf16.msra.mxu0 %v3343
        %4069 = vmatprep.subr.bf16.mxu0 0
        %4070 = vmatpush1.bf16.msra.mxu0 %v3344
        %4071 = vmatprep.subr.bf16.mxu0 0
        %4072 = vmatpush1.bf16.msra.mxu0 %v3345
        %4073 = vmatprep.subr.bf16.mxu0 0
        %4074 = vmatpush1.bf16.msra.mxu0 %v3346
        %4075 = vmatprep.subr.bf16.mxu0 0
        %4076 = vmatpush1.bf16.msra.mxu0 %v3347
        %4077 = vmatprep.subr.bf16.mxu0 0
        %4078 = vmatpush1.bf16.msra.mxu0 %v3348
        %4079 = vmatprep.subr.bf16.mxu0 0
        %4080 = vmatpush1.bf16.msra.mxu0 %v3349
        %4081 = vmatprep.subr.bf16.mxu0 0
        %4082 = vmatpush1.bf16.msra.mxu0 %v3350
        %4083 = vmatprep.subr.bf16.mxu0 0
        %4084 = vmatpush1.bf16.msra.mxu0 0
        %4085 = vmatprep.subr.bf16.mxu0 0
        %4086 = vmatpush1.bf16.msra.mxu0 0
        %4087 = vmatprep.subr.bf16.mxu0 0
        %4088 = vmatpush1.bf16.msra.mxu0 0
        %4089 = vmatprep.subr.bf16.mxu0 0
        %4090 = vmatpush1.bf16.msra.mxu0 0
        %4091 = vmatprep.subr.bf16.mxu0 0
        %4092 = vmatpush1.bf16.msra.mxu0 0
        %4093 = vmatprep.subr.bf16.mxu0 0
        %4094 = vmatpush1.bf16.msra.mxu0 0
        %4095 = vmatprep.subr.bf16.mxu0 0
        %4096 = vmatpush1.bf16.msra.mxu0 0
        %4097 = vmatprep.subr.bf16.mxu0 0
        %4098 = vmatpush1.bf16.msra.mxu0 0
        %4099 = vmatprep.mubr.bf16.mxu0 0
        %4100 = vmatmul.mubr.bf16.gmra.mrb[0].mxu0 %v2711
        %v4101 = vpop.f32.mrb[0].mxu0
        %v4102 = vadd.f32 %v3941, %v4101
        %v4103 = vpop.f32.mrb[0].mxu0
        %v4104 = vpop.f32.mrb[0].mxu0
        %v4105 = vadd.f32 %v3944, %v4104
        %v4106 = vpop.f32.mrb[0].mxu0
        %4107 = vmatprep.mubr.bf16.mxu0 0
        %4108 = vmatmul.mubr.bf16.gmra.mrb[0].mxu0 %v2720
        %v4109 = vpop.f32.mrb[0].mxu0
        %v4110 = vadd.f32 %v3949, %v4109
        %v4111 = vpop.f32.mrb[0].mxu0
        %v4112 = vpop.f32.mrb[0].mxu0
        %v4113 = vadd.f32 %v3952, %v4112
        %v4114 = vpop.f32.mrb[0].mxu0
        %4115 = vmatprep.mubr.bf16.mxu0 0
        %4116 = vmatmul.mubr.bf16.gmra.mrb[0].mxu0 %v2729
        %v4117 = vpop.f32.mrb[0].mxu0
        %v4118 = vadd.f32 %v3957, %v4117
        %v4119 = vpop.f32.mrb[0].mxu0
        %v4120 = vpop.f32.mrb[0].mxu0
        %v4121 = vadd.f32 %v3960, %v4120
        %v4122 = vpop.f32.mrb[0].mxu0
        %4123 = vmatprep.mubr.bf16.mxu0 0
        %4124 = vmatmul.mubr.bf16.gmra.mrb[0].mxu0 %v2738
        %v4125 = vpop.f32.mrb[0].mxu0
        %v4126 = vadd.f32 %v3965, %v4125
        %v4127 = vpop.f32.mrb[0].mxu0
        %v4128 = vpop.f32.mrb[0].mxu0
        %v4129 = vadd.f32 %v3968, %v4128
        %v4130 = vpop.f32.mrb[0].mxu0
        %4131 = vmatprep.mubr.bf16.mxu0 0
        %4132 = vmatmul.mubr.bf16.gmra.mrb[0].mxu0 %v2747
        %v4133 = vpop.f32.mrb[0].mxu0
        %v4134 = vadd.f32 %v3973, %v4133
        %v4135 = vpop.f32.mrb[0].mxu0
        %v4136 = vpop.f32.mrb[0].mxu0
        %v4137 = vadd.f32 %v3976, %v4136
        %v4138 = vpop.f32.mrb[0].mxu0
        %4139 = vmatprep.mubr.bf16.mxu0 0
        %4140 = vmatmul.mubr.bf16.gmra.mrb[0].mxu0 %v2756
        %v4141 = vpop.f32.mrb[0].mxu0
        %v4142 = vadd.f32 %v3981, %v4141
        %v4143 = vpop.f32.mrb[0].mxu0
        %v4144 = vpop.f32.mrb[0].mxu0
        %v4145 = vadd.f32 %v3984, %v4144
        %v4146 = vpop.f32.mrb[0].mxu0
        %4147 = vmatprep.mubr.bf16.mxu0 0
        %4148 = vmatmul.mubr.bf16.gmra.mrb[0].mxu0 %v2765
        %v4149 = vpop.f32.mrb[0].mxu0
        %v4150 = vadd.f32 %v3989, %v4149
        %v4151 = vpop.f32.mrb[0].mxu0
        %v4152 = vpop.f32.mrb[0].mxu0
        %v4153 = vadd.f32 %v3992, %v4152
        %v4154 = vpop.f32.mrb[0].mxu0
        %4155 = vmatprep.mubr.bf16.mxu0 0
        %4156 = vmatmul.mubr.bf16.gmra.mrb[0].mxu0 %v2774
        %v4157 = vpop.f32.mrb[0].mxu0
        %v4158 = vadd.f32 %v3997, %v4157
        %v4159 = vpop.f32.mrb[0].mxu0
        %v4160 = vpop.f32.mrb[0].mxu0
        %v4161 = vadd.f32 %v4000, %v4160
        %v4162 = vpop.f32.mrb[0].mxu0
        %4163 = vmatprep.mubr.bf16.mxu0 0
        %4164 = vmatmul.mubr.bf16.gmra.mrb[0].mxu0 %v2783
        %v4165 = vpop.f32.mrb[0].mxu0
        %v4166 = vadd.f32 %v4005, %v4165
        %v4167 = vpop.f32.mrb[0].mxu0
        %v4168 = vpop.f32.mrb[0].mxu0
        %v4169 = vadd.f32 %v4008, %v4168
        %v4170 = vpop.f32.mrb[0].mxu0
        %4171 = vmatprep.mubr.bf16.mxu0 0
        %4172 = vmatmul.mubr.bf16.gmra.mrb[0].mxu0 %v2792
        %v4173 = vpop.f32.mrb[0].mxu0
        %v4174 = vadd.f32 %v4013, %v4173
        %v4175 = vpop.f32.mrb[0].mxu0
        %v4176 = vpop.f32.mrb[0].mxu0
        %v4177 = vadd.f32 %v4016, %v4176
        %v4178 = vpop.f32.mrb[0].mxu0
        %4179 = vmatprep.mubr.bf16.mxu0 0
        %4180 = vmatmul.mubr.bf16.gmra.mrb[0].mxu0 %v2801
        %v4181 = vpop.f32.mrb[0].mxu0
        %v4182 = vadd.f32 %v4021, %v4181
        %v4183 = vpop.f32.mrb[0].mxu0
        %v4184 = vpop.f32.mrb[0].mxu0
        %v4185 = vadd.f32 %v4024, %v4184
        %v4186 = vpop.f32.mrb[0].mxu0
        %4187 = vmatprep.mubr.bf16.mxu0 0
        %4188 = vmatmul.mubr.bf16.gmra.mrb[0].mxu0 %v2810
        %v4189 = vpop.f32.mrb[0].mxu0
        %v4190 = vadd.f32 %v4029, %v4189
        %v4191 = vpop.f32.mrb[0].mxu0
        %v4192 = vpop.f32.mrb[0].mxu0
        %v4193 = vadd.f32 %v4032, %v4192
        %v4194 = vpop.f32.mrb[0].mxu0
        %4195 = vmatprep.mubr.bf16.mxu0 0
        %4196 = vmatmul.mubr.bf16.gmra.mrb[0].mxu0 %v2819
        %v4197 = vpop.f32.mrb[0].mxu0
        %v4198 = vadd.f32 %v4037, %v4197
        %v4199 = vpop.f32.mrb[0].mxu0
        %v4200 = vpop.f32.mrb[0].mxu0
        %v4201 = vadd.f32 %v4040, %v4200
        %v4202 = vpop.f32.mrb[0].mxu0
        %4203 = vmatprep.mubr.bf16.mxu0 0
        %4204 = vmatmul.mubr.bf16.gmra.mrb[0].mxu0 %v2828
        %v4205 = vpop.f32.mrb[0].mxu0
        %v4206 = vadd.f32 %v4045, %v4205
        %v4207 = vpop.f32.mrb[0].mxu0
        %v4208 = vpop.f32.mrb[0].mxu0
        %v4209 = vadd.f32 %v4048, %v4208
        %v4210 = vpop.f32.mrb[0].mxu0
        %4211 = vmatprep.mubr.bf16.mxu0 0
        %4212 = vmatmul.mubr.bf16.gmra.mrb[0].mxu0 %v2837
        %v4213 = vpop.f32.mrb[0].mxu0
        %v4214 = vadd.f32 %v4053, %v4213
        %v4215 = vpop.f32.mrb[0].mxu0
        %v4216 = vpop.f32.mrb[0].mxu0
        %v4217 = vadd.f32 %v4056, %v4216
        %v4218 = vpop.f32.mrb[0].mxu0
        %4219 = vmatprep.mubr.bf16.mxu0 0
        %4220 = vmatmul.mubr.bf16.gmra.mrb[0].mxu0 %v2846
        %v4221 = vpop.f32.mrb[0].mxu0
        %v4222 = vadd.f32 %v4061, %v4221
        %v4223 = vpop.f32.mrb[0].mxu0
        %v4224 = vpop.f32.mrb[0].mxu0
        %v4225 = vadd.f32 %v4064, %v4224
        %v4226 = vpop.f32.mrb[0].mxu0
        %4227 = vdwg.mxu0
        %v4228 = vld [vmem:[%s2] sm:$0x1]
        %v4230 = vlaneseq
        %v4231 = vshrl.u32 %v4230, 7
        %v4232 = vsub.s32 0, %v4231
        %v4233 = vrot.slane %v4228, %v4232
        %v4235 = vmul.f32 %v4102, %v4233
        %v4236 = vmul.f32 %v4105, %v4233
        %v4237 = vmul.f32 %v4110, %v4233
        %v4238 = vmul.f32 %v4113, %v4233
        %v4239 = vmul.f32 %v4118, %v4233
        %v4240 = vmul.f32 %v4121, %v4233
        %v4241 = vmul.f32 %v4126, %v4233
        %v4242 = vmul.f32 %v4129, %v4233
        %v4243 = vmul.f32 %v4134, %v4233
        %v4244 = vmul.f32 %v4137, %v4233
        %v4245 = vmul.f32 %v4142, %v4233
        %v4246 = vmul.f32 %v4145, %v4233
        %v4247 = vmul.f32 %v4150, %v4233
        %v4248 = vmul.f32 %v4153, %v4233
        %v4249 = vmul.f32 %v4158, %v4233
        %v4250 = vmul.f32 %v4161, %v4233
        %v4251 = vmul.f32 %v4166, %v4233
        %v4252 = vmul.f32 %v4169, %v4233
        %v4253 = vmul.f32 %v4174, %v4233
        %v4254 = vmul.f32 %v4177, %v4233
        %v4255 = vmul.f32 %v4182, %v4233
        %v4256 = vmul.f32 %v4185, %v4233
        %v4257 = vmul.f32 %v4190, %v4233
        %v4258 = vmul.f32 %v4193, %v4233
        %v4259 = vmul.f32 %v4198, %v4233
        %v4260 = vmul.f32 %v4201, %v4233
        %v4261 = vmul.f32 %v4206, %v4233
        %v4262 = vmul.f32 %v4209, %v4233
        %v4263 = vmul.f32 %v4214, %v4233
        %v4264 = vmul.f32 %v4217, %v4233
        %v4265 = vmul.f32 %v4222, %v4233
        %v4266 = vmul.f32 %v4225, %v4233
        %v4267 = vld [vmem:[%s3] sm:$0x1]
        %v4269 = vlaneseq
        %v4270 = vshrl.u32 %v4269, 7
        %v4271 = vsub.s32 0, %v4270
        %v4272 = vrot.slane %v4267, %v4271
        %v4274 = vadd.f32 %v4235, %v4272
        %v4275 = vadd.f32 %v4236, %v4272
        %v4276 = vadd.f32 %v4237, %v4272
        %v4277 = vadd.f32 %v4238, %v4272
        %v4278 = vadd.f32 %v4239, %v4272
        %v4279 = vadd.f32 %v4240, %v4272
        %v4280 = vadd.f32 %v4241, %v4272
        %v4281 = vadd.f32 %v4242, %v4272
        %v4282 = vadd.f32 %v4243, %v4272
        %v4283 = vadd.f32 %v4244, %v4272
        %v4284 = vadd.f32 %v4245, %v4272
        %v4285 = vadd.f32 %v4246, %v4272
        %v4286 = vadd.f32 %v4247, %v4272
        %v4287 = vadd.f32 %v4248, %v4272
        %v4288 = vadd.f32 %v4249, %v4272
        %v4289 = vadd.f32 %v4250, %v4272
        %v4290 = vadd.f32 %v4251, %v4272
        %v4291 = vadd.f32 %v4252, %v4272
        %v4292 = vadd.f32 %v4253, %v4272
        %v4293 = vadd.f32 %v4254, %v4272
        %v4294 = vadd.f32 %v4255, %v4272
        %v4295 = vadd.f32 %v4256, %v4272
        %v4296 = vadd.f32 %v4257, %v4272
        %v4297 = vadd.f32 %v4258, %v4272
        %v4298 = vadd.f32 %v4259, %v4272
        %v4299 = vadd.f32 %v4260, %v4272
        %v4300 = vadd.f32 %v4261, %v4272
        %v4301 = vadd.f32 %v4262, %v4272
        %v4302 = vadd.f32 %v4263, %v4272
        %v4303 = vadd.f32 %v4264, %v4272
        %v4304 = vadd.f32 %v4265, %v4272
        %v4305 = vadd.f32 %v4266, %v4272
        %v4306 = vmax.f32 %v4274, 0.0
        %v4307 = vmax.f32 %v4275, 0.0
        %v4308 = vmax.f32 %v4276, 0.0
        %v4309 = vmax.f32 %v4277, 0.0
        %v4310 = vmax.f32 %v4278, 0.0
        %v4311 = vmax.f32 %v4279, 0.0
        %v4312 = vmax.f32 %v4280, 0.0
        %v4313 = vmax.f32 %v4281, 0.0
        %v4314 = vmax.f32 %v4282, 0.0
        %v4315 = vmax.f32 %v4283, 0.0
        %v4316 = vmax.f32 %v4284, 0.0
        %v4317 = vmax.f32 %v4285, 0.0
        %v4318 = vmax.f32 %v4286, 0.0
        %v4319 = vmax.f32 %v4287, 0.0
        %v4320 = vmax.f32 %v4288, 0.0
        %v4321 = vmax.f32 %v4289, 0.0
        %v4322 = vmax.f32 %v4290, 0.0
        %v4323 = vmax.f32 %v4291, 0.0
        %v4324 = vmax.f32 %v4292, 0.0
        %v4325 = vmax.f32 %v4293, 0.0
        %v4326 = vmax.f32 %v4294, 0.0
        %v4327 = vmax.f32 %v4295, 0.0
        %v4328 = vmax.f32 %v4296, 0.0
        %v4329 = vmax.f32 %v4297, 0.0
        %v4330 = vmax.f32 %v4298, 0.0
        %v4331 = vmax.f32 %v4299, 0.0
        %v4332 = vmax.f32 %v4300, 0.0
        %v4333 = vmax.f32 %v4301, 0.0
        %v4334 = vmax.f32 %v4302, 0.0
        %v4335 = vmax.f32 %v4303, 0.0
        %v4336 = vmax.f32 %v4304, 0.0
        %v4337 = vmax.f32 %v4305, 0.0
        %v4338 = vpack.c.bf16 %v4307, %v4306
        %v4339 = vpack.c.bf16 %v4309, %v4308
        %v4340 = vpack.c.bf16 %v4311, %v4310
        %v4341 = vpack.c.bf16 %v4313, %v4312
        %v4342 = vpack.c.bf16 %v4315, %v4314
        %v4343 = vpack.c.bf16 %v4317, %v4316
        %v4344 = vpack.c.bf16 %v4319, %v4318
        %v4345 = vpack.c.bf16 %v4321, %v4320
        %v4346 = vpack.c.bf16 %v4323, %v4322
        %v4347 = vpack.c.bf16 %v4325, %v4324
        %v4348 = vpack.c.bf16 %v4327, %v4326
        %v4349 = vpack.c.bf16 %v4329, %v4328
        %v4350 = vpack.c.bf16 %v4331, %v4330
        %v4351 = vpack.c.bf16 %v4333, %v4332
        %v4352 = vpack.c.bf16 %v4335, %v4334
        %v4353 = vpack.c.bf16 %v4337, %v4336
        %v4370 = vunpack.c.l.b16 %v4338
        %v4371 = vunpack.c.h.b16 %v4338
        %v4372 = vunpack.c.l.b16 %v4339
        %v4373 = vunpack.c.h.b16 %v4339
        %v4374 = vunpack.c.l.b16 %v4340
        %v4375 = vunpack.c.h.b16 %v4340
        %v4376 = vunpack.c.l.b16 %v4341
        %v4377 = vunpack.c.h.b16 %v4341
        %v4378 = vunpack.c.l.b16 %v4342
        %v4379 = vunpack.c.h.b16 %v4342
        %v4380 = vunpack.c.l.b16 %v4343
        %v4381 = vunpack.c.h.b16 %v4343
        %v4382 = vunpack.c.l.b16 %v4344
        %v4383 = vunpack.c.h.b16 %v4344
        %v4384 = vunpack.c.l.b16 %v4345
        %v4385 = vunpack.c.h.b16 %v4345
        %v4386 = vunpack.c.l.b16 %v4346
        %v4387 = vunpack.c.h.b16 %v4346
        %v4388 = vunpack.c.l.b16 %v4347
        %v4389 = vunpack.c.h.b16 %v4347
        %v4390 = vunpack.c.l.b16 %v4348
        %v4391 = vunpack.c.h.b16 %v4348
        %v4392 = vunpack.c.l.b16 %v4349
        %v4393 = vunpack.c.h.b16 %v4349
        %v4394 = vunpack.c.l.b16 %v4350
        %v4395 = vunpack.c.h.b16 %v4350
        %v4396 = vunpack.c.l.b16 %v4351
        %v4397 = vunpack.c.h.b16 %v4351
        %v4398 = vunpack.c.l.b16 %v4352
        %v4399 = vunpack.c.h.b16 %v4352
        %v4400 = vunpack.c.l.b16 %v4353
        %v4401 = vunpack.c.h.b16 %v4353
        %v4402 = vpack.c.b16 %v4370, %v4370
        %v4403 = vpack.c.b16 %v4371, %v4371
        %v4404 = vpack.c.b16 %v4372, %v4372
        %v4405 = vpack.c.b16 %v4373, %v4373
        %v4406 = vpack.c.b16 %v4374, %v4374
        %v4407 = vpack.c.b16 %v4375, %v4375
        %v4408 = vpack.c.b16 %v4376, %v4376
        %v4409 = vpack.c.b16 %v4377, %v4377
        %v4410 = vpack.c.b16 %v4378, %v4378
        %v4411 = vpack.c.b16 %v4379, %v4379
        %v4412 = vpack.c.b16 %v4380, %v4380
        %v4413 = vpack.c.b16 %v4381, %v4381
        %v4414 = vpack.c.b16 %v4382, %v4382
        %v4415 = vpack.c.b16 %v4383, %v4383
        %v4416 = vpack.c.b16 %v4384, %v4384
        %v4417 = vpack.c.b16 %v4385, %v4385
        %v4418 = vpack.c.b16 %v4386, %v4386
        %v4419 = vpack.c.b16 %v4387, %v4387
        %v4420 = vpack.c.b16 %v4388, %v4388
        %v4421 = vpack.c.b16 %v4389, %v4389
        %v4422 = vpack.c.b16 %v4390, %v4390
        %v4423 = vpack.c.b16 %v4391, %v4391
        %v4424 = vpack.c.b16 %v4392, %v4392
        %v4425 = vpack.c.b16 %v4393, %v4393
        %v4426 = vpack.c.b16 %v4394, %v4394
        %v4427 = vpack.c.b16 %v4395, %v4395
        %v4428 = vpack.c.b16 %v4396, %v4396
        %v4429 = vpack.c.b16 %v4397, %v4397
        %v4430 = vpack.c.b16 %v4398, %v4398
        %v4431 = vpack.c.b16 %v4399, %v4399
        %v4432 = vpack.c.b16 %v4400, %v4400
        %v4433 = vpack.c.b16 %v4401, %v4401
        %4466 = vst [vmem:[%s230] sm:$0xf] %v4402
        %4467 = vst [vmem:[%s230 + $0x4] sm:$0xf] %v4403
        %4468 = vst [vmem:[%s230 + $0x8] sm:$0xf] %v4404
        %4469 = vst [vmem:[%s230 + $0xc] sm:$0xf] %v4405
        %4470 = vst [vmem:[%s230 + $0x10] sm:$0xf] %v4406
        %4471 = vst [vmem:[%s230 + $0x14] sm:$0xf] %v4407
        %4472 = vst [vmem:[%s230 + $0x18] sm:$0xf] %v4408
        %4473 = vst [vmem:[%s230 + $0x1c] sm:$0xf] %v4409
        %4474 = vst [vmem:[%s230 + $0x20] sm:$0xf] %v4410
        %4475 = vst [vmem:[%s230 + $0x24] sm:$0xf] %v4411
        %4476 = vst [vmem:[%s230 + $0x28] sm:$0xf] %v4412
        %4477 = vst [vmem:[%s230 + $0x2c] sm:$0xf] %v4413
        %4478 = vst [vmem:[%s230 + $0x30] sm:$0xf] %v4414
        %4479 = vst [vmem:[%s230 + $0x34] sm:$0xf] %v4415
        %4480 = vst [vmem:[%s230 + $0x38] sm:$0xf] %v4416
        %4481 = vst [vmem:[%s230 + $0x3c] sm:$0xf] %v4417
        %4482 = vst [vmem:[%s230 + $0x40] sm:$0xf] %v4418
        %4483 = vst [vmem:[%s230 + $0x44] sm:$0xf] %v4419
        %4484 = vst [vmem:[%s230 + $0x48] sm:$0xf] %v4420
        %4485 = vst [vmem:[%s230 + $0x4c] sm:$0xf] %v4421
        %4486 = vst [vmem:[%s230 + $0x50] sm:$0xf] %v4422
        %4487 = vst [vmem:[%s230 + $0x54] sm:$0xf] %v4423
        %4488 = vst [vmem:[%s230 + $0x58] sm:$0xf] %v4424
        %4489 = vst [vmem:[%s230 + $0x5c] sm:$0xf] %v4425
        %4490 = vst [vmem:[%s230 + $0x60] sm:$0xf] %v4426
        %4491 = vst [vmem:[%s230 + $0x64] sm:$0xf] %v4427
        %4492 = vst [vmem:[%s230 + $0x68] sm:$0xf] %v4428
        %4493 = vst [vmem:[%s230 + $0x6c] sm:$0xf] %v4429
        %4494 = vst [vmem:[%s230 + $0x70] sm:$0xf] %v4430
        %4495 = vst [vmem:[%s230 + $0x74] sm:$0xf] %v4431
        %4496 = vst [vmem:[%s230 + $0x78] sm:$0xf] %v4432
        %4497 = vst [vmem:[%s230 + $0x7c] sm:$0xf] %v4433
        %s4498 = sand.u32 %s119, 1
        %s4499 = scalar_lea.sflag [#allocation6], %s4498
        %s4500 = sand.u32 %s119, 1
        %s4501 = smul.addr %s4500, 128
        %s4502 = scalar_lea.vmem [#allocation9], %s4501
        // Predicated region
        $region45: #{tpu_custom_call.1} parent=35 // pred_check
          %p4503 = pneg %p129
        $region46: #{tpu_custom_call.1} parent=35 // pred_check_branch
          %4505 = sbr.rel (%p4503) target = $region48
        $region47: #{tpu_custom_call.1} parent=35 // pred_region
          %s4507 = ssub.s32 2048, 2048
          %4508 = vsyncadd %s4499, %s4507
          %s4509 = smul.addr %s22, 32
          %s4510 = smul.addr %s4509, 64
          %s4511 = scalar_lea.hbm %s4, %s4510
          %s4512 = sshll.u32 %s4502, 4
          %s4513 = int_to_ptr.vmem [resolvable:$true] %s4512
          %4518 = dma.vmem_to_hbm [thread:$0]  %s4513, 2048, %s4511, %s4499, 64, 64, 4
        $region48: #{tpu_custom_call.1} parent=35 // pred_fallthru
          _
      $region36: #{tpu_custom_call.1} parent=5 // pred_fallthru
        _
      %p4519 = scmp.le.s32.totalorder 2, %s17
      // Predicated region
      $region49: #{tpu_custom_call.1} parent=5 // pred_check
        %p4520 = pneg %p4519
      $region50: #{tpu_custom_call.1} parent=5 // pred_check_branch
        %4522 = sbr.rel (%p4520) target = $region52
      $region51: #{tpu_custom_call.1} parent=5 // pred_region
        %s4523 = ssub.s32 %s17, 2
        // Predicated region
        $region53: #{tpu_custom_call.1} parent=51 // pred_check
          %p4524 = pneg %p135
        $region54: #{tpu_custom_call.1} parent=51 // pred_check_branch
          %4526 = sbr.rel (%p4524) target = $region56
        $region55: #{tpu_custom_call.1} parent=51 // pred_region
          %s4527 = sand.u32 %s120, 1
          %s4528 = scalar_lea.sflag [#allocation6], %s4527
          %s4529 = sand.u32 %s120, 1
          %s4530 = smul.addr %s4529, 128
          %s4531 = scalar_lea.vmem [#allocation9], %s4530
          %4532 = dma.done %s4528, 2048
        $region56: #{tpu_custom_call.1} parent=51 // pred_fallthru
          _
      $region52: #{tpu_custom_call.1} parent=5 // pred_fallthru
        _
    $region6: #{tpu_custom_call.1} parent=1 // loop_footer
      %s21 = sadd.s32 1, %s17
    $region7: #{tpu_custom_call.1} parent=1 // loop_footer_branch
      %16 = sbr.rel target = $region3
    $region8: #{tpu_custom_call.1} parent=1 // loop_exit
      _
    %4533 = vsyncpa [#allocation5], 1
    %s4534 = scalar_lea.sflag [#allocation5], 1
    %4535 = vsyncpa %s4534, 1
    %4536 = vsyncpa [#allocation8], 1
    %4537 = vsyncpa [#allocation6], 1
    %s4538 = scalar_lea.sflag [#allocation6], 1
    %4539 = vsyncpa %s4538, 1

</llo_original>
